<compile_context>
chip_gen: v6e
topology: v6e:2x2x1
jax: 0.10.0
libtpu: 0.0.40
codegen_flags: <defaults>
</compile_context>

<pallas_src>
import math
import functools

import jax
import jax.numpy as jnp
from jax.experimental import pallas as pl
from jax.experimental.pallas import tpu as pltpu

# ----- model hyperparameters (from the PyTorch module) -----
VOCAB_SIZE = 20
EMBED_SIZE = 32
NUM_HEADS = 4
FF_HIDDEN = 64
MAX_LEN = 512
LN_EPS = 1e-5


# ------------------------- in-kernel helpers -------------------------
def _layer_norm(h, gamma, beta):
    """Fused single-pass LayerNorm: var = E[h^2] - mean^2, rsqrt on the EUP."""
    mean = jnp.mean(h, axis=-1, keepdims=True)
    mean_sq = jnp.mean(h * h, axis=-1, keepdims=True)
    var = mean_sq - mean * mean
    inv = jax.lax.rsqrt(var + LN_EPS)
    return (h - mean) * inv * gamma + beta


def _mha(xq, xkv, w, b, num_heads):
    """Multi-head attention.

    xq:  (Sq, E) queries input, xkv: (Sk, E) key/value input.
    w:   (E, 4E) packed [Wq | Wk | Wv | Wo] (each (E, E), pre-transposed).
    b:   (1, 4E) packed [bq | bk | bv | bo].
    """
    s_q, e = xq.shape
    s_k = xkv.shape[0]
    d_k = e // num_heads
    scale = 1.0 / math.sqrt(d_k)

    q = jnp.dot(xq, w[:, 0 * e:1 * e], preferred_element_type=jnp.float32) + b[:, 0 * e:1 * e]
    k = jnp.dot(xkv, w[:, 1 * e:2 * e], preferred_element_type=jnp.float32) + b[:, 1 * e:2 * e]
    v = jnp.dot(xkv, w[:, 2 * e:3 * e], preferred_element_type=jnp.float32) + b[:, 2 * e:3 * e]

    qh = q.reshape(s_q, num_heads, d_k)
    kh = k.reshape(s_k, num_heads, d_k)
    vh = v.reshape(s_k, num_heads, d_k)

    # scores[h, i, j] = sum_d q[i,h,d] * k[j,h,d]  (K-transpose inside the MXU)
    scores = jax.lax.dot_general(
        qh, kh, (((2,), (2,)), ((1,), (1,))),
        preferred_element_type=jnp.float32) * scale          # (H, Sq, Sk)

    m = jnp.max(scores, axis=-1, keepdims=True)
    p = jnp.exp(scores - m)
    denom = jnp.sum(p, axis=-1, keepdims=True)
    p = p * pl.reciprocal(denom, approx=True)                 # EUP reciprocal

    # ctx[h, i, d] = sum_j p[h,i,j] * v[j,h,d]
    ctx = jax.lax.dot_general(
        p, vh, (((2,), (0,)), ((0,), (1,))),
        preferred_element_type=jnp.float32)                   # (H, Sq, dk)

    # Fold the head concat into the output projection: Wo viewed as (H, dk, E).
    wo3 = w[:, 3 * e:4 * e].reshape(num_heads, d_k, e)
    out_h = jax.lax.dot_general(
        ctx, wo3, (((2,), (1,)), ((0,), (0,))),
        preferred_element_type=jnp.float32)                   # (H, Sq, E)
    return jnp.sum(out_h, axis=0) + b[:, 3 * e:4 * e]


# ------------------------- the Pallas kernel -------------------------
def decoder_layer_kernel(
    x_ref, enc_ref,
    w_self_ref, b_self_ref,
    w_cross_ref, b_cross_ref,
    w_ff1_ref, b_ff1_ref, w_ff2_ref, b_ff2_ref,
    w_out_ref, b_out_ref,
    ln_ref,
    o_ref,
    *, num_heads,
):
    x = x_ref[0]          # (S, E)
    enc = enc_ref[0]      # (S_enc, E)
    ln = ln_ref[...]      # (6, E): [g1, b1, g2, b2, g3, b3]

    # ---- masked self-attention (mask is None in the spec) + LN1 ----
    sa = _mha(x, x, w_self_ref[...], b_self_ref[...], num_heads)
    h1 = _layer_norm(x + sa, ln[0:1, :], ln[1:2, :])

    # ---- encoder-decoder cross-attention + LN2 ----
    ca = _mha(h1, enc, w_cross_ref[...], b_cross_ref[...], num_heads)
    h2 = _layer_norm(h1 + ca, ln[2:3, :], ln[3:4, :])

    # ---- feed-forward (ReLU) + LN3 ----
    ff = jnp.dot(h2, w_ff1_ref[...], preferred_element_type=jnp.float32) + b_ff1_ref[...]
    ff = jnp.maximum(ff, 0.0)
    ff = jnp.dot(ff, w_ff2_ref[...], preferred_element_type=jnp.float32) + b_ff2_ref[...]
    h3 = _layer_norm(h2 + ff, ln[4:5, :], ln[5:6, :])

    # ---- final vocab projection ----
    o_ref[0] = (jnp.dot(h3, w_out_ref[...], preferred_element_type=jnp.float32)
                + b_out_ref[...])


def decoder_layer_pallas(x, enc_out, packed):
    """x: (B, S, E) f32, enc_out: (B, S_enc, E) f32 -> (B, S, V) f32 logits."""
    B, S, E = x.shape
    S_enc = enc_out.shape[1]
    V = packed["w_out"].shape[1]
    assert E % NUM_HEADS == 0, "embed_size must be divisible by num_heads"

    weight_args = (
        packed["w_self"], packed["b_self"],
        packed["w_cross"], packed["b_cross"],
        packed["w_ff1"], packed["b_ff1"], packed["w_ff2"], packed["b_ff2"],
        packed["w_out"], packed["b_out"],
        packed["ln"],
    )

    def const_spec(a):
        return pl.BlockSpec(a.shape, lambda b, _nd=a.ndim: (0,) * _nd)

    kernel = functools.partial(decoder_layer_kernel, num_heads=NUM_HEADS)

    return pl.pallas_call(
        kernel,
        out_shape=jax.ShapeDtypeStruct((B, S, V), jnp.float32),
        grid_spec=pltpu.PrefetchScalarGridSpec(
            num_scalar_prefetch=0,
            grid=(B,),
            in_specs=[pl.BlockSpec((1, S, E), lambda b: (b, 0, 0)),
                      pl.BlockSpec((1, S_enc, E), lambda b: (b, 0, 0))]
                     + [const_spec(w) for w in weight_args],
            out_specs=pl.BlockSpec((1, S, V), lambda b: (b, 0, 0)),
        ),
        compiler_params=pltpu.CompilerParams(dimension_semantics=("parallel",)),
    )(x, enc_out, *weight_args)


# ------------------- parameter init / packing (deterministic) -------------------
def init_params(key):
    keys = jax.random.split(key, 16)
    E, F, V = EMBED_SIZE, FF_HIDDEN, VOCAB_SIZE

    def lin(k, fan_in, fan_out):
        # PyTorch nn.Linear default init: U(-1/sqrt(fan_in), 1/sqrt(fan_in))
        bound = 1.0 / math.sqrt(fan_in)
        kw, kb = jax.random.split(k)
        w = jax.random.uniform(kw, (fan_in, fan_out), jnp.float32, -bound, bound)
        b = jax.random.uniform(kb, (1, fan_out), jnp.float32, -bound, bound)
        return w, b

    p = {}
    p["embedding"] = jax.random.normal(keys[0], (V, E), jnp.float32)
    p["pos_embedding"] = jax.random.normal(keys[1], (1, MAX_LEN, E), jnp.float32)
    # self-attention
    p["s_wq"], p["s_bq"] = lin(keys[2], E, E)
    p["s_wk"], p["s_bk"] = lin(keys[3], E, E)
    p["s_wv"], p["s_bv"] = lin(keys[4], E, E)
    p["s_wo"], p["s_bo"] = lin(keys[5], E, E)
    # cross-attention
    p["c_wq"], p["c_bq"] = lin(keys[6], E, E)
    p["c_wk"], p["c_bk"] = lin(keys[7], E, E)
    p["c_wv"], p["c_bv"] = lin(keys[8], E, E)
    p["c_wo"], p["c_bo"] = lin(keys[9], E, E)
    # feed-forward
    p["w1"], p["b1"] = lin(keys[10], E, F)
    p["w2"], p["b2"] = lin(keys[11], F, E)
    # layer norms
    for i in (1, 2, 3):
        p[f"ln{i}_g"] = jnp.ones((1, E), jnp.float32)
        p[f"ln{i}_b"] = jnp.zeros((1, E), jnp.float32)
    # output projection to vocab
    p["w_out"], p["b_out"] = lin(keys[12], E, V)
    return p


def pack_params(p):
    """Consolidate the 28 small weight/bias arrays into 11 kernel inputs."""
    packed = {
        "embedding": p["embedding"],
        "pos_embedding": p["pos_embedding"],
        "w_self": jnp.concatenate([p["s_wq"], p["s_wk"], p["s_wv"], p["s_wo"]], axis=1),
        "b_self": jnp.concatenate([p["s_bq"], p["s_bk"], p["s_bv"], p["s_bo"]], axis=1),
        "w_cross": jnp.concatenate([p["c_wq"], p["c_wk"], p["c_wv"], p["c_wo"]], axis=1),
        "b_cross": jnp.concatenate([p["c_bq"], p["c_bk"], p["c_bv"], p["c_bo"]], axis=1),
        "w_ff1": p["w1"], "b_ff1": p["b1"],
        "w_ff2": p["w2"], "b_ff2": p["b2"],
        "w_out": p["w_out"], "b_out": p["b_out"],
        "ln": jnp.concatenate([p["ln1_g"], p["ln1_b"],
                               p["ln2_g"], p["ln2_b"],
                               p["ln3_g"], p["ln3_b"]], axis=0),   # (6, E)
    }
    return packed


def mini_transformer_decoder(tgt_ids, enc_out, packed):
    """tgt_ids: (B, S) int32, enc_out: (B, S_enc, E) f32 -> (B, S, V) f32 logits."""
    B, S = tgt_ids.shape
    # glue: embedding gather + positional embedding add
    x = packed["embedding"][tgt_ids] + packed["pos_embedding"][:, :S, :]
    return decoder_layer_pallas(x.astype(jnp.float32), enc_out, packed)


# ------------------- pure-JAX reference for verification -------------------
def reference_decoder(tgt_ids, enc_out, p):
    B, S = tgt_ids.shape
    E, H = EMBED_SIZE, NUM_HEADS
    d_k = E // H
    x = p["embedding"][tgt_ids] + p["pos_embedding"][:, :S, :]

    def ln(z, g, b):
        mu = jnp.mean(z, -1, keepdims=True)
        var = jnp.mean((z - mu) ** 2, -1, keepdims=True)
        return (z - mu) / jnp.sqrt(var + LN_EPS) * g + b

    def mha(q_in, kv_in, wq, bq, wk, bk, wv, bv, wo, bo):
        Bq, Sq, _ = q_in.shape
        Sk = kv_in.shape[1]
        q = (q_in @ wq + bq).reshape(Bq, Sq, H, d_k).transpose(0, 2, 1, 3)
        k = (kv_in @ wk + bk).reshape(Bq, Sk, H, d_k).transpose(0, 2, 1, 3)
        v = (kv_in @ wv + bv).reshape(Bq, Sk, H, d_k).transpose(0, 2, 1, 3)
        scores = (q @ k.transpose(0, 1, 3, 2)) / math.sqrt(d_k)
        attn = jax.nn.softmax(scores, axis=-1)
        out = (attn @ v).transpose(0, 2, 1, 3).reshape(Bq, Sq, E)
        return out @ wo + bo

    sa = mha(x, x, p["s_wq"], p["s_bq"], p["s_wk"], p["s_bk"],
             p["s_wv"], p["s_bv"], p["s_wo"], p["s_bo"])
    h1 = ln(x + sa, p["ln1_g"], p["ln1_b"])
    ca = mha(h1, enc_out, p["c_wq"], p["c_bq"], p["c_wk"], p["c_bk"],
             p["c_wv"], p["c_bv"], p["c_wo"], p["c_bo"])
    h2 = ln(h1 + ca, p["ln2_g"], p["ln2_b"])
    ff = jnp.maximum(h2 @ p["w1"] + p["b1"], 0.0) @ p["w2"] + p["b2"]
    h3 = ln(h2 + ff, p["ln3_g"], p["ln3_b"])
    return h3 @ p["w_out"] + p["b_out"]


if __name__ == "__main__":
    key = jax.random.PRNGKey(0)
    k_param, k_tok, k_enc = jax.random.split(key, 3)
    params = init_params(k_param)
    packed = pack_params(params)

    B, S = 2, 10
    tgt_ids = jax.random.randint(k_tok, (B, S), 0, VOCAB_SIZE, dtype=jnp.int32)
    # enc_out is an input to the decoder module (produced by the encoder in the
    # spec); deterministic stand-in activations of the right shape.
    enc_out = jax.random.normal(k_enc, (B, S, EMBED_SIZE), jnp.float32)

    out = mini_transformer_decoder(tgt_ids, enc_out, packed)
    out = jax.block_until_ready(out)

    ref = reference_decoder(tgt_ids, enc_out, params)
    assert out.shape == (B, S, VOCAB_SIZE), out.shape
    max_err = float(jnp.max(jnp.abs(out - ref)))
    assert jnp.allclose(out, ref, atol=2e-3, rtol=2e-3), max_err

    print("KERNEL_OK")
</pallas_src>

<mosaic_0001>
module attributes {stable_mosaic.version = 11 : i64} {
  func.func @decoder_layer_kernel(%arg0: i32, %arg1: memref<1x10x32xf32, #tpu.memory_space<vmem>>, %arg2: memref<1x10x32xf32, #tpu.memory_space<vmem>>, %arg3: memref<32x128xf32, #tpu.memory_space<vmem>>, %arg4: memref<1x128xf32, #tpu.memory_space<vmem>>, %arg5: memref<32x128xf32, #tpu.memory_space<vmem>>, %arg6: memref<1x128xf32, #tpu.memory_space<vmem>>, %arg7: memref<32x64xf32, #tpu.memory_space<vmem>>, %arg8: memref<1x64xf32, #tpu.memory_space<vmem>>, %arg9: memref<64x32xf32, #tpu.memory_space<vmem>>, %arg10: memref<1x32xf32, #tpu.memory_space<vmem>>, %arg11: memref<32x20xf32, #tpu.memory_space<vmem>>, %arg12: memref<1x20xf32, #tpu.memory_space<vmem>>, %arg13: memref<6x32xf32, #tpu.memory_space<vmem>>, %arg14: memref<1x10x20xf32, #tpu.memory_space<vmem>>) attributes {dimension_semantics = [#tpu.dimension_semantics<parallel>], iteration_bounds = array<i64: 2>, scalar_prefetch = 0 : i64, scratch_operands = 0 : i64, tpu.core_type = #tpu.core_type<tc>, window_params = [{transform_indices = @transform_0, window_bounds = array<i64: 1, 10, 32>}, {transform_indices = @transform_1, window_bounds = array<i64: 1, 10, 32>}, {pipeline_mode = #tpu.pipeline_mode<synchronous>, transform_indices = @transform_2, window_bounds = array<i64: 32, 128>}, {pipeline_mode = #tpu.pipeline_mode<synchronous>, transform_indices = @transform_3, window_bounds = array<i64: 1, 128>}, {pipeline_mode = #tpu.pipeline_mode<synchronous>, transform_indices = @transform_4, window_bounds = array<i64: 32, 128>}, {pipeline_mode = #tpu.pipeline_mode<synchronous>, transform_indices = @transform_5, window_bounds = array<i64: 1, 128>}, {pipeline_mode = #tpu.pipeline_mode<synchronous>, transform_indices = @transform_6, window_bounds = array<i64: 32, 64>}, {pipeline_mode = #tpu.pipeline_mode<synchronous>, transform_indices = @transform_7, window_bounds = array<i64: 1, 64>}, {pipeline_mode = #tpu.pipeline_mode<synchronous>, transform_indices = @transform_8, window_bounds = array<i64: 64, 32>}, {pipeline_mode = #tpu.pipeline_mode<synchronous>, transform_indices = @transform_9, window_bounds = array<i64: 1, 32>}, {pipeline_mode = #tpu.pipeline_mode<synchronous>, transform_indices = @transform_10, window_bounds = array<i64: 32, 20>}, {pipeline_mode = #tpu.pipeline_mode<synchronous>, transform_indices = @transform_11, window_bounds = array<i64: 1, 20>}, {pipeline_mode = #tpu.pipeline_mode<synchronous>, transform_indices = @transform_12, window_bounds = array<i64: 6, 32>}, {transform_indices = @transform_13, window_bounds = array<i64: 1, 10, 20>}]} {
    %c0 = arith.constant 0 : index
    %c0_0 = arith.constant 0 : index
    %c0_1 = arith.constant 0 : index
    %0 = vector.load %arg1[%c0, %c0_0, %c0_1] : memref<1x10x32xf32, #tpu.memory_space<vmem>>, vector<1x10x32xf32>
    %1 = vector.shape_cast %0 : vector<1x10x32xf32> to vector<10x32xf32>
    %c0_2 = arith.constant 0 : index
    %c0_3 = arith.constant 0 : index
    %c0_4 = arith.constant 0 : index
    %2 = vector.load %arg2[%c0_2, %c0_3, %c0_4] : memref<1x10x32xf32, #tpu.memory_space<vmem>>, vector<1x10x32xf32>
    %3 = vector.shape_cast %2 : vector<1x10x32xf32> to vector<10x32xf32>
    %c0_5 = arith.constant 0 : index
    %c0_6 = arith.constant 0 : index
    %4 = vector.load %arg13[%c0_5, %c0_6] : memref<6x32xf32, #tpu.memory_space<vmem>>, vector<6x32xf32>
    %c0_7 = arith.constant 0 : index
    %c0_8 = arith.constant 0 : index
    %5 = vector.load %arg3[%c0_7, %c0_8] : memref<32x128xf32, #tpu.memory_space<vmem>>, vector<32x128xf32>
    %c0_9 = arith.constant 0 : index
    %c0_10 = arith.constant 0 : index
    %6 = vector.load %arg4[%c0_9, %c0_10] : memref<1x128xf32, #tpu.memory_space<vmem>>, vector<1x128xf32>
    %7 = vector.extract_strided_slice %5 {offsets = [0, 0], sizes = [32, 32], strides = [1, 1]} : vector<32x128xf32> to vector<32x32xf32>
    %cst = arith.constant dense<0.000000e+00> : vector<10x32xf32>
    %8 = tpu.matmul %1, %7, %cst {dimension_numbers = #tpu.dot_dimension_numbers<[1], [0], [0], [1], [0, 0, 1, 1], [], []>} : vector<10x32xf32>, vector<32x32xf32>, vector<10x32xf32> -> vector<10x32xf32>
    %9 = vector.extract_strided_slice %6 {offsets = [0, 0], sizes = [1, 32], strides = [1, 1]} : vector<1x128xf32> to vector<1x32xf32>
    %10 = vector.broadcast %9 : vector<1x32xf32> to vector<10x32xf32>
    %11 = arith.addf %8, %10 : vector<10x32xf32>
    %12 = vector.extract_strided_slice %5 {offsets = [0, 32], sizes = [32, 32], strides = [1, 1]} : vector<32x128xf32> to vector<32x32xf32>
    %cst_11 = arith.constant dense<0.000000e+00> : vector<10x32xf32>
    %13 = tpu.matmul %1, %12, %cst_11 {dimension_numbers = #tpu.dot_dimension_numbers<[1], [0], [0], [1], [0, 0, 1, 1], [], []>} : vector<10x32xf32>, vector<32x32xf32>, vector<10x32xf32> -> vector<10x32xf32>
    %14 = vector.extract_strided_slice %6 {offsets = [0, 32], sizes = [1, 32], strides = [1, 1]} : vector<1x128xf32> to vector<1x32xf32>
    %15 = vector.broadcast %14 : vector<1x32xf32> to vector<10x32xf32>
    %16 = arith.addf %13, %15 : vector<10x32xf32>
    %17 = vector.extract_strided_slice %5 {offsets = [0, 64], sizes = [32, 32], strides = [1, 1]} : vector<32x128xf32> to vector<32x32xf32>
    %cst_12 = arith.constant dense<0.000000e+00> : vector<10x32xf32>
    %18 = tpu.matmul %1, %17, %cst_12 {dimension_numbers = #tpu.dot_dimension_numbers<[1], [0], [0], [1], [0, 0, 1, 1], [], []>} : vector<10x32xf32>, vector<32x32xf32>, vector<10x32xf32> -> vector<10x32xf32>
    %19 = vector.extract_strided_slice %6 {offsets = [0, 64], sizes = [1, 32], strides = [1, 1]} : vector<1x128xf32> to vector<1x32xf32>
    %20 = vector.broadcast %19 : vector<1x32xf32> to vector<10x32xf32>
    %21 = arith.addf %18, %20 : vector<10x32xf32>
    %22 = vector.shape_cast %11 : vector<10x32xf32> to vector<10x4x8xf32>
    %23 = vector.shape_cast %16 : vector<10x32xf32> to vector<10x4x8xf32>
    %24 = vector.shape_cast %21 : vector<10x32xf32> to vector<10x4x8xf32>
    %cst_13 = arith.constant dense<0.000000e+00> : vector<4x10x10xf32>
    %25 = tpu.matmul %22, %23, %cst_13 {dimension_numbers = #tpu.dot_dimension_numbers<[2], [2], [0], [0], [0, 1, 0, 0, 1, 0], [1], [1]>} : vector<10x4x8xf32>, vector<10x4x8xf32>, vector<4x10x10xf32> -> vector<4x10x10xf32>
    %cst_14 = arith.constant 0.353553385 : f32
    %26 = vector.broadcast %cst_14 : f32 to vector<4x10x10xf32>
    %27 = arith.mulf %25, %26 : vector<4x10x10xf32>
    %cst_15 = arith.constant dense<0xFF800000> : vector<4x10xf32>
    %28 = vector.multi_reduction <maximumf>, %27, %cst_15 [2] : vector<4x10x10xf32> to vector<4x10xf32>
    %29 = vector.shape_cast %28 : vector<4x10xf32> to vector<4x10x1xf32>
    %30 = vector.broadcast %29 : vector<4x10x1xf32> to vector<4x10x10xf32>
    %31 = arith.subf %27, %30 : vector<4x10x10xf32>
    %32 = math.exp %31 : vector<4x10x10xf32>
    %cst_16 = arith.constant dense<0.000000e+00> : vector<4x10xf32>
    %33 = vector.multi_reduction <add>, %32, %cst_16 [2] : vector<4x10x10xf32> to vector<4x10xf32>
    %34 = vector.shape_cast %33 : vector<4x10xf32> to vector<4x10x1xf32>
    %35 = tpu.reciprocal %34 {approx = true} : vector<4x10x1xf32> -> vector<4x10x1xf32>
    %36 = vector.broadcast %35 : vector<4x10x1xf32> to vector<4x10x10xf32>
    %37 = arith.mulf %32, %36 : vector<4x10x10xf32>
    %cst_17 = arith.constant dense<0.000000e+00> : vector<4x10x8xf32>
    %38 = tpu.matmul %37, %24, %cst_17 {dimension_numbers = #tpu.dot_dimension_numbers<[2], [0], [1], [2], [0, 0, 0, 1, 1, 2], [0], [1]>} : vector<4x10x10xf32>, vector<10x4x8xf32>, vector<4x10x8xf32> -> vector<4x10x8xf32>
    %39 = vector.extract_strided_slice %5 {offsets = [0, 96], sizes = [32, 32], strides = [1, 1]} : vector<32x128xf32> to vector<32x32xf32>
    %40 = vector.shape_cast %39 : vector<32x32xf32> to vector<4x8x32xf32>
    %cst_18 = arith.constant dense<0.000000e+00> : vector<4x10x32xf32>
    %41 = tpu.matmul %38, %40, %cst_18 {dimension_numbers = #tpu.dot_dimension_numbers<[2], [1], [1], [2], [0, 0, 0, 1, 1, 2], [0], [0]>} : vector<4x10x8xf32>, vector<4x8x32xf32>, vector<4x10x32xf32> -> vector<4x10x32xf32>
    %cst_19 = arith.constant dense<0.000000e+00> : vector<10x32xf32>
    %42 = vector.multi_reduction <add>, %41, %cst_19 [0] : vector<4x10x32xf32> to vector<10x32xf32>
    %43 = vector.extract_strided_slice %6 {offsets = [0, 96], sizes = [1, 32], strides = [1, 1]} : vector<1x128xf32> to vector<1x32xf32>
    %44 = vector.broadcast %43 : vector<1x32xf32> to vector<10x32xf32>
    %45 = arith.addf %42, %44 : vector<10x32xf32>
    %46 = arith.addf %1, %45 : vector<10x32xf32>
    %47 = vector.extract_strided_slice %4 {offsets = [0, 0], sizes = [1, 32], strides = [1, 1]} : vector<6x32xf32> to vector<1x32xf32>
    %48 = vector.extract_strided_slice %4 {offsets = [1, 0], sizes = [1, 32], strides = [1, 1]} : vector<6x32xf32> to vector<1x32xf32>
    %cst_20 = arith.constant dense<0.000000e+00> : vector<10xf32>
    %49 = vector.multi_reduction <add>, %46, %cst_20 [1] : vector<10x32xf32> to vector<10xf32>
    %50 = vector.shape_cast %49 : vector<10xf32> to vector<10x1xf32>
    %cst_21 = arith.constant 3.200000e+01 : f32
    %51 = vector.broadcast %cst_21 : f32 to vector<10x1xf32>
    %52 = arith.divf %50, %51 : vector<10x1xf32>
    %53 = arith.mulf %46, %46 : vector<10x32xf32>
    %cst_22 = arith.constant dense<0.000000e+00> : vector<10xf32>
    %54 = vector.multi_reduction <add>, %53, %cst_22 [1] : vector<10x32xf32> to vector<10xf32>
    %55 = vector.shape_cast %54 : vector<10xf32> to vector<10x1xf32>
    %cst_23 = arith.constant 3.200000e+01 : f32
    %56 = vector.broadcast %cst_23 : f32 to vector<10x1xf32>
    %57 = arith.divf %55, %56 : vector<10x1xf32>
    %58 = arith.mulf %52, %52 : vector<10x1xf32>
    %59 = arith.subf %57, %58 : vector<10x1xf32>
    %cst_24 = arith.constant 9.99999974E-6 : f32
    %60 = vector.broadcast %cst_24 : f32 to vector<10x1xf32>
    %61 = arith.addf %59, %60 : vector<10x1xf32>
    %62 = math.rsqrt %61 : vector<10x1xf32>
    %63 = vector.broadcast %52 : vector<10x1xf32> to vector<10x32xf32>
    %64 = arith.subf %46, %63 : vector<10x32xf32>
    %65 = vector.broadcast %62 : vector<10x1xf32> to vector<10x32xf32>
    %66 = arith.mulf %64, %65 : vector<10x32xf32>
    %67 = vector.broadcast %47 : vector<1x32xf32> to vector<10x32xf32>
    %68 = arith.mulf %66, %67 : vector<10x32xf32>
    %69 = vector.broadcast %48 : vector<1x32xf32> to vector<10x32xf32>
    %70 = arith.addf %68, %69 : vector<10x32xf32>
    %c0_25 = arith.constant 0 : index
    %c0_26 = arith.constant 0 : index
    %71 = vector.load %arg5[%c0_25, %c0_26] : memref<32x128xf32, #tpu.memory_space<vmem>>, vector<32x128xf32>
    %c0_27 = arith.constant 0 : index
    %c0_28 = arith.constant 0 : index
    %72 = vector.load %arg6[%c0_27, %c0_28] : memref<1x128xf32, #tpu.memory_space<vmem>>, vector<1x128xf32>
    %73 = vector.extract_strided_slice %71 {offsets = [0, 0], sizes = [32, 32], strides = [1, 1]} : vector<32x128xf32> to vector<32x32xf32>
    %cst_29 = arith.constant dense<0.000000e+00> : vector<10x32xf32>
    %74 = tpu.matmul %70, %73, %cst_29 {dimension_numbers = #tpu.dot_dimension_numbers<[1], [0], [0], [1], [0, 0, 1, 1], [], []>} : vector<10x32xf32>, vector<32x32xf32>, vector<10x32xf32> -> vector<10x32xf32>
    %75 = vector.extract_strided_slice %72 {offsets = [0, 0], sizes = [1, 32], strides = [1, 1]} : vector<1x128xf32> to vector<1x32xf32>
    %76 = vector.broadcast %75 : vector<1x32xf32> to vector<10x32xf32>
    %77 = arith.addf %74, %76 : vector<10x32xf32>
    %78 = vector.extract_strided_slice %71 {offsets = [0, 32], sizes = [32, 32], strides = [1, 1]} : vector<32x128xf32> to vector<32x32xf32>
    %cst_30 = arith.constant dense<0.000000e+00> : vector<10x32xf32>
    %79 = tpu.matmul %3, %78, %cst_30 {dimension_numbers = #tpu.dot_dimension_numbers<[1], [0], [0], [1], [0, 0, 1, 1], [], []>} : vector<10x32xf32>, vector<32x32xf32>, vector<10x32xf32> -> vector<10x32xf32>
    %80 = vector.extract_strided_slice %72 {offsets = [0, 32], sizes = [1, 32], strides = [1, 1]} : vector<1x128xf32> to vector<1x32xf32>
    %81 = vector.broadcast %80 : vector<1x32xf32> to vector<10x32xf32>
    %82 = arith.addf %79, %81 : vector<10x32xf32>
    %83 = vector.extract_strided_slice %71 {offsets = [0, 64], sizes = [32, 32], strides = [1, 1]} : vector<32x128xf32> to vector<32x32xf32>
    %cst_31 = arith.constant dense<0.000000e+00> : vector<10x32xf32>
    %84 = tpu.matmul %3, %83, %cst_31 {dimension_numbers = #tpu.dot_dimension_numbers<[1], [0], [0], [1], [0, 0, 1, 1], [], []>} : vector<10x32xf32>, vector<32x32xf32>, vector<10x32xf32> -> vector<10x32xf32>
    %85 = vector.extract_strided_slice %72 {offsets = [0, 64], sizes = [1, 32], strides = [1, 1]} : vector<1x128xf32> to vector<1x32xf32>
    %86 = vector.broadcast %85 : vector<1x32xf32> to vector<10x32xf32>
    %87 = arith.addf %84, %86 : vector<10x32xf32>
    %88 = vector.shape_cast %77 : vector<10x32xf32> to vector<10x4x8xf32>
    %89 = vector.shape_cast %82 : vector<10x32xf32> to vector<10x4x8xf32>
    %90 = vector.shape_cast %87 : vector<10x32xf32> to vector<10x4x8xf32>
    %cst_32 = arith.constant dense<0.000000e+00> : vector<4x10x10xf32>
    %91 = tpu.matmul %88, %89, %cst_32 {dimension_numbers = #tpu.dot_dimension_numbers<[2], [2], [0], [0], [0, 1, 0, 0, 1, 0], [1], [1]>} : vector<10x4x8xf32>, vector<10x4x8xf32>, vector<4x10x10xf32> -> vector<4x10x10xf32>
    %cst_33 = arith.constant 0.353553385 : f32
    %92 = vector.broadcast %cst_33 : f32 to vector<4x10x10xf32>
    %93 = arith.mulf %91, %92 : vector<4x10x10xf32>
    %cst_34 = arith.constant dense<0xFF800000> : vector<4x10xf32>
    %94 = vector.multi_reduction <maximumf>, %93, %cst_34 [2] : vector<4x10x10xf32> to vector<4x10xf32>
    %95 = vector.shape_cast %94 : vector<4x10xf32> to vector<4x10x1xf32>
    %96 = vector.broadcast %95 : vector<4x10x1xf32> to vector<4x10x10xf32>
    %97 = arith.subf %93, %96 : vector<4x10x10xf32>
    %98 = math.exp %97 : vector<4x10x10xf32>
    %cst_35 = arith.constant dense<0.000000e+00> : vector<4x10xf32>
    %99 = vector.multi_reduction <add>, %98, %cst_35 [2] : vector<4x10x10xf32> to vector<4x10xf32>
    %100 = vector.shape_cast %99 : vector<4x10xf32> to vector<4x10x1xf32>
    %101 = tpu.reciprocal %100 {approx = true} : vector<4x10x1xf32> -> vector<4x10x1xf32>
    %102 = vector.broadcast %101 : vector<4x10x1xf32> to vector<4x10x10xf32>
    %103 = arith.mulf %98, %102 : vector<4x10x10xf32>
    %cst_36 = arith.constant dense<0.000000e+00> : vector<4x10x8xf32>
    %104 = tpu.matmul %103, %90, %cst_36 {dimension_numbers = #tpu.dot_dimension_numbers<[2], [0], [1], [2], [0, 0, 0, 1, 1, 2], [0], [1]>} : vector<4x10x10xf32>, vector<10x4x8xf32>, vector<4x10x8xf32> -> vector<4x10x8xf32>
    %105 = vector.extract_strided_slice %71 {offsets = [0, 96], sizes = [32, 32], strides = [1, 1]} : vector<32x128xf32> to vector<32x32xf32>
    %106 = vector.shape_cast %105 : vector<32x32xf32> to vector<4x8x32xf32>
    %cst_37 = arith.constant dense<0.000000e+00> : vector<4x10x32xf32>
    %107 = tpu.matmul %104, %106, %cst_37 {dimension_numbers = #tpu.dot_dimension_numbers<[2], [1], [1], [2], [0, 0, 0, 1, 1, 2], [0], [0]>} : vector<4x10x8xf32>, vector<4x8x32xf32>, vector<4x10x32xf32> -> vector<4x10x32xf32>
    %cst_38 = arith.constant dense<0.000000e+00> : vector<10x32xf32>
    %108 = vector.multi_reduction <add>, %107, %cst_38 [0] : vector<4x10x32xf32> to vector<10x32xf32>
    %109 = vector.extract_strided_slice %72 {offsets = [0, 96], sizes = [1, 32], strides = [1, 1]} : vector<1x128xf32> to vector<1x32xf32>
    %110 = vector.broadcast %109 : vector<1x32xf32> to vector<10x32xf32>
    %111 = arith.addf %108, %110 : vector<10x32xf32>
    %112 = arith.addf %70, %111 : vector<10x32xf32>
    %113 = vector.extract_strided_slice %4 {offsets = [2, 0], sizes = [1, 32], strides = [1, 1]} : vector<6x32xf32> to vector<1x32xf32>
    %114 = vector.extract_strided_slice %4 {offsets = [3, 0], sizes = [1, 32], strides = [1, 1]} : vector<6x32xf32> to vector<1x32xf32>
    %cst_39 = arith.constant dense<0.000000e+00> : vector<10xf32>
    %115 = vector.multi_reduction <add>, %112, %cst_39 [1] : vector<10x32xf32> to vector<10xf32>
    %116 = vector.shape_cast %115 : vector<10xf32> to vector<10x1xf32>
    %cst_40 = arith.constant 3.200000e+01 : f32
    %117 = vector.broadcast %cst_40 : f32 to vector<10x1xf32>
    %118 = arith.divf %116, %117 : vector<10x1xf32>
    %119 = arith.mulf %112, %112 : vector<10x32xf32>
    %cst_41 = arith.constant dense<0.000000e+00> : vector<10xf32>
    %120 = vector.multi_reduction <add>, %119, %cst_41 [1] : vector<10x32xf32> to vector<10xf32>
    %121 = vector.shape_cast %120 : vector<10xf32> to vector<10x1xf32>
    %cst_42 = arith.constant 3.200000e+01 : f32
    %122 = vector.broadcast %cst_42 : f32 to vector<10x1xf32>
    %123 = arith.divf %121, %122 : vector<10x1xf32>
    %124 = arith.mulf %118, %118 : vector<10x1xf32>
    %125 = arith.subf %123, %124 : vector<10x1xf32>
    %cst_43 = arith.constant 9.99999974E-6 : f32
    %126 = vector.broadcast %cst_43 : f32 to vector<10x1xf32>
    %127 = arith.addf %125, %126 : vector<10x1xf32>
    %128 = math.rsqrt %127 : vector<10x1xf32>
    %129 = vector.broadcast %118 : vector<10x1xf32> to vector<10x32xf32>
    %130 = arith.subf %112, %129 : vector<10x32xf32>
    %131 = vector.broadcast %128 : vector<10x1xf32> to vector<10x32xf32>
    %132 = arith.mulf %130, %131 : vector<10x32xf32>
    %133 = vector.broadcast %113 : vector<1x32xf32> to vector<10x32xf32>
    %134 = arith.mulf %132, %133 : vector<10x32xf32>
    %135 = vector.broadcast %114 : vector<1x32xf32> to vector<10x32xf32>
    %136 = arith.addf %134, %135 : vector<10x32xf32>
    %c0_44 = arith.constant 0 : index
    %c0_45 = arith.constant 0 : index
    %137 = vector.load %arg7[%c0_44, %c0_45] : memref<32x64xf32, #tpu.memory_space<vmem>>, vector<32x64xf32>
    %cst_46 = arith.constant dense<0.000000e+00> : vector<10x64xf32>
    %138 = tpu.matmul %136, %137, %cst_46 {dimension_numbers = #tpu.dot_dimension_numbers<[1], [0], [0], [1], [0, 0, 1, 1], [], []>} : vector<10x32xf32>, vector<32x64xf32>, vector<10x64xf32> -> vector<10x64xf32>
    %c0_47 = arith.constant 0 : index
    %c0_48 = arith.constant 0 : index
    %139 = vector.load %arg8[%c0_47, %c0_48] : memref<1x64xf32, #tpu.memory_space<vmem>>, vector<1x64xf32>
    %140 = vector.broadcast %139 : vector<1x64xf32> to vector<10x64xf32>
    %141 = arith.addf %138, %140 : vector<10x64xf32>
    %cst_49 = arith.constant 0.000000e+00 : f32
    %142 = vector.broadcast %cst_49 : f32 to vector<10x64xf32>
    %143 = arith.maximumf %141, %142 : vector<10x64xf32>
    %c0_50 = arith.constant 0 : index
    %c0_51 = arith.constant 0 : index
    %144 = vector.load %arg9[%c0_50, %c0_51] : memref<64x32xf32, #tpu.memory_space<vmem>>, vector<64x32xf32>
    %cst_52 = arith.constant dense<0.000000e+00> : vector<10x32xf32>
    %145 = tpu.matmul %143, %144, %cst_52 {dimension_numbers = #tpu.dot_dimension_numbers<[1], [0], [0], [1], [0, 0, 1, 1], [], []>} : vector<10x64xf32>, vector<64x32xf32>, vector<10x32xf32> -> vector<10x32xf32>
    %c0_53 = arith.constant 0 : index
    %c0_54 = arith.constant 0 : index
    %146 = vector.load %arg10[%c0_53, %c0_54] : memref<1x32xf32, #tpu.memory_space<vmem>>, vector<1x32xf32>
    %147 = vector.broadcast %146 : vector<1x32xf32> to vector<10x32xf32>
    %148 = arith.addf %145, %147 : vector<10x32xf32>
    %149 = arith.addf %136, %148 : vector<10x32xf32>
    %150 = vector.extract_strided_slice %4 {offsets = [4, 0], sizes = [1, 32], strides = [1, 1]} : vector<6x32xf32> to vector<1x32xf32>
    %151 = vector.extract_strided_slice %4 {offsets = [5, 0], sizes = [1, 32], strides = [1, 1]} : vector<6x32xf32> to vector<1x32xf32>
    %cst_55 = arith.constant dense<0.000000e+00> : vector<10xf32>
    %152 = vector.multi_reduction <add>, %149, %cst_55 [1] : vector<10x32xf32> to vector<10xf32>
    %153 = vector.shape_cast %152 : vector<10xf32> to vector<10x1xf32>
    %cst_56 = arith.constant 3.200000e+01 : f32
    %154 = vector.broadcast %cst_56 : f32 to vector<10x1xf32>
    %155 = arith.divf %153, %154 : vector<10x1xf32>
    %156 = arith.mulf %149, %149 : vector<10x32xf32>
    %cst_57 = arith.constant dense<0.000000e+00> : vector<10xf32>
    %157 = vector.multi_reduction <add>, %156, %cst_57 [1] : vector<10x32xf32> to vector<10xf32>
    %158 = vector.shape_cast %157 : vector<10xf32> to vector<10x1xf32>
    %cst_58 = arith.constant 3.200000e+01 : f32
    %159 = vector.broadcast %cst_58 : f32 to vector<10x1xf32>
    %160 = arith.divf %158, %159 : vector<10x1xf32>
    %161 = arith.mulf %155, %155 : vector<10x1xf32>
    %162 = arith.subf %160, %161 : vector<10x1xf32>
    %cst_59 = arith.constant 9.99999974E-6 : f32
    %163 = vector.broadcast %cst_59 : f32 to vector<10x1xf32>
    %164 = arith.addf %162, %163 : vector<10x1xf32>
    %165 = math.rsqrt %164 : vector<10x1xf32>
    %166 = vector.broadcast %155 : vector<10x1xf32> to vector<10x32xf32>
    %167 = arith.subf %149, %166 : vector<10x32xf32>
    %168 = vector.broadcast %165 : vector<10x1xf32> to vector<10x32xf32>
    %169 = arith.mulf %167, %168 : vector<10x32xf32>
    %170 = vector.broadcast %150 : vector<1x32xf32> to vector<10x32xf32>
    %171 = arith.mulf %169, %170 : vector<10x32xf32>
    %172 = vector.broadcast %151 : vector<1x32xf32> to vector<10x32xf32>
    %173 = arith.addf %171, %172 : vector<10x32xf32>
    %c0_60 = arith.constant 0 : index
    %c0_61 = arith.constant 0 : index
    %174 = vector.load %arg11[%c0_60, %c0_61] : memref<32x20xf32, #tpu.memory_space<vmem>>, vector<32x20xf32>
    %cst_62 = arith.constant dense<0.000000e+00> : vector<10x20xf32>
    %175 = tpu.matmul %173, %174, %cst_62 {dimension_numbers = #tpu.dot_dimension_numbers<[1], [0], [0], [1], [0, 0, 1, 1], [], []>} : vector<10x32xf32>, vector<32x20xf32>, vector<10x20xf32> -> vector<10x20xf32>
    %c0_63 = arith.constant 0 : index
    %c0_64 = arith.constant 0 : index
    %176 = vector.load %arg12[%c0_63, %c0_64] : memref<1x20xf32, #tpu.memory_space<vmem>>, vector<1x20xf32>
    %177 = vector.broadcast %176 : vector<1x20xf32> to vector<10x20xf32>
    %178 = arith.addf %175, %177 : vector<10x20xf32>
    %c0_65 = arith.constant 0 : index
    %c0_66 = arith.constant 0 : index
    %c0_67 = arith.constant 0 : index
    %179 = vector.load %arg14[%c0_65, %c0_66, %c0_67] : memref<1x10x20xf32, #tpu.memory_space<vmem>>, vector<1x10x20xf32>
    %180 = vector.shape_cast %179 : vector<1x10x20xf32> to vector<10x20xf32>
    %181 = vector.shape_cast %178 : vector<10x20xf32> to vector<1x10x20xf32>
    tpu.vector_store %arg14[%c0_65, %c0_66, %c0_67], %181 {strides = array<i32>} : memref<1x10x20xf32, #tpu.memory_space<vmem>>, vector<1x10x20xf32>,
    return
  }
  func.func @transform_0(%arg0: i32) -> (i32, i32, i32) {
    %c0_i32 = arith.constant 0 : i32
    %c0_i32_0 = arith.constant 0 : i32
    %c0_i32_1 = arith.constant 0 : i32
    return %arg0, %c0_i32, %c0_i32_0 : i32, i32, i32
  }
  func.func @transform_1(%arg0: i32) -> (i32, i32, i32) {
    %c0_i32 = arith.constant 0 : i32
    %c0_i32_0 = arith.constant 0 : i32
    %c0_i32_1 = arith.constant 0 : i32
    return %arg0, %c0_i32, %c0_i32_0 : i32, i32, i32
  }
  func.func @transform_2(%arg0: i32) -> (i32, i32) {
    %c0_i32 = arith.constant 0 : i32
    %c0_i32_0 = arith.constant 0 : i32
    %c0_i32_1 = arith.constant 0 : i32
    return %c0_i32, %c0_i32_0 : i32, i32
  }
  func.func @transform_3(%arg0: i32) -> (i32, i32) {
    %c0_i32 = arith.constant 0 : i32
    %c0_i32_0 = arith.constant 0 : i32
    %c0_i32_1 = arith.constant 0 : i32
    return %c0_i32, %c0_i32_0 : i32, i32
  }
  func.func @transform_4(%arg0: i32) -> (i32, i32) {
    %c0_i32 = arith.constant 0 : i32
    %c0_i32_0 = arith.constant 0 : i32
    %c0_i32_1 = arith.constant 0 : i32
    return %c0_i32, %c0_i32_0 : i32, i32
  }
  func.func @transform_5(%arg0: i32) -> (i32, i32) {
    %c0_i32 = arith.constant 0 : i32
    %c0_i32_0 = arith.constant 0 : i32
    %c0_i32_1 = arith.constant 0 : i32
    return %c0_i32, %c0_i32_0 : i32, i32
  }
  func.func @transform_6(%arg0: i32) -> (i32, i32) {
    %c0_i32 = arith.constant 0 : i32
    %c0_i32_0 = arith.constant 0 : i32
    %c0_i32_1 = arith.constant 0 : i32
    return %c0_i32, %c0_i32_0 : i32, i32
  }
  func.func @transform_7(%arg0: i32) -> (i32, i32) {
    %c0_i32 = arith.constant 0 : i32
    %c0_i32_0 = arith.constant 0 : i32
    %c0_i32_1 = arith.constant 0 : i32
    return %c0_i32, %c0_i32_0 : i32, i32
  }
  func.func @transform_8(%arg0: i32) -> (i32, i32) {
    %c0_i32 = arith.constant 0 : i32
    %c0_i32_0 = arith.constant 0 : i32
    %c0_i32_1 = arith.constant 0 : i32
    return %c0_i32, %c0_i32_0 : i32, i32
  }
  func.func @transform_9(%arg0: i32) -> (i32, i32) {
    %c0_i32 = arith.constant 0 : i32
    %c0_i32_0 = arith.constant 0 : i32
    %c0_i32_1 = arith.constant 0 : i32
    return %c0_i32, %c0_i32_0 : i32, i32
  }
  func.func @transform_10(%arg0: i32) -> (i32, i32) {
    %c0_i32 = arith.constant 0 : i32
    %c0_i32_0 = arith.constant 0 : i32
    %c0_i32_1 = arith.constant 0 : i32
    return %c0_i32, %c0_i32_0 : i32, i32
  }
  func.func @transform_11(%arg0: i32) -> (i32, i32) {
    %c0_i32 = arith.constant 0 : i32
    %c0_i32_0 = arith.constant 0 : i32
    %c0_i32_1 = arith.constant 0 : i32
    return %c0_i32, %c0_i32_0 : i32, i32
  }
  func.func @transform_12(%arg0: i32) -> (i32, i32) {
    %c0_i32 = arith.constant 0 : i32
    %c0_i32_0 = arith.constant 0 : i32
    %c0_i32_1 = arith.constant 0 : i32
    return %c0_i32, %c0_i32_0 : i32, i32
  }
  func.func @transform_13(%arg0: i32) -> (i32, i32, i32) {
    %c0_i32 = arith.constant 0 : i32
    %c0_i32_0 = arith.constant 0 : i32
    %c0_i32_1 = arith.constant 0 : i32
    return %arg0, %c0_i32, %c0_i32_0 : i32, i32, i32
  }
}

</mosaic_0001>

<llo_original>
// kernel: tpu_custom_call.1
$region0: #{tpu_custom_call.1}
  #allocation0 [shape = 'u32[]', space=smem, size = 0x4, offset = 0x4, fixed_abs, tag = 'smem constant byte address 0x4 - core index']
  #allocation1 [shape = 'u32[144,128]{1,0:T(1,128)}', space=vmem, size = 0x12000, scoped, tag = 'internal scratch']
  %s0 = inlined_call_operand.vmem [shape: f32[2,10,32], index: 0, kind: input, shape index: {}]
  %s1 = inlined_call_operand.vmem [shape: f32[2,10,32], index: 1, kind: input, shape index: {}]
  %s2 = inlined_call_operand.vmem [shape: f32[32,128], index: 2, kind: input, shape index: {}]
  %s3 = inlined_call_operand.vmem [shape: f32[1,128], index: 3, kind: input, shape index: {}]
  %s4 = inlined_call_operand.vmem [shape: f32[32,128], index: 4, kind: input, shape index: {}]
  %s5 = inlined_call_operand.vmem [shape: f32[1,128], index: 5, kind: input, shape index: {}]
  %s6 = inlined_call_operand.vmem [shape: f32[32,64], index: 6, kind: input, shape index: {}]
  %s7 = inlined_call_operand.vmem [shape: f32[1,64], index: 7, kind: input, shape index: {}]
  %s8 = inlined_call_operand.vmem [shape: f32[64,32], index: 8, kind: input, shape index: {}]
  %s9 = inlined_call_operand.vmem [shape: f32[1,32], index: 9, kind: input, shape index: {}]
  %s10 = inlined_call_operand.vmem [shape: f32[32,20], index: 10, kind: input, shape index: {}]
  %s11 = inlined_call_operand.vmem [shape: f32[1,20], index: 11, kind: input, shape index: {}]
  %s12 = inlined_call_operand.vmem [shape: f32[6,32], index: 12, kind: input, shape index: {}]
  %s13 = inlined_call_operand.vmem [shape: f32[2,10,20], index: 13, kind: output, shape index: {}]
  %s14 = sld [smem:[#allocation0]]
  $region85: #{tpu_custom_call.1} parent=0
    _
  %s16 = ssub.s32 1, %s14
  %s17 = scalar_select 0, %s16, %s14
  loop: start=0, step=1, limit=4
  $region2: #{tpu_custom_call.1} parent=0 // loop_pre_header
    _
  $region3: #{tpu_custom_call.1} parent=0 // loop_header
    %s19 = sphi 0, %s23
    %p20 = scmp.ge.s32.totalorder %s19, 4
    %s29 = sphi 0, %s31
    %s32 = sphi 0, %s29
    %s33 = sphi 0, %s32
    %s49 = sphi 0, %s33
    %s55 = sphi 0, %s57
    %s58 = sphi 0, %s55
    %s59 = sphi 0, %s58
    %s75 = sphi 0, %s59
    %s79 = sphi 0, %s79
    %s81 = sphi 0, %s79
    %s82 = sphi 0, %s81
    %s96 = sphi 0, %s82
    %s100 = sphi 0, %s100
    %s102 = sphi 0, %s100
    %s103 = sphi 0, %s102
    %s117 = sphi 0, %s103
    %s121 = sphi 0, %s121
    %s123 = sphi 0, %s121
    %s124 = sphi 0, %s123
    %s138 = sphi 0, %s124
    %s142 = sphi 0, %s142
    %s144 = sphi 0, %s142
    %s145 = sphi 0, %s144
    %s159 = sphi 0, %s145
    %s163 = sphi 0, %s163
    %s165 = sphi 0, %s163
    %s166 = sphi 0, %s165
    %s180 = sphi 0, %s166
    %s184 = sphi 0, %s184
    %s186 = sphi 0, %s184
    %s187 = sphi 0, %s186
    %s201 = sphi 0, %s187
    %s205 = sphi 0, %s205
    %s207 = sphi 0, %s205
    %s208 = sphi 0, %s207
    %s222 = sphi 0, %s208
    %s226 = sphi 0, %s226
    %s228 = sphi 0, %s226
    %s229 = sphi 0, %s228
    %s243 = sphi 0, %s229
    %s247 = sphi 0, %s247
    %s249 = sphi 0, %s247
    %s250 = sphi 0, %s249
    %s264 = sphi 0, %s250
    %s268 = sphi 0, %s268
    %s270 = sphi 0, %s268
    %s271 = sphi 0, %s270
    %s285 = sphi 0, %s271
    %s289 = sphi 0, %s289
    %s291 = sphi 0, %s289
    %s292 = sphi 0, %s291
    %s306 = sphi 0, %s292
    %s312 = sphi 0, %s314
    %s315 = sphi 0, %s312
    %s316 = sphi 0, %s315
    %s332 = sphi 0, %s316
  $region4: #{tpu_custom_call.1} parent=0 // loop_header_branch
    %22 = sbr.rel (%p20) target = $region8
  $region5: #{tpu_custom_call.1} parent=0 // loop_body
    %s24 = ssub.s32 %s19, 1
    %s25 = ssub.s32 %s19, 2
    %s26 = sadd.s32 %s19, 1
    %s27 = ssub.s32 %s19, %s26
    %p28 = scmp.eq.s32.totalorder %s27, 0
    %s30 = sadd.s32 %s29, 1
    %s31 = scalar_select %p28, %s29, %s30
    %p34 = pneg %p28
    %p35 = scmp.eq.s32.totalorder %s19, 1
    %p36 = por %p34, %p35
    %p37 = scmp.ne.s32.totalorder %s29, %s32
    %p38 = scmp.eq.s32.totalorder %s19, 0
    %p39 = por %p37, %p38
    %p40 = scmp.ne.s32.totalorder %s29, %s32
    %p41 = scmp.eq.s32.totalorder %s24, 1
    %p42 = por %p40, %p41
    %p43 = scmp.ne.s32.totalorder %s32, %s33
    %p44 = scmp.eq.s32.totalorder %s24, 0
    %p45 = por %p43, %p44
    %p46 = scmp.ne.s32.totalorder %s32, %s33
    %p47 = scmp.eq.s32.totalorder %s25, 1
    %p48 = por %p46, %p47
    %p50 = scmp.ne.s32.totalorder %s33, %s49
    %p51 = scmp.eq.s32.totalorder %s25, 0
    %p52 = por %p50, %p51
    %s53 = ssub.s32 %s19, %s26
    %p54 = scmp.eq.s32.totalorder %s53, 0
    %s56 = sadd.s32 %s55, 1
    %s57 = scalar_select %p54, %s55, %s56
    %p60 = pneg %p54
    %p61 = scmp.eq.s32.totalorder %s19, 1
    %p62 = por %p60, %p61
    %p63 = scmp.ne.s32.totalorder %s55, %s58
    %p64 = scmp.eq.s32.totalorder %s19, 0
    %p65 = por %p63, %p64
    %p66 = scmp.ne.s32.totalorder %s55, %s58
    %p67 = scmp.eq.s32.totalorder %s24, 1
    %p68 = por %p66, %p67
    %p69 = scmp.ne.s32.totalorder %s58, %s59
    %p70 = scmp.eq.s32.totalorder %s24, 0
    %p71 = por %p69, %p70
    %p72 = scmp.ne.s32.totalorder %s58, %s59
    %p73 = scmp.eq.s32.totalorder %s25, 1
    %p74 = por %p72, %p73
    %p76 = scmp.ne.s32.totalorder %s59, %s75
    %p77 = scmp.eq.s32.totalorder %s25, 0
    %p78 = por %p76, %p77
    %s80 = sadd.s32 %s79, 1
    %p83 = scmp.eq.s32.totalorder %s19, 1
    %p84 = scmp.ne.s32.totalorder %s79, %s81
    %p85 = scmp.eq.s32.totalorder %s19, 0
    %p86 = por %p84, %p85
    %p87 = scmp.ne.s32.totalorder %s79, %s81
    %p88 = scmp.eq.s32.totalorder %s24, 1
    %p89 = por %p87, %p88
    %p90 = scmp.ne.s32.totalorder %s81, %s82
    %p91 = scmp.eq.s32.totalorder %s24, 0
    %p92 = por %p90, %p91
    %p93 = scmp.ne.s32.totalorder %s81, %s82
    %p94 = scmp.eq.s32.totalorder %s25, 1
    %p95 = por %p93, %p94
    %p97 = scmp.ne.s32.totalorder %s82, %s96
    %p98 = scmp.eq.s32.totalorder %s25, 0
    %p99 = por %p97, %p98
    %s101 = sadd.s32 %s100, 1
    %p104 = scmp.eq.s32.totalorder %s19, 1
    %p105 = scmp.ne.s32.totalorder %s100, %s102
    %p106 = scmp.eq.s32.totalorder %s19, 0
    %p107 = por %p105, %p106
    %p108 = scmp.ne.s32.totalorder %s100, %s102
    %p109 = scmp.eq.s32.totalorder %s24, 1
    %p110 = por %p108, %p109
    %p111 = scmp.ne.s32.totalorder %s102, %s103
    %p112 = scmp.eq.s32.totalorder %s24, 0
    %p113 = por %p111, %p112
    %p114 = scmp.ne.s32.totalorder %s102, %s103
    %p115 = scmp.eq.s32.totalorder %s25, 1
    %p116 = por %p114, %p115
    %p118 = scmp.ne.s32.totalorder %s103, %s117
    %p119 = scmp.eq.s32.totalorder %s25, 0
    %p120 = por %p118, %p119
    %s122 = sadd.s32 %s121, 1
    %p125 = scmp.eq.s32.totalorder %s19, 1
    %p126 = scmp.ne.s32.totalorder %s121, %s123
    %p127 = scmp.eq.s32.totalorder %s19, 0
    %p128 = por %p126, %p127
    %p129 = scmp.ne.s32.totalorder %s121, %s123
    %p130 = scmp.eq.s32.totalorder %s24, 1
    %p131 = por %p129, %p130
    %p132 = scmp.ne.s32.totalorder %s123, %s124
    %p133 = scmp.eq.s32.totalorder %s24, 0
    %p134 = por %p132, %p133
    %p135 = scmp.ne.s32.totalorder %s123, %s124
    %p136 = scmp.eq.s32.totalorder %s25, 1
    %p137 = por %p135, %p136
    %p139 = scmp.ne.s32.totalorder %s124, %s138
    %p140 = scmp.eq.s32.totalorder %s25, 0
    %p141 = por %p139, %p140
    %s143 = sadd.s32 %s142, 1
    %p146 = scmp.eq.s32.totalorder %s19, 1
    %p147 = scmp.ne.s32.totalorder %s142, %s144
    %p148 = scmp.eq.s32.totalorder %s19, 0
    %p149 = por %p147, %p148
    %p150 = scmp.ne.s32.totalorder %s142, %s144
    %p151 = scmp.eq.s32.totalorder %s24, 1
    %p152 = por %p150, %p151
    %p153 = scmp.ne.s32.totalorder %s144, %s145
    %p154 = scmp.eq.s32.totalorder %s24, 0
    %p155 = por %p153, %p154
    %p156 = scmp.ne.s32.totalorder %s144, %s145
    %p157 = scmp.eq.s32.totalorder %s25, 1
    %p158 = por %p156, %p157
    %p160 = scmp.ne.s32.totalorder %s145, %s159
    %p161 = scmp.eq.s32.totalorder %s25, 0
    %p162 = por %p160, %p161
    %s164 = sadd.s32 %s163, 1
    %p167 = scmp.eq.s32.totalorder %s19, 1
    %p168 = scmp.ne.s32.totalorder %s163, %s165
    %p169 = scmp.eq.s32.totalorder %s19, 0
    %p170 = por %p168, %p169
    %p171 = scmp.ne.s32.totalorder %s163, %s165
    %p172 = scmp.eq.s32.totalorder %s24, 1
    %p173 = por %p171, %p172
    %p174 = scmp.ne.s32.totalorder %s165, %s166
    %p175 = scmp.eq.s32.totalorder %s24, 0
    %p176 = por %p174, %p175
    %p177 = scmp.ne.s32.totalorder %s165, %s166
    %p178 = scmp.eq.s32.totalorder %s25, 1
    %p179 = por %p177, %p178
    %p181 = scmp.ne.s32.totalorder %s166, %s180
    %p182 = scmp.eq.s32.totalorder %s25, 0
    %p183 = por %p181, %p182
    %s185 = sadd.s32 %s184, 1
    %p188 = scmp.eq.s32.totalorder %s19, 1
    %p189 = scmp.ne.s32.totalorder %s184, %s186
    %p190 = scmp.eq.s32.totalorder %s19, 0
    %p191 = por %p189, %p190
    %p192 = scmp.ne.s32.totalorder %s184, %s186
    %p193 = scmp.eq.s32.totalorder %s24, 1
    %p194 = por %p192, %p193
    %p195 = scmp.ne.s32.totalorder %s186, %s187
    %p196 = scmp.eq.s32.totalorder %s24, 0
    %p197 = por %p195, %p196
    %p198 = scmp.ne.s32.totalorder %s186, %s187
    %p199 = scmp.eq.s32.totalorder %s25, 1
    %p200 = por %p198, %p199
    %p202 = scmp.ne.s32.totalorder %s187, %s201
    %p203 = scmp.eq.s32.totalorder %s25, 0
    %p204 = por %p202, %p203
    %s206 = sadd.s32 %s205, 1
    %p209 = scmp.eq.s32.totalorder %s19, 1
    %p210 = scmp.ne.s32.totalorder %s205, %s207
    %p211 = scmp.eq.s32.totalorder %s19, 0
    %p212 = por %p210, %p211
    %p213 = scmp.ne.s32.totalorder %s205, %s207
    %p214 = scmp.eq.s32.totalorder %s24, 1
    %p215 = por %p213, %p214
    %p216 = scmp.ne.s32.totalorder %s207, %s208
    %p217 = scmp.eq.s32.totalorder %s24, 0
    %p218 = por %p216, %p217
    %p219 = scmp.ne.s32.totalorder %s207, %s208
    %p220 = scmp.eq.s32.totalorder %s25, 1
    %p221 = por %p219, %p220
    %p223 = scmp.ne.s32.totalorder %s208, %s222
    %p224 = scmp.eq.s32.totalorder %s25, 0
    %p225 = por %p223, %p224
    %s227 = sadd.s32 %s226, 1
    %p230 = scmp.eq.s32.totalorder %s19, 1
    %p231 = scmp.ne.s32.totalorder %s226, %s228
    %p232 = scmp.eq.s32.totalorder %s19, 0
    %p233 = por %p231, %p232
    %p234 = scmp.ne.s32.totalorder %s226, %s228
    %p235 = scmp.eq.s32.totalorder %s24, 1
    %p236 = por %p234, %p235
    %p237 = scmp.ne.s32.totalorder %s228, %s229
    %p238 = scmp.eq.s32.totalorder %s24, 0
    %p239 = por %p237, %p238
    %p240 = scmp.ne.s32.totalorder %s228, %s229
    %p241 = scmp.eq.s32.totalorder %s25, 1
    %p242 = por %p240, %p241
    %p244 = scmp.ne.s32.totalorder %s229, %s243
    %p245 = scmp.eq.s32.totalorder %s25, 0
    %p246 = por %p244, %p245
    %s248 = sadd.s32 %s247, 1
    %p251 = scmp.eq.s32.totalorder %s19, 1
    %p252 = scmp.ne.s32.totalorder %s247, %s249
    %p253 = scmp.eq.s32.totalorder %s19, 0
    %p254 = por %p252, %p253
    %p255 = scmp.ne.s32.totalorder %s247, %s249
    %p256 = scmp.eq.s32.totalorder %s24, 1
    %p257 = por %p255, %p256
    %p258 = scmp.ne.s32.totalorder %s249, %s250
    %p259 = scmp.eq.s32.totalorder %s24, 0
    %p260 = por %p258, %p259
    %p261 = scmp.ne.s32.totalorder %s249, %s250
    %p262 = scmp.eq.s32.totalorder %s25, 1
    %p263 = por %p261, %p262
    %p265 = scmp.ne.s32.totalorder %s250, %s264
    %p266 = scmp.eq.s32.totalorder %s25, 0
    %p267 = por %p265, %p266
    %s269 = sadd.s32 %s268, 1
    %p272 = scmp.eq.s32.totalorder %s19, 1
    %p273 = scmp.ne.s32.totalorder %s268, %s270
    %p274 = scmp.eq.s32.totalorder %s19, 0
    %p275 = por %p273, %p274
    %p276 = scmp.ne.s32.totalorder %s268, %s270
    %p277 = scmp.eq.s32.totalorder %s24, 1
    %p278 = por %p276, %p277
    %p279 = scmp.ne.s32.totalorder %s270, %s271
    %p280 = scmp.eq.s32.totalorder %s24, 0
    %p281 = por %p279, %p280
    %p282 = scmp.ne.s32.totalorder %s270, %s271
    %p283 = scmp.eq.s32.totalorder %s25, 1
    %p284 = por %p282, %p283
    %p286 = scmp.ne.s32.totalorder %s271, %s285
    %p287 = scmp.eq.s32.totalorder %s25, 0
    %p288 = por %p286, %p287
    %s290 = sadd.s32 %s289, 1
    %p293 = scmp.eq.s32.totalorder %s19, 1
    %p294 = scmp.ne.s32.totalorder %s289, %s291
    %p295 = scmp.eq.s32.totalorder %s19, 0
    %p296 = por %p294, %p295
    %p297 = scmp.ne.s32.totalorder %s289, %s291
    %p298 = scmp.eq.s32.totalorder %s24, 1
    %p299 = por %p297, %p298
    %p300 = scmp.ne.s32.totalorder %s291, %s292
    %p301 = scmp.eq.s32.totalorder %s24, 0
    %p302 = por %p300, %p301
    %p303 = scmp.ne.s32.totalorder %s291, %s292
    %p304 = scmp.eq.s32.totalorder %s25, 1
    %p305 = por %p303, %p304
    %p307 = scmp.ne.s32.totalorder %s292, %s306
    %p308 = scmp.eq.s32.totalorder %s25, 0
    %p309 = por %p307, %p308
    %s310 = ssub.s32 %s19, %s26
    %p311 = scmp.eq.s32.totalorder %s310, 0
    %s313 = sadd.s32 %s312, 1
    %s314 = scalar_select %p311, %s312, %s313
    %p317 = pneg %p311
    %p318 = scmp.eq.s32.totalorder %s19, 1
    %p319 = por %p317, %p318
    %p320 = scmp.ne.s32.totalorder %s312, %s315
    %p321 = scmp.eq.s32.totalorder %s19, 0
    %p322 = por %p320, %p321
    %p323 = scmp.ne.s32.totalorder %s312, %s315
    %p324 = scmp.eq.s32.totalorder %s24, 1
    %p325 = por %p323, %p324
    %p326 = scmp.ne.s32.totalorder %s315, %s316
    %p327 = scmp.eq.s32.totalorder %s24, 0
    %p328 = por %p326, %p327
    %p329 = scmp.ne.s32.totalorder %s315, %s316
    %p330 = scmp.eq.s32.totalorder %s25, 1
    %p331 = por %p329, %p330
    %p333 = scmp.ne.s32.totalorder %s316, %s332
    %p334 = scmp.eq.s32.totalorder %s25, 0
    %p335 = por %p333, %p334
    %p336 = scmp.le.s32.totalorder 1, %s19
    %p337 = scmp.lt.s32.totalorder %s19, 3
    %p338 = pnand %p336, %p337
    %p339 = pneg %p338
    // Predicated region
    $region9: #{tpu_custom_call.1} parent=5 // pred_check
      _
    $region10: #{tpu_custom_call.1} parent=5 // pred_check_branch
      %341 = sbr.rel (%p338) target = $region12
    $region11: #{tpu_custom_call.1} parent=5 // pred_region
      %s342 = ssub.s32 %s19, 1
      // Predicated region
      $region13: #{tpu_custom_call.1} parent=11 // pred_check
        %p343 = pneg %p92
      $region14: #{tpu_custom_call.1} parent=11 // pred_check_branch
        %345 = sbr.rel (%p343) target = $region16
      $region15: #{tpu_custom_call.1} parent=11 // pred_region
        _
      $region16: #{tpu_custom_call.1} parent=11 // pred_fallthru
        _
      // Predicated region
      $region17: #{tpu_custom_call.1} parent=11 // pred_check
        %p346 = pneg %p113
      $region18: #{tpu_custom_call.1} parent=11 // pred_check_branch
        %348 = sbr.rel (%p346) target = $region20
      $region19: #{tpu_custom_call.1} parent=11 // pred_region
        _
      $region20: #{tpu_custom_call.1} parent=11 // pred_fallthru
        _
      // Predicated region
      $region21: #{tpu_custom_call.1} parent=11 // pred_check
        %p349 = pneg %p134
      $region22: #{tpu_custom_call.1} parent=11 // pred_check_branch
        %351 = sbr.rel (%p349) target = $region24
      $region23: #{tpu_custom_call.1} parent=11 // pred_region
        _
      $region24: #{tpu_custom_call.1} parent=11 // pred_fallthru
        _
      // Predicated region
      $region25: #{tpu_custom_call.1} parent=11 // pred_check
        %p352 = pneg %p155
      $region26: #{tpu_custom_call.1} parent=11 // pred_check_branch
        %354 = sbr.rel (%p352) target = $region28
      $region27: #{tpu_custom_call.1} parent=11 // pred_region
        _
      $region28: #{tpu_custom_call.1} parent=11 // pred_fallthru
        _
      // Predicated region
      $region29: #{tpu_custom_call.1} parent=11 // pred_check
        %p355 = pneg %p176
      $region30: #{tpu_custom_call.1} parent=11 // pred_check_branch
        %357 = sbr.rel (%p355) target = $region32
      $region31: #{tpu_custom_call.1} parent=11 // pred_region
        _
      $region32: #{tpu_custom_call.1} parent=11 // pred_fallthru
        _
      // Predicated region
      $region33: #{tpu_custom_call.1} parent=11 // pred_check
        %p358 = pneg %p197
      $region34: #{tpu_custom_call.1} parent=11 // pred_check_branch
        %360 = sbr.rel (%p358) target = $region36
      $region35: #{tpu_custom_call.1} parent=11 // pred_region
        _
      $region36: #{tpu_custom_call.1} parent=11 // pred_fallthru
        _
      // Predicated region
      $region37: #{tpu_custom_call.1} parent=11 // pred_check
        %p361 = pneg %p218
      $region38: #{tpu_custom_call.1} parent=11 // pred_check_branch
        %363 = sbr.rel (%p361) target = $region40
      $region39: #{tpu_custom_call.1} parent=11 // pred_region
        _
      $region40: #{tpu_custom_call.1} parent=11 // pred_fallthru
        _
      // Predicated region
      $region41: #{tpu_custom_call.1} parent=11 // pred_check
        %p364 = pneg %p239
      $region42: #{tpu_custom_call.1} parent=11 // pred_check_branch
        %366 = sbr.rel (%p364) target = $region44
      $region43: #{tpu_custom_call.1} parent=11 // pred_region
        _
      $region44: #{tpu_custom_call.1} parent=11 // pred_fallthru
        _
      // Predicated region
      $region45: #{tpu_custom_call.1} parent=11 // pred_check
        %p367 = pneg %p260
      $region46: #{tpu_custom_call.1} parent=11 // pred_check_branch
        %369 = sbr.rel (%p367) target = $region48
      $region47: #{tpu_custom_call.1} parent=11 // pred_region
        _
      $region48: #{tpu_custom_call.1} parent=11 // pred_fallthru
        _
      // Predicated region
      $region49: #{tpu_custom_call.1} parent=11 // pred_check
        %p370 = pneg %p281
      $region50: #{tpu_custom_call.1} parent=11 // pred_check_branch
        %372 = sbr.rel (%p370) target = $region52
      $region51: #{tpu_custom_call.1} parent=11 // pred_region
        _
      $region52: #{tpu_custom_call.1} parent=11 // pred_fallthru
        _
      // Predicated region
      $region53: #{tpu_custom_call.1} parent=11 // pred_check
        %p373 = pneg %p302
      $region54: #{tpu_custom_call.1} parent=11 // pred_check_branch
        %375 = sbr.rel (%p373) target = $region56
      $region55: #{tpu_custom_call.1} parent=11 // pred_region
        _
      $region56: #{tpu_custom_call.1} parent=11 // pred_fallthru
        _
    $region12: #{tpu_custom_call.1} parent=5 // pred_fallthru
      _
    %p376 = scmp.lt.s32.totalorder %s19, 2
    // Predicated region
    $region57: #{tpu_custom_call.1} parent=5 // pred_check
      %p377 = pneg %p376
    $region58: #{tpu_custom_call.1} parent=5 // pred_check_branch
      %379 = sbr.rel (%p377) target = $region60
    $region59: #{tpu_custom_call.1} parent=5 // pred_region
      // Predicated region
      $region61: #{tpu_custom_call.1} parent=59 // pred_check
        %p380 = pneg %p39
      $region62: #{tpu_custom_call.1} parent=59 // pred_check_branch
        %382 = sbr.rel (%p380) target = $region64
      $region63: #{tpu_custom_call.1} parent=59 // pred_region
        %p383 = scmp.lt.s32.totalorder %s19, 1
        %s384 = scalar_select %p383, %s19, 1
        %s385 = smul.addr %s384, 2
        %s386 = smul.addr %s385, 8
        %s387 = scalar_lea.vmem %s0, %s386
      $region64: #{tpu_custom_call.1} parent=59 // pred_fallthru
        _
      // Predicated region
      $region65: #{tpu_custom_call.1} parent=59 // pred_check
        %p388 = pneg %p65
      $region66: #{tpu_custom_call.1} parent=59 // pred_check_branch
        %390 = sbr.rel (%p388) target = $region68
      $region67: #{tpu_custom_call.1} parent=59 // pred_region
        %p391 = scmp.lt.s32.totalorder %s19, 1
        %s392 = scalar_select %p391, %s19, 1
        %s393 = smul.addr %s392, 2
        %s394 = smul.addr %s393, 8
        %s395 = scalar_lea.vmem %s1, %s394
      $region68: #{tpu_custom_call.1} parent=59 // pred_fallthru
        _
    $region60: #{tpu_custom_call.1} parent=5 // pred_fallthru
      _
    %p396 = scmp.le.s32.totalorder 1, %s19
    %p397 = scmp.lt.s32.totalorder %s19, 3
    %p398 = pnand %p396, %p397
    %p399 = pneg %p398
    // Predicated region
    $region69: #{tpu_custom_call.1} parent=5 // pred_check
      _
    $region70: #{tpu_custom_call.1} parent=5 // pred_check_branch
      %401 = sbr.rel (%p398) target = $region72
    $region71: #{tpu_custom_call.1} parent=5 // pred_region
      %s402 = ssub.s32 %s19, 1
      %p403 = scmp.lt.s32.totalorder %s24, 1
      %s404 = scalar_select %p403, %s24, 1
      %s405 = smul.addr %s404, 2
      %s406 = smul.addr %s405, 8
      %s407 = scalar_lea.vmem %s0, %s406
      %p408 = pneg %p45
      %p409 = pneg %p42
      %p410 = scmp.lt.s32.totalorder %s24, 1
      %s411 = scalar_select %p410, %s24, 1
      %s412 = smul.addr %s411, 2
      %s413 = smul.addr %s412, 8
      %s414 = scalar_lea.vmem %s1, %s413
      %p415 = pneg %p71
      %p416 = pneg %p68
      %p417 = pneg %p92
      %p418 = pneg %p89
      %p419 = pneg %p113
      %p420 = pneg %p110
      %p421 = pneg %p134
      %p422 = pneg %p131
      %p423 = pneg %p155
      %p424 = pneg %p152
      %p425 = pneg %p176
      %p426 = pneg %p173
      %p427 = pneg %p197
      %p428 = pneg %p194
      %p429 = pneg %p218
      %p430 = pneg %p215
      %p431 = pneg %p239
      %p432 = pneg %p236
      %p433 = pneg %p260
      %p434 = pneg %p257
      %p435 = pneg %p281
      %p436 = pneg %p278
      %p437 = pneg %p302
      %p438 = pneg %p299
      %p439 = pneg %p328
      %p440 = pneg %p325
      %p441 = scmp.lt.s32.totalorder %s24, 1
      %s442 = scalar_select %p441, %s24, 1
      %s443 = smul.addr %s442, 2
      %s444 = smul.addr %s443, 8
      %s445 = scalar_lea.vmem %s13, %s444
      %p446 = scmp.lt.s32.totalorder %s24, 1
      %s447 = scalar_select %p446, %s24, 1
      %s448 = smul.addr %s447, 2
      %s449 = smul.addr %s448, 8
      %s450 = scalar_lea.vmem %s0, %s449
      %p451 = scmp.lt.s32.totalorder %s24, 1
      %s452 = scalar_select %p451, %s24, 1
      %s453 = smul.addr %s452, 2
      %s454 = smul.addr %s453, 8
      %s455 = scalar_lea.vmem %s1, %s454
      %p456 = scmp.lt.s32.totalorder %s24, 1
      %s457 = scalar_select %p456, %s24, 1
      %s458 = smul.addr %s457, 2
      %s459 = smul.addr %s458, 8
      %s460 = scalar_lea.vmem %s13, %s459
      %v461 = vld [vmem:[%s450] sm:$0xff]
      %v462 = vld [vmem:[%s450 + $0x8] sm:$0x3]
      %v463 = vld [vmem:[%s455] sm:$0xff]
      %v464 = vld [vmem:[%s455 + $0x8] sm:$0x3]
      %v465 = vld [vmem:[%s12] sm:$0x3f]
      %v466 = vld [vmem:[%s2] sm:$0xff]
      %v467 = vld [vmem:[%s2 + $0x8] sm:$0xff]
      %v468 = vld [vmem:[%s2 + $0x10] sm:$0xff]
      %v469 = vld [vmem:[%s2 + $0x18] sm:$0xff]
      %v470 = vld [vmem:[%s3] sm:$0x1]
      %v472 = vlaneseq
      %v473 = vshrl.u32 %v472, 7
      %v474 = vsub.s32 0, %v473
      %v475 = vrot.slane %v470, %v474
      %vm477 = vcmask 261120
      %v479 = vsel %vm477, %v461, 0
      %v482 = vsel %vm477, %v462, 0
      %484 = vmatprep.subr.mxu0 0.0
      %485 = vmatpush1.msra.mxu0 0.0
      %486 = vmatprep.subr.mxu0 0.0
      %487 = vmatpush1.msra.mxu0 0.0
      %488 = vmatprep.subr.mxu0 0.0
      %489 = vmatpush1.msra.mxu0 0.0
      %490 = vmatprep.subr.mxu0 0.0
      %491 = vmatpush1.msra.mxu0 0.0
      %492 = vmatprep.subr.mxu0 0.0
      %493 = vmatpush1.msra.mxu0 0.0
      %494 = vmatprep.subr.mxu0 0.0
      %495 = vmatpush1.msra.mxu0 0.0
      %496 = vmatprep.subr.mxu0 0.0
      %497 = vmatpush1.msra.mxu0 0.0
      %498 = vmatprep.subr.mxu0 0.0
      %499 = vmatpush1.msra.mxu0 0.0
      %500 = vmatprep.subr.mxu0 0.0
      %501 = vmatpush1.msra.mxu0 0.0
      %502 = vmatprep.subr.mxu0 0.0
      %503 = vmatpush1.msra.mxu0 0.0
      %504 = vmatprep.subr.mxu0 0.0
      %505 = vmatpush1.msra.mxu0 0.0
      %506 = vmatprep.subr.mxu0 0.0
      %507 = vmatpush1.msra.mxu0 0.0
      %508 = vmatprep.subr.mxu0 0.0
      %509 = vmatpush1.msra.mxu0 %v469
      %510 = vmatprep.subr.mxu0 0.0
      %511 = vmatpush1.msra.mxu0 %v468
      %512 = vmatprep.subr.mxu0 0.0
      %513 = vmatpush1.msra.mxu0 %v467
      %514 = vmatprep.subr.mxu0 0.0
      %515 = vmatpush1.msra.mxu0 %v466
      %516 = vmatprep.subr.mxu0 0.0
      %517 = vmatpush2.msra.mxu0 0.0
      %518 = vmatprep.subr.mxu0 0.0
      %519 = vmatpush2.msra.mxu0 0.0
      %520 = vmatprep.subr.mxu0 0.0
      %521 = vmatpush2.msra.mxu0 0.0
      %522 = vmatprep.subr.mxu0 0.0
      %523 = vmatpush2.msra.mxu0 0.0
      %524 = vmatprep.subr.mxu0 0.0
      %525 = vmatpush2.msra.mxu0 0.0
      %526 = vmatprep.subr.mxu0 0.0
      %527 = vmatpush2.msra.mxu0 0.0
      %528 = vmatprep.subr.mxu0 0.0
      %529 = vmatpush2.msra.mxu0 0.0
      %530 = vmatprep.subr.mxu0 0.0
      %531 = vmatpush2.msra.mxu0 0.0
      %532 = vmatprep.subr.mxu0 0.0
      %533 = vmatpush2.msra.mxu0 0.0
      %534 = vmatprep.subr.mxu0 0.0
      %535 = vmatpush2.msra.mxu0 0.0
      %536 = vmatprep.subr.mxu0 0.0
      %537 = vmatpush2.msra.mxu0 0.0
      %538 = vmatprep.subr.mxu0 0.0
      %539 = vmatpush2.msra.mxu0 0.0
      %540 = vmatprep.subr.mxu0 0.0
      %541 = vmatpush2.msra.mxu0 0.0
      %542 = vmatprep.subr.mxu0 0.0
      %543 = vmatpush2.msra.mxu0 0.0
      %544 = vmatprep.subr.mxu0 0.0
      %545 = vmatpush2.msra.mxu0 0.0
      %546 = vmatprep.subr.mxu0 0.0
      %547 = vmatpush2.msra.mxu0 0.0
      %548 = vmatprep.mubr.f32.mxu0 0.0
      %549 = vmatmul.mubr.f32.gmra.mxu0 %v479
      %v550 = vpop.f32.mrf.mxu0
      %v551 = vadd.f32 %v475, %v550
      %v552 = vpop.f32.mrf.mxu0
      %553 = vmatprep.mubr.f32.mxu0 0.0
      %554 = vmatmul.mubr.f32.gmra.mxu0 %v482
      %v555 = vpop.f32.mrf.mxu0
      %v556 = vadd.f32 %v475, %v555
      %v557 = vpop.f32.mrf.mxu0
      %558 = vdwg.mxu0
      %563 = vrot.lane.b32.xlu0 %v466, 96
      %v564 = vpop.permute.xlu0 %563
      %565 = vrot.lane.b32.xlu0 %v467, 96
      %v566 = vpop.permute.xlu0 %565
      %567 = vrot.lane.b32.xlu0 %v468, 96
      %v568 = vpop.permute.xlu0 %567
      %569 = vrot.lane.b32.xlu0 %v469, 96
      %v570 = vpop.permute.xlu0 %569
      %575 = vrot.lane.b32.xlu0 %v475, 96
      %v576 = vpop.permute.xlu0 %575
      %578 = vmatprep.subr.mxu0 0.0
      %579 = vmatpush1.msra.mxu0 0.0
      %580 = vmatprep.subr.mxu0 0.0
      %581 = vmatpush1.msra.mxu0 0.0
      %582 = vmatprep.subr.mxu0 0.0
      %583 = vmatpush1.msra.mxu0 0.0
      %584 = vmatprep.subr.mxu0 0.0
      %585 = vmatpush1.msra.mxu0 0.0
      %586 = vmatprep.subr.mxu0 0.0
      %587 = vmatpush1.msra.mxu0 0.0
      %588 = vmatprep.subr.mxu0 0.0
      %589 = vmatpush1.msra.mxu0 0.0
      %590 = vmatprep.subr.mxu0 0.0
      %591 = vmatpush1.msra.mxu0 0.0
      %592 = vmatprep.subr.mxu0 0.0
      %593 = vmatpush1.msra.mxu0 0.0
      %594 = vmatprep.subr.mxu0 0.0
      %595 = vmatpush1.msra.mxu0 0.0
      %596 = vmatprep.subr.mxu0 0.0
      %597 = vmatpush1.msra.mxu0 0.0
      %598 = vmatprep.subr.mxu0 0.0
      %599 = vmatpush1.msra.mxu0 0.0
      %600 = vmatprep.subr.mxu0 0.0
      %601 = vmatpush1.msra.mxu0 0.0
      %602 = vmatprep.subr.mxu0 0.0
      %603 = vmatpush1.msra.mxu0 %v570
      %604 = vmatprep.subr.mxu0 0.0
      %605 = vmatpush1.msra.mxu0 %v568
      %606 = vmatprep.subr.mxu0 0.0
      %607 = vmatpush1.msra.mxu0 %v566
      %608 = vmatprep.subr.mxu0 0.0
      %609 = vmatpush1.msra.mxu0 %v564
      %610 = vmatprep.subr.mxu0 0.0
      %611 = vmatpush2.msra.mxu0 0.0
      %612 = vmatprep.subr.mxu0 0.0
      %613 = vmatpush2.msra.mxu0 0.0
      %614 = vmatprep.subr.mxu0 0.0
      %615 = vmatpush2.msra.mxu0 0.0
      %616 = vmatprep.subr.mxu0 0.0
      %617 = vmatpush2.msra.mxu0 0.0
      %618 = vmatprep.subr.mxu0 0.0
      %619 = vmatpush2.msra.mxu0 0.0
      %620 = vmatprep.subr.mxu0 0.0
      %621 = vmatpush2.msra.mxu0 0.0
      %622 = vmatprep.subr.mxu0 0.0
      %623 = vmatpush2.msra.mxu0 0.0
      %624 = vmatprep.subr.mxu0 0.0
      %625 = vmatpush2.msra.mxu0 0.0
      %626 = vmatprep.subr.mxu0 0.0
      %627 = vmatpush2.msra.mxu0 0.0
      %628 = vmatprep.subr.mxu0 0.0
      %629 = vmatpush2.msra.mxu0 0.0
      %630 = vmatprep.subr.mxu0 0.0
      %631 = vmatpush2.msra.mxu0 0.0
      %632 = vmatprep.subr.mxu0 0.0
      %633 = vmatpush2.msra.mxu0 0.0
      %634 = vmatprep.subr.mxu0 0.0
      %635 = vmatpush2.msra.mxu0 0.0
      %636 = vmatprep.subr.mxu0 0.0
      %637 = vmatpush2.msra.mxu0 0.0
      %638 = vmatprep.subr.mxu0 0.0
      %639 = vmatpush2.msra.mxu0 0.0
      %640 = vmatprep.subr.mxu0 0.0
      %641 = vmatpush2.msra.mxu0 0.0
      %642 = vmatprep.mubr.f32.mxu0 0.0
      %643 = vmatmul.mubr.f32.gmra.mxu0 %v479
      %v644 = vpop.f32.mrf.mxu0
      %v645 = vadd.f32 %v576, %v644
      %v646 = vpop.f32.mrf.mxu0
      %647 = vmatprep.mubr.f32.mxu0 0.0
      %648 = vmatmul.mubr.f32.gmra.mxu0 %v482
      %v649 = vpop.f32.mrf.mxu0
      %v650 = vadd.f32 %v576, %v649
      %v651 = vpop.f32.mrf.mxu0
      %652 = vdwg.mxu0
      %653 = vrot.lane.b32.xlu0 %v466, 64
      %v654 = vpop.permute.xlu0 %653
      %655 = vrot.lane.b32.xlu0 %v467, 64
      %v656 = vpop.permute.xlu0 %655
      %657 = vrot.lane.b32.xlu0 %v468, 64
      %v658 = vpop.permute.xlu0 %657
      %659 = vrot.lane.b32.xlu0 %v469, 64
      %v660 = vpop.permute.xlu0 %659
      %665 = vrot.lane.b32.xlu0 %v475, 64
      %v666 = vpop.permute.xlu0 %665
      %668 = vmatprep.subr.mxu0 0.0
      %669 = vmatpush1.msra.mxu0 0.0
      %670 = vmatprep.subr.mxu0 0.0
      %671 = vmatpush1.msra.mxu0 0.0
      %672 = vmatprep.subr.mxu0 0.0
      %673 = vmatpush1.msra.mxu0 0.0
      %674 = vmatprep.subr.mxu0 0.0
      %675 = vmatpush1.msra.mxu0 0.0
      %676 = vmatprep.subr.mxu0 0.0
      %677 = vmatpush1.msra.mxu0 0.0
      %678 = vmatprep.subr.mxu0 0.0
      %679 = vmatpush1.msra.mxu0 0.0
      %680 = vmatprep.subr.mxu0 0.0
      %681 = vmatpush1.msra.mxu0 0.0
      %682 = vmatprep.subr.mxu0 0.0
      %683 = vmatpush1.msra.mxu0 0.0
      %684 = vmatprep.subr.mxu0 0.0
      %685 = vmatpush1.msra.mxu0 0.0
      %686 = vmatprep.subr.mxu0 0.0
      %687 = vmatpush1.msra.mxu0 0.0
      %688 = vmatprep.subr.mxu0 0.0
      %689 = vmatpush1.msra.mxu0 0.0
      %690 = vmatprep.subr.mxu0 0.0
      %691 = vmatpush1.msra.mxu0 0.0
      %692 = vmatprep.subr.mxu0 0.0
      %693 = vmatpush1.msra.mxu0 %v660
      %694 = vmatprep.subr.mxu0 0.0
      %695 = vmatpush1.msra.mxu0 %v658
      %696 = vmatprep.subr.mxu0 0.0
      %697 = vmatpush1.msra.mxu0 %v656
      %698 = vmatprep.subr.mxu0 0.0
      %699 = vmatpush1.msra.mxu0 %v654
      %700 = vmatprep.subr.mxu0 0.0
      %701 = vmatpush2.msra.mxu0 0.0
      %702 = vmatprep.subr.mxu0 0.0
      %703 = vmatpush2.msra.mxu0 0.0
      %704 = vmatprep.subr.mxu0 0.0
      %705 = vmatpush2.msra.mxu0 0.0
      %706 = vmatprep.subr.mxu0 0.0
      %707 = vmatpush2.msra.mxu0 0.0
      %708 = vmatprep.subr.mxu0 0.0
      %709 = vmatpush2.msra.mxu0 0.0
      %710 = vmatprep.subr.mxu0 0.0
      %711 = vmatpush2.msra.mxu0 0.0
      %712 = vmatprep.subr.mxu0 0.0
      %713 = vmatpush2.msra.mxu0 0.0
      %714 = vmatprep.subr.mxu0 0.0
      %715 = vmatpush2.msra.mxu0 0.0
      %716 = vmatprep.subr.mxu0 0.0
      %717 = vmatpush2.msra.mxu0 0.0
      %718 = vmatprep.subr.mxu0 0.0
      %719 = vmatpush2.msra.mxu0 0.0
      %720 = vmatprep.subr.mxu0 0.0
      %721 = vmatpush2.msra.mxu0 0.0
      %722 = vmatprep.subr.mxu0 0.0
      %723 = vmatpush2.msra.mxu0 0.0
      %724 = vmatprep.subr.mxu0 0.0
      %725 = vmatpush2.msra.mxu0 0.0
      %726 = vmatprep.subr.mxu0 0.0
      %727 = vmatpush2.msra.mxu0 0.0
      %728 = vmatprep.subr.mxu0 0.0
      %729 = vmatpush2.msra.mxu0 0.0
      %730 = vmatprep.subr.mxu0 0.0
      %731 = vmatpush2.msra.mxu0 0.0
      %732 = vmatprep.mubr.f32.mxu0 0.0
      %733 = vmatmul.mubr.f32.gmra.mxu0 %v479
      %v734 = vpop.f32.mrf.mxu0
      %v735 = vadd.f32 %v666, %v734
      %v736 = vpop.f32.mrf.mxu0
      %737 = vmatprep.mubr.f32.mxu0 0.0
      %738 = vmatmul.mubr.f32.gmra.mxu0 %v482
      %v739 = vpop.f32.mrf.mxu0
      %v740 = vadd.f32 %v666, %v739
      %v741 = vpop.f32.mrf.mxu0
      %742 = vdwg.mxu0
      %745 = vrot.lane.b32.xlu0 %v551, 120
      %v746 = vpop.permute.xlu0 %745
      %747 = vrot.lane.b32.xlu0 %v556, 120
      %v748 = vpop.permute.xlu0 %747
      %749 = vrot.lane.b32.xlu0 %v551, 112
      %v750 = vpop.permute.xlu0 %749
      %751 = vrot.lane.b32.xlu0 %v556, 112
      %v752 = vpop.permute.xlu0 %751
      %753 = vrot.lane.b32.xlu0 %v551, 104
      %v754 = vpop.permute.xlu0 %753
      %755 = vrot.lane.b32.xlu0 %v556, 104
      %v756 = vpop.permute.xlu0 %755
      %759 = vrot.lane.b32.xlu0 %v645, 120
      %v760 = vpop.permute.xlu0 %759
      %761 = vrot.lane.b32.xlu0 %v650, 120
      %v762 = vpop.permute.xlu0 %761
      %765 = vrot.lane.b32.xlu0 %v645, 112
      %v766 = vpop.permute.xlu0 %765
      %767 = vrot.lane.b32.xlu0 %v650, 112
      %v768 = vpop.permute.xlu0 %767
      %771 = vrot.lane.b32.xlu0 %v645, 104
      %v772 = vpop.permute.xlu0 %771
      %773 = vrot.lane.b32.xlu0 %v650, 104
      %v774 = vpop.permute.xlu0 %773
      %779 = vrot.lane.b32.xlu0 %v735, 120
      %v780 = vpop.permute.xlu0 %779
      %781 = vrot.lane.b32.xlu0 %v740, 120
      %v782 = vpop.permute.xlu0 %781
      %784 = vrot.lane.b32.xlu0 %v735, 112
      %v785 = vpop.permute.xlu0 %784
      %786 = vrot.lane.b32.xlu0 %v740, 112
      %v787 = vpop.permute.xlu0 %786
      %789 = vrot.lane.b32.xlu0 %v735, 104
      %v790 = vpop.permute.xlu0 %789
      %791 = vrot.lane.b32.xlu0 %v740, 104
      %v792 = vpop.permute.xlu0 %791
      %794 = vxpose.xlu0.b32.start [1/16] %v645, 128
      %795 = vxpose.xlu0.b32.cont [2/16] %v650, 128
      %796 = vxpose.xlu0.b32.cont [3/16] 0.0, 128
      %797 = vxpose.xlu0.b32.cont [4/16] 0.0, 128
      %798 = vxpose.xlu0.b32.cont [5/16] 0.0, 128
      %799 = vxpose.xlu0.b32.cont [6/16] 0.0, 128
      %800 = vxpose.xlu0.b32.cont [7/16] 0.0, 128
      %801 = vxpose.xlu0.b32.cont [8/16] 0.0, 128
      %802 = vxpose.xlu0.b32.cont [9/16] 0.0, 128
      %803 = vxpose.xlu0.b32.cont [10/16] 0.0, 128
      %804 = vxpose.xlu0.b32.cont [11/16] 0.0, 128
      %805 = vxpose.xlu0.b32.cont [12/16] 0.0, 128
      %806 = vxpose.xlu0.b32.cont [13/16] 0.0, 128
      %807 = vxpose.xlu0.b32.cont [14/16] 0.0, 128
      %808 = vxpose.xlu0.b32.cont [15/16] 0.0, 128
      %809 = vxpose.xlu0.b32.end [16/16] 0.0, 128
      %v810 = vpop.trf.xlu0
      %v811 = vpop.trf.xlu0
      %v812 = vpop.trf.xlu0
      %v813 = vpop.trf.xlu0
      %v814 = vpop.trf.xlu0
      %v815 = vpop.trf.xlu0
      %v816 = vpop.trf.xlu0
      %v817 = vpop.trf.xlu0
      %v818 = vpop.trf.xlu0
      %v819 = vpop.trf.xlu0
      %v820 = vpop.trf.xlu0
      %v821 = vpop.trf.xlu0
      %v822 = vpop.trf.xlu0
      %v823 = vpop.trf.xlu0
      %v824 = vpop.trf.xlu0
      %v825 = vpop.trf.xlu0
      %826 = vxpose.xlu0.b32.start [1/16] %v760, 128
      %827 = vxpose.xlu0.b32.cont [2/16] %v762, 128
      %828 = vxpose.xlu0.b32.cont [3/16] 0.0, 128
      %829 = vxpose.xlu0.b32.cont [4/16] 0.0, 128
      %830 = vxpose.xlu0.b32.cont [5/16] 0.0, 128
      %831 = vxpose.xlu0.b32.cont [6/16] 0.0, 128
      %832 = vxpose.xlu0.b32.cont [7/16] 0.0, 128
      %833 = vxpose.xlu0.b32.cont [8/16] 0.0, 128
      %834 = vxpose.xlu0.b32.cont [9/16] 0.0, 128
      %835 = vxpose.xlu0.b32.cont [10/16] 0.0, 128
      %836 = vxpose.xlu0.b32.cont [11/16] 0.0, 128
      %837 = vxpose.xlu0.b32.cont [12/16] 0.0, 128
      %838 = vxpose.xlu0.b32.cont [13/16] 0.0, 128
      %839 = vxpose.xlu0.b32.cont [14/16] 0.0, 128
      %840 = vxpose.xlu0.b32.cont [15/16] 0.0, 128
      %841 = vxpose.xlu0.b32.end [16/16] 0.0, 128
      %v842 = vpop.trf.xlu0
      %v843 = vpop.trf.xlu0
      %v844 = vpop.trf.xlu0
      %v845 = vpop.trf.xlu0
      %v846 = vpop.trf.xlu0
      %v847 = vpop.trf.xlu0
      %v848 = vpop.trf.xlu0
      %v849 = vpop.trf.xlu0
      %v850 = vpop.trf.xlu0
      %v851 = vpop.trf.xlu0
      %v852 = vpop.trf.xlu0
      %v853 = vpop.trf.xlu0
      %v854 = vpop.trf.xlu0
      %v855 = vpop.trf.xlu0
      %v856 = vpop.trf.xlu0
      %v857 = vpop.trf.xlu0
      %858 = vxpose.xlu0.b32.start [1/16] %v766, 128
      %859 = vxpose.xlu0.b32.cont [2/16] %v768, 128
      %860 = vxpose.xlu0.b32.cont [3/16] 0.0, 128
      %861 = vxpose.xlu0.b32.cont [4/16] 0.0, 128
      %862 = vxpose.xlu0.b32.cont [5/16] 0.0, 128
      %863 = vxpose.xlu0.b32.cont [6/16] 0.0, 128
      %864 = vxpose.xlu0.b32.cont [7/16] 0.0, 128
      %865 = vxpose.xlu0.b32.cont [8/16] 0.0, 128
      %866 = vxpose.xlu0.b32.cont [9/16] 0.0, 128
      %867 = vxpose.xlu0.b32.cont [10/16] 0.0, 128
      %868 = vxpose.xlu0.b32.cont [11/16] 0.0, 128
      %869 = vxpose.xlu0.b32.cont [12/16] 0.0, 128
      %870 = vxpose.xlu0.b32.cont [13/16] 0.0, 128
      %871 = vxpose.xlu0.b32.cont [14/16] 0.0, 128
      %872 = vxpose.xlu0.b32.cont [15/16] 0.0, 128
      %873 = vxpose.xlu0.b32.end [16/16] 0.0, 128
      %v874 = vpop.trf.xlu0
      %v875 = vpop.trf.xlu0
      %v876 = vpop.trf.xlu0
      %v877 = vpop.trf.xlu0
      %v878 = vpop.trf.xlu0
      %v879 = vpop.trf.xlu0
      %v880 = vpop.trf.xlu0
      %v881 = vpop.trf.xlu0
      %v882 = vpop.trf.xlu0
      %v883 = vpop.trf.xlu0
      %v884 = vpop.trf.xlu0
      %v885 = vpop.trf.xlu0
      %v886 = vpop.trf.xlu0
      %v887 = vpop.trf.xlu0
      %v888 = vpop.trf.xlu0
      %v889 = vpop.trf.xlu0
      %890 = vxpose.xlu0.b32.start [1/16] %v772, 128
      %891 = vxpose.xlu0.b32.cont [2/16] %v774, 128
      %892 = vxpose.xlu0.b32.cont [3/16] 0.0, 128
      %893 = vxpose.xlu0.b32.cont [4/16] 0.0, 128
      %894 = vxpose.xlu0.b32.cont [5/16] 0.0, 128
      %895 = vxpose.xlu0.b32.cont [6/16] 0.0, 128
      %896 = vxpose.xlu0.b32.cont [7/16] 0.0, 128
      %897 = vxpose.xlu0.b32.cont [8/16] 0.0, 128
      %898 = vxpose.xlu0.b32.cont [9/16] 0.0, 128
      %899 = vxpose.xlu0.b32.cont [10/16] 0.0, 128
      %900 = vxpose.xlu0.b32.cont [11/16] 0.0, 128
      %901 = vxpose.xlu0.b32.cont [12/16] 0.0, 128
      %902 = vxpose.xlu0.b32.cont [13/16] 0.0, 128
      %903 = vxpose.xlu0.b32.cont [14/16] 0.0, 128
      %904 = vxpose.xlu0.b32.cont [15/16] 0.0, 128
      %905 = vxpose.xlu0.b32.end [16/16] 0.0, 128
      %v906 = vpop.trf.xlu0
      %v907 = vpop.trf.xlu0
      %v908 = vpop.trf.xlu0
      %v909 = vpop.trf.xlu0
      %v910 = vpop.trf.xlu0
      %v911 = vpop.trf.xlu0
      %v912 = vpop.trf.xlu0
      %v913 = vpop.trf.xlu0
      %v914 = vpop.trf.xlu0
      %v915 = vpop.trf.xlu0
      %v916 = vpop.trf.xlu0
      %v917 = vpop.trf.xlu0
      %v918 = vpop.trf.xlu0
      %v919 = vpop.trf.xlu0
      %v920 = vpop.trf.xlu0
      %v921 = vpop.trf.xlu0
      %vm922 = vcmask 64512
      %v923 = vsel %vm922, %v551, 0
      %v925 = vsel %vm922, %v556, 0
      %927 = vmatprep.subr.mxu0 0.0
      %928 = vmatpush1.msra.mxu0 0.0
      %929 = vmatprep.subr.mxu0 0.0
      %930 = vmatpush1.msra.mxu0 0.0
      %931 = vmatprep.subr.mxu0 0.0
      %932 = vmatpush1.msra.mxu0 0.0
      %933 = vmatprep.subr.mxu0 0.0
      %934 = vmatpush1.msra.mxu0 0.0
      %935 = vmatprep.subr.mxu0 0.0
      %936 = vmatpush1.msra.mxu0 0.0
      %937 = vmatprep.subr.mxu0 0.0
      %938 = vmatpush1.msra.mxu0 0.0
      %939 = vmatprep.subr.mxu0 0.0
      %940 = vmatpush1.msra.mxu0 0.0
      %941 = vmatprep.subr.mxu0 0.0
      %942 = vmatpush1.msra.mxu0 0.0
      %943 = vmatprep.subr.mxu0 0.0
      %944 = vmatpush1.msra.mxu0 0.0
      %945 = vmatprep.subr.mxu0 0.0
      %946 = vmatpush1.msra.mxu0 0.0
      %947 = vmatprep.subr.mxu0 0.0
      %948 = vmatpush1.msra.mxu0 0.0
      %949 = vmatprep.subr.mxu0 0.0
      %950 = vmatpush1.msra.mxu0 0.0
      %951 = vmatprep.subr.mxu0 0.0
      %952 = vmatpush1.msra.mxu0 0.0
      %953 = vmatprep.subr.mxu0 0.0
      %954 = vmatpush1.msra.mxu0 0.0
      %955 = vmatprep.subr.mxu0 0.0
      %956 = vmatpush1.msra.mxu0 0.0
      %957 = vmatprep.subr.mxu0 0.0
      %958 = vmatpush1.msra.mxu0 %v810
      %959 = vmatprep.subr.mxu0 0.0
      %960 = vmatpush2.msra.mxu0 0.0
      %961 = vmatprep.subr.mxu0 0.0
      %962 = vmatpush2.msra.mxu0 0.0
      %963 = vmatprep.subr.mxu0 0.0
      %964 = vmatpush2.msra.mxu0 0.0
      %965 = vmatprep.subr.mxu0 0.0
      %966 = vmatpush2.msra.mxu0 0.0
      %967 = vmatprep.subr.mxu0 0.0
      %968 = vmatpush2.msra.mxu0 0.0
      %969 = vmatprep.subr.mxu0 0.0
      %970 = vmatpush2.msra.mxu0 0.0
      %971 = vmatprep.subr.mxu0 0.0
      %972 = vmatpush2.msra.mxu0 0.0
      %973 = vmatprep.subr.mxu0 0.0
      %974 = vmatpush2.msra.mxu0 0.0
      %975 = vmatprep.subr.mxu0 0.0
      %976 = vmatpush2.msra.mxu0 0.0
      %977 = vmatprep.subr.mxu0 0.0
      %978 = vmatpush2.msra.mxu0 0.0
      %979 = vmatprep.subr.mxu0 0.0
      %980 = vmatpush2.msra.mxu0 0.0
      %981 = vmatprep.subr.mxu0 0.0
      %982 = vmatpush2.msra.mxu0 0.0
      %983 = vmatprep.subr.mxu0 0.0
      %984 = vmatpush2.msra.mxu0 0.0
      %985 = vmatprep.subr.mxu0 0.0
      %986 = vmatpush2.msra.mxu0 0.0
      %987 = vmatprep.subr.mxu0 0.0
      %988 = vmatpush2.msra.mxu0 0.0
      %989 = vmatprep.subr.mxu0 0.0
      %990 = vmatpush2.msra.mxu0 0.0
      %991 = vmatprep.mubr.f32.mxu0 0.0
      %992 = vmatmul.mubr.f32.gmra.mxu0 %v923
      %v993 = vpop.f32.mrf.mxu0
      %v994 = vadd.f32 0.0, %v993
      %v995 = vpop.f32.mrf.mxu0
      %996 = vmatprep.mubr.f32.mxu0 0.0
      %997 = vmatmul.mubr.f32.gmra.mxu0 %v925
      %v998 = vpop.f32.mrf.mxu0
      %v999 = vadd.f32 0.0, %v998
      %v1000 = vpop.f32.mrf.mxu0
      %1001 = vdwg.mxu0
      %v1002 = vsel %vm922, %v746, 0
      %v1004 = vsel %vm922, %v748, 0
      %1006 = vmatprep.subr.mxu0 0.0
      %1007 = vmatpush1.msra.mxu0 0.0
      %1008 = vmatprep.subr.mxu0 0.0
      %1009 = vmatpush1.msra.mxu0 0.0
      %1010 = vmatprep.subr.mxu0 0.0
      %1011 = vmatpush1.msra.mxu0 0.0
      %1012 = vmatprep.subr.mxu0 0.0
      %1013 = vmatpush1.msra.mxu0 0.0
      %1014 = vmatprep.subr.mxu0 0.0
      %1015 = vmatpush1.msra.mxu0 0.0
      %1016 = vmatprep.subr.mxu0 0.0
      %1017 = vmatpush1.msra.mxu0 0.0
      %1018 = vmatprep.subr.mxu0 0.0
      %1019 = vmatpush1.msra.mxu0 0.0
      %1020 = vmatprep.subr.mxu0 0.0
      %1021 = vmatpush1.msra.mxu0 0.0
      %1022 = vmatprep.subr.mxu0 0.0
      %1023 = vmatpush1.msra.mxu0 0.0
      %1024 = vmatprep.subr.mxu0 0.0
      %1025 = vmatpush1.msra.mxu0 0.0
      %1026 = vmatprep.subr.mxu0 0.0
      %1027 = vmatpush1.msra.mxu0 0.0
      %1028 = vmatprep.subr.mxu0 0.0
      %1029 = vmatpush1.msra.mxu0 0.0
      %1030 = vmatprep.subr.mxu0 0.0
      %1031 = vmatpush1.msra.mxu0 0.0
      %1032 = vmatprep.subr.mxu0 0.0
      %1033 = vmatpush1.msra.mxu0 0.0
      %1034 = vmatprep.subr.mxu0 0.0
      %1035 = vmatpush1.msra.mxu0 0.0
      %1036 = vmatprep.subr.mxu0 0.0
      %1037 = vmatpush1.msra.mxu0 %v842
      %1038 = vmatprep.subr.mxu0 0.0
      %1039 = vmatpush2.msra.mxu0 0.0
      %1040 = vmatprep.subr.mxu0 0.0
      %1041 = vmatpush2.msra.mxu0 0.0
      %1042 = vmatprep.subr.mxu0 0.0
      %1043 = vmatpush2.msra.mxu0 0.0
      %1044 = vmatprep.subr.mxu0 0.0
      %1045 = vmatpush2.msra.mxu0 0.0
      %1046 = vmatprep.subr.mxu0 0.0
      %1047 = vmatpush2.msra.mxu0 0.0
      %1048 = vmatprep.subr.mxu0 0.0
      %1049 = vmatpush2.msra.mxu0 0.0
      %1050 = vmatprep.subr.mxu0 0.0
      %1051 = vmatpush2.msra.mxu0 0.0
      %1052 = vmatprep.subr.mxu0 0.0
      %1053 = vmatpush2.msra.mxu0 0.0
      %1054 = vmatprep.subr.mxu0 0.0
      %1055 = vmatpush2.msra.mxu0 0.0
      %1056 = vmatprep.subr.mxu0 0.0
      %1057 = vmatpush2.msra.mxu0 0.0
      %1058 = vmatprep.subr.mxu0 0.0
      %1059 = vmatpush2.msra.mxu0 0.0
      %1060 = vmatprep.subr.mxu0 0.0
      %1061 = vmatpush2.msra.mxu0 0.0
      %1062 = vmatprep.subr.mxu0 0.0
      %1063 = vmatpush2.msra.mxu0 0.0
      %1064 = vmatprep.subr.mxu0 0.0
      %1065 = vmatpush2.msra.mxu0 0.0
      %1066 = vmatprep.subr.mxu0 0.0
      %1067 = vmatpush2.msra.mxu0 0.0
      %1068 = vmatprep.subr.mxu0 0.0
      %1069 = vmatpush2.msra.mxu0 0.0
      %1070 = vmatprep.mubr.f32.mxu0 0.0
      %1071 = vmatmul.mubr.f32.gmra.mxu0 %v1002
      %v1072 = vpop.f32.mrf.mxu0
      %v1073 = vadd.f32 0.0, %v1072
      %v1074 = vpop.f32.mrf.mxu0
      %1075 = vmatprep.mubr.f32.mxu0 0.0
      %1076 = vmatmul.mubr.f32.gmra.mxu0 %v1004
      %v1077 = vpop.f32.mrf.mxu0
      %v1078 = vadd.f32 0.0, %v1077
      %v1079 = vpop.f32.mrf.mxu0
      %1080 = vdwg.mxu0
      %v1081 = vsel %vm922, %v750, 0
      %v1083 = vsel %vm922, %v752, 0
      %1085 = vmatprep.subr.mxu0 0.0
      %1086 = vmatpush1.msra.mxu0 0.0
      %1087 = vmatprep.subr.mxu0 0.0
      %1088 = vmatpush1.msra.mxu0 0.0
      %1089 = vmatprep.subr.mxu0 0.0
      %1090 = vmatpush1.msra.mxu0 0.0
      %1091 = vmatprep.subr.mxu0 0.0
      %1092 = vmatpush1.msra.mxu0 0.0
      %1093 = vmatprep.subr.mxu0 0.0
      %1094 = vmatpush1.msra.mxu0 0.0
      %1095 = vmatprep.subr.mxu0 0.0
      %1096 = vmatpush1.msra.mxu0 0.0
      %1097 = vmatprep.subr.mxu0 0.0
      %1098 = vmatpush1.msra.mxu0 0.0
      %1099 = vmatprep.subr.mxu0 0.0
      %1100 = vmatpush1.msra.mxu0 0.0
      %1101 = vmatprep.subr.mxu0 0.0
      %1102 = vmatpush1.msra.mxu0 0.0
      %1103 = vmatprep.subr.mxu0 0.0
      %1104 = vmatpush1.msra.mxu0 0.0
      %1105 = vmatprep.subr.mxu0 0.0
      %1106 = vmatpush1.msra.mxu0 0.0
      %1107 = vmatprep.subr.mxu0 0.0
      %1108 = vmatpush1.msra.mxu0 0.0
      %1109 = vmatprep.subr.mxu0 0.0
      %1110 = vmatpush1.msra.mxu0 0.0
      %1111 = vmatprep.subr.mxu0 0.0
      %1112 = vmatpush1.msra.mxu0 0.0
      %1113 = vmatprep.subr.mxu0 0.0
      %1114 = vmatpush1.msra.mxu0 0.0
      %1115 = vmatprep.subr.mxu0 0.0
      %1116 = vmatpush1.msra.mxu0 %v874
      %1117 = vmatprep.subr.mxu0 0.0
      %1118 = vmatpush2.msra.mxu0 0.0
      %1119 = vmatprep.subr.mxu0 0.0
      %1120 = vmatpush2.msra.mxu0 0.0
      %1121 = vmatprep.subr.mxu0 0.0
      %1122 = vmatpush2.msra.mxu0 0.0
      %1123 = vmatprep.subr.mxu0 0.0
      %1124 = vmatpush2.msra.mxu0 0.0
      %1125 = vmatprep.subr.mxu0 0.0
      %1126 = vmatpush2.msra.mxu0 0.0
      %1127 = vmatprep.subr.mxu0 0.0
      %1128 = vmatpush2.msra.mxu0 0.0
      %1129 = vmatprep.subr.mxu0 0.0
      %1130 = vmatpush2.msra.mxu0 0.0
      %1131 = vmatprep.subr.mxu0 0.0
      %1132 = vmatpush2.msra.mxu0 0.0
      %1133 = vmatprep.subr.mxu0 0.0
      %1134 = vmatpush2.msra.mxu0 0.0
      %1135 = vmatprep.subr.mxu0 0.0
      %1136 = vmatpush2.msra.mxu0 0.0
      %1137 = vmatprep.subr.mxu0 0.0
      %1138 = vmatpush2.msra.mxu0 0.0
      %1139 = vmatprep.subr.mxu0 0.0
      %1140 = vmatpush2.msra.mxu0 0.0
      %1141 = vmatprep.subr.mxu0 0.0
      %1142 = vmatpush2.msra.mxu0 0.0
      %1143 = vmatprep.subr.mxu0 0.0
      %1144 = vmatpush2.msra.mxu0 0.0
      %1145 = vmatprep.subr.mxu0 0.0
      %1146 = vmatpush2.msra.mxu0 0.0
      %1147 = vmatprep.subr.mxu0 0.0
      %1148 = vmatpush2.msra.mxu0 0.0
      %1149 = vmatprep.mubr.f32.mxu0 0.0
      %1150 = vmatmul.mubr.f32.gmra.mxu0 %v1081
      %v1151 = vpop.f32.mrf.mxu0
      %v1152 = vadd.f32 0.0, %v1151
      %v1153 = vpop.f32.mrf.mxu0
      %1154 = vmatprep.mubr.f32.mxu0 0.0
      %1155 = vmatmul.mubr.f32.gmra.mxu0 %v1083
      %v1156 = vpop.f32.mrf.mxu0
      %v1157 = vadd.f32 0.0, %v1156
      %v1158 = vpop.f32.mrf.mxu0
      %1159 = vdwg.mxu0
      %v1160 = vsel %vm922, %v754, 0
      %v1162 = vsel %vm922, %v756, 0
      %1164 = vmatprep.subr.mxu0 0.0
      %1165 = vmatpush1.msra.mxu0 0.0
      %1166 = vmatprep.subr.mxu0 0.0
      %1167 = vmatpush1.msra.mxu0 0.0
      %1168 = vmatprep.subr.mxu0 0.0
      %1169 = vmatpush1.msra.mxu0 0.0
      %1170 = vmatprep.subr.mxu0 0.0
      %1171 = vmatpush1.msra.mxu0 0.0
      %1172 = vmatprep.subr.mxu0 0.0
      %1173 = vmatpush1.msra.mxu0 0.0
      %1174 = vmatprep.subr.mxu0 0.0
      %1175 = vmatpush1.msra.mxu0 0.0
      %1176 = vmatprep.subr.mxu0 0.0
      %1177 = vmatpush1.msra.mxu0 0.0
      %1178 = vmatprep.subr.mxu0 0.0
      %1179 = vmatpush1.msra.mxu0 0.0
      %1180 = vmatprep.subr.mxu0 0.0
      %1181 = vmatpush1.msra.mxu0 0.0
      %1182 = vmatprep.subr.mxu0 0.0
      %1183 = vmatpush1.msra.mxu0 0.0
      %1184 = vmatprep.subr.mxu0 0.0
      %1185 = vmatpush1.msra.mxu0 0.0
      %1186 = vmatprep.subr.mxu0 0.0
      %1187 = vmatpush1.msra.mxu0 0.0
      %1188 = vmatprep.subr.mxu0 0.0
      %1189 = vmatpush1.msra.mxu0 0.0
      %1190 = vmatprep.subr.mxu0 0.0
      %1191 = vmatpush1.msra.mxu0 0.0
      %1192 = vmatprep.subr.mxu0 0.0
      %1193 = vmatpush1.msra.mxu0 0.0
      %1194 = vmatprep.subr.mxu0 0.0
      %1195 = vmatpush1.msra.mxu0 %v906
      %1196 = vmatprep.subr.mxu0 0.0
      %1197 = vmatpush2.msra.mxu0 0.0
      %1198 = vmatprep.subr.mxu0 0.0
      %1199 = vmatpush2.msra.mxu0 0.0
      %1200 = vmatprep.subr.mxu0 0.0
      %1201 = vmatpush2.msra.mxu0 0.0
      %1202 = vmatprep.subr.mxu0 0.0
      %1203 = vmatpush2.msra.mxu0 0.0
      %1204 = vmatprep.subr.mxu0 0.0
      %1205 = vmatpush2.msra.mxu0 0.0
      %1206 = vmatprep.subr.mxu0 0.0
      %1207 = vmatpush2.msra.mxu0 0.0
      %1208 = vmatprep.subr.mxu0 0.0
      %1209 = vmatpush2.msra.mxu0 0.0
      %1210 = vmatprep.subr.mxu0 0.0
      %1211 = vmatpush2.msra.mxu0 0.0
      %1212 = vmatprep.subr.mxu0 0.0
      %1213 = vmatpush2.msra.mxu0 0.0
      %1214 = vmatprep.subr.mxu0 0.0
      %1215 = vmatpush2.msra.mxu0 0.0
      %1216 = vmatprep.subr.mxu0 0.0
      %1217 = vmatpush2.msra.mxu0 0.0
      %1218 = vmatprep.subr.mxu0 0.0
      %1219 = vmatpush2.msra.mxu0 0.0
      %1220 = vmatprep.subr.mxu0 0.0
      %1221 = vmatpush2.msra.mxu0 0.0
      %1222 = vmatprep.subr.mxu0 0.0
      %1223 = vmatpush2.msra.mxu0 0.0
      %1224 = vmatprep.subr.mxu0 0.0
      %1225 = vmatpush2.msra.mxu0 0.0
      %1226 = vmatprep.subr.mxu0 0.0
      %1227 = vmatpush2.msra.mxu0 0.0
      %1228 = vmatprep.mubr.f32.mxu0 0.0
      %1229 = vmatmul.mubr.f32.gmra.mxu0 %v1160
      %v1230 = vpop.f32.mrf.mxu0
      %v1231 = vadd.f32 0.0, %v1230
      %v1232 = vpop.f32.mrf.mxu0
      %1233 = vmatprep.mubr.f32.mxu0 0.0
      %1234 = vmatmul.mubr.f32.gmra.mxu0 %v1162
      %v1235 = vpop.f32.mrf.mxu0
      %v1236 = vadd.f32 0.0, %v1235
      %v1237 = vpop.f32.mrf.mxu0
      %1238 = vdwg.mxu0
      %v1239 = vmul.f32 %v994, 0.35355338
      %v1240 = vmul.f32 %v999, 0.35355338
      %v1241 = vmul.f32 %v1073, 0.35355338
      %v1242 = vmul.f32 %v1078, 0.35355338
      %v1243 = vmul.f32 %v1152, 0.35355338
      %v1244 = vmul.f32 %v1157, 0.35355338
      %v1245 = vmul.f32 %v1231, 0.35355338
      %v1246 = vmul.f32 %v1236, 0.35355338
      %vm1247 = vcmask 80896
      %v1248 = vsel %vm1247, %v1239, -inf
      %1249 = vmax.xlane.f32.xlu0 %v1248
      %v1250 = vpop.xlane.xlu0 %1249
      %vm1251 = vcmask 74752
      %v1252 = vsel %vm1251, %v1240, -inf
      %1253 = vmax.xlane.f32.xlu0 %v1252
      %v1254 = vpop.xlane.xlu0 %1253
      %v1255 = vsel %vm1247, %v1241, -inf
      %1256 = vmax.xlane.f32.xlu0 %v1255
      %v1257 = vpop.xlane.xlu0 %1256
      %v1258 = vsel %vm1251, %v1242, -inf
      %1259 = vmax.xlane.f32.xlu0 %v1258
      %v1260 = vpop.xlane.xlu0 %1259
      %v1261 = vsel %vm1247, %v1243, -inf
      %1262 = vmax.xlane.f32.xlu0 %v1261
      %v1263 = vpop.xlane.xlu0 %1262
      %v1264 = vsel %vm1251, %v1244, -inf
      %1265 = vmax.xlane.f32.xlu0 %v1264
      %v1266 = vpop.xlane.xlu0 %1265
      %v1267 = vsel %vm1247, %v1245, -inf
      %1268 = vmax.xlane.f32.xlu0 %v1267
      %v1269 = vpop.xlane.xlu0 %1268
      %v1270 = vsel %vm1251, %v1246, -inf
      %1271 = vmax.xlane.f32.xlu0 %v1270
      %v1272 = vpop.xlane.xlu0 %1271
      %v1273 = vsub.f32 %v1239, %v1250
      %v1274 = vsub.f32 %v1240, %v1254
      %v1275 = vsub.f32 %v1241, %v1257
      %v1276 = vsub.f32 %v1242, %v1260
      %v1277 = vsub.f32 %v1243, %v1263
      %v1278 = vsub.f32 %v1244, %v1266
      %v1279 = vsub.f32 %v1245, %v1269
      %v1280 = vsub.f32 %v1246, %v1272
      %v1281 = vmul.f32 %v1273, 1.442695
      %v1282 = vpow.pop %v1281
      %v1283 = vmul.f32 %v1274, 1.442695
      %v1284 = vpow.pop %v1283
      %v1285 = vmul.f32 %v1275, 1.442695
      %v1286 = vpow.pop %v1285
      %v1287 = vmul.f32 %v1276, 1.442695
      %v1288 = vpow.pop %v1287
      %v1289 = vmul.f32 %v1277, 1.442695
      %v1290 = vpow.pop %v1289
      %v1291 = vmul.f32 %v1278, 1.442695
      %v1292 = vpow.pop %v1291
      %v1293 = vmul.f32 %v1279, 1.442695
      %v1294 = vpow.pop %v1293
      %v1295 = vmul.f32 %v1280, 1.442695
      %v1296 = vpow.pop %v1295
      %v1297 = vsel %vm1247, %v1282, 0.0
      %1298 = vadd.xlane.f32.xlu0 %v1297
      %v1299 = vpop.xlane.xlu0 %1298
      %v1300 = vsel %vm1251, %v1284, 0.0
      %1301 = vadd.xlane.f32.xlu0 %v1300
      %v1302 = vpop.xlane.xlu0 %1301
      %v1303 = vsel %vm1247, %v1286, 0.0
      %1304 = vadd.xlane.f32.xlu0 %v1303
      %v1305 = vpop.xlane.xlu0 %1304
      %v1306 = vsel %vm1251, %v1288, 0.0
      %1307 = vadd.xlane.f32.xlu0 %v1306
      %v1308 = vpop.xlane.xlu0 %1307
      %v1309 = vsel %vm1247, %v1290, 0.0
      %1310 = vadd.xlane.f32.xlu0 %v1309
      %v1311 = vpop.xlane.xlu0 %1310
      %v1312 = vsel %vm1251, %v1292, 0.0
      %1313 = vadd.xlane.f32.xlu0 %v1312
      %v1314 = vpop.xlane.xlu0 %1313
      %v1315 = vsel %vm1247, %v1294, 0.0
      %1316 = vadd.xlane.f32.xlu0 %v1315
      %v1317 = vpop.xlane.xlu0 %1316
      %v1318 = vsel %vm1251, %v1296, 0.0
      %1319 = vadd.xlane.f32.xlu0 %v1318
      %v1320 = vpop.xlane.xlu0 %1319
      %v1321 = vrcp.pop %v1299
      %v1322 = vrcp.pop %v1302
      %v1323 = vrcp.pop %v1305
      %v1324 = vrcp.pop %v1308
      %v1325 = vrcp.pop %v1311
      %v1326 = vrcp.pop %v1314
      %v1327 = vrcp.pop %v1317
      %v1328 = vrcp.pop %v1320
      %v1329 = vmul.f32 %v1282, %v1321
      %v1330 = vmul.f32 %v1284, %v1322
      %v1331 = vmul.f32 %v1286, %v1323
      %v1332 = vmul.f32 %v1288, %v1324
      %v1333 = vmul.f32 %v1290, %v1325
      %v1334 = vmul.f32 %v1292, %v1326
      %v1335 = vmul.f32 %v1294, %v1327
      %v1336 = vmul.f32 %v1296, %v1328
      %v1338 = vsel %vm1247, %v1329, 0
      %v1341 = vsel %vm1247, %v1330, 0
      %vm1343 = vcmask 1041408
      %v1344 = vsel %vm1343, %v740, 0
      %1346 = vmatprep.subr.mxu0 0.0
      %1347 = vmatpush1.msra.mxu0 0.0
      %1348 = vmatprep.subr.mxu0 0.0
      %1349 = vmatpush1.msra.mxu0 0.0
      %1350 = vmatprep.subr.mxu0 0.0
      %1351 = vmatpush1.msra.mxu0 0.0
      %1352 = vmatprep.subr.mxu0 0.0
      %1353 = vmatpush1.msra.mxu0 0.0
      %1354 = vmatprep.subr.mxu0 0.0
      %1355 = vmatpush1.msra.mxu0 0.0
      %1356 = vmatprep.subr.mxu0 0.0
      %1357 = vmatpush1.msra.mxu0 0.0
      %1358 = vmatprep.subr.mxu0 0.0
      %1359 = vmatpush1.msra.mxu0 0.0
      %1360 = vmatprep.subr.mxu0 0.0
      %1361 = vmatpush1.msra.mxu0 0.0
      %1362 = vmatprep.subr.mxu0 0.0
      %1363 = vmatpush1.msra.mxu0 0.0
      %1364 = vmatprep.subr.mxu0 0.0
      %1365 = vmatpush1.msra.mxu0 0.0
      %1366 = vmatprep.subr.mxu0 0.0
      %1367 = vmatpush1.msra.mxu0 0.0
      %1368 = vmatprep.subr.mxu0 0.0
      %1369 = vmatpush1.msra.mxu0 0.0
      %1370 = vmatprep.subr.mxu0 0.0
      %1371 = vmatpush1.msra.mxu0 0.0
      %1372 = vmatprep.subr.mxu0 0.0
      %1373 = vmatpush1.msra.mxu0 0.0
      %1374 = vmatprep.subr.mxu0 0.0
      %1375 = vmatpush1.msra.mxu0 %v1344
      %1376 = vmatprep.subr.mxu0 0.0
      %1377 = vmatpush1.msra.mxu0 %v735
      %1378 = vmatprep.subr.mxu0 0.0
      %1379 = vmatpush2.msra.mxu0 0.0
      %1380 = vmatprep.subr.mxu0 0.0
      %1381 = vmatpush2.msra.mxu0 0.0
      %1382 = vmatprep.subr.mxu0 0.0
      %1383 = vmatpush2.msra.mxu0 0.0
      %1384 = vmatprep.subr.mxu0 0.0
      %1385 = vmatpush2.msra.mxu0 0.0
      %1386 = vmatprep.subr.mxu0 0.0
      %1387 = vmatpush2.msra.mxu0 0.0
      %1388 = vmatprep.subr.mxu0 0.0
      %1389 = vmatpush2.msra.mxu0 0.0
      %1390 = vmatprep.subr.mxu0 0.0
      %1391 = vmatpush2.msra.mxu0 0.0
      %1392 = vmatprep.subr.mxu0 0.0
      %1393 = vmatpush2.msra.mxu0 0.0
      %1394 = vmatprep.subr.mxu0 0.0
      %1395 = vmatpush2.msra.mxu0 0.0
      %1396 = vmatprep.subr.mxu0 0.0
      %1397 = vmatpush2.msra.mxu0 0.0
      %1398 = vmatprep.subr.mxu0 0.0
      %1399 = vmatpush2.msra.mxu0 0.0
      %1400 = vmatprep.subr.mxu0 0.0
      %1401 = vmatpush2.msra.mxu0 0.0
      %1402 = vmatprep.subr.mxu0 0.0
      %1403 = vmatpush2.msra.mxu0 0.0
      %1404 = vmatprep.subr.mxu0 0.0
      %1405 = vmatpush2.msra.mxu0 0.0
      %1406 = vmatprep.subr.mxu0 0.0
      %1407 = vmatpush2.msra.mxu0 0.0
      %1408 = vmatprep.subr.mxu0 0.0
      %1409 = vmatpush2.msra.mxu0 0.0
      %1410 = vmatprep.mubr.f32.mxu0 0.0
      %1411 = vmatmul.mubr.f32.gmra.mxu0 %v1338
      %v1412 = vpop.f32.mrf.mxu0
      %v1413 = vadd.f32 0.0, %v1412
      %v1414 = vpop.f32.mrf.mxu0
      %1415 = vmatprep.mubr.f32.mxu0 0.0
      %1416 = vmatmul.mubr.f32.gmra.mxu0 %v1341
      %v1417 = vpop.f32.mrf.mxu0
      %v1418 = vadd.f32 0.0, %v1417
      %v1419 = vpop.f32.mrf.mxu0
      %1420 = vdwg.mxu0
      %v1422 = vsel %vm1247, %v1331, 0
      %v1425 = vsel %vm1247, %v1332, 0
      %v1427 = vsel %vm1343, %v782, 0
      %1429 = vmatprep.subr.mxu0 0.0
      %1430 = vmatpush1.msra.mxu0 0.0
      %1431 = vmatprep.subr.mxu0 0.0
      %1432 = vmatpush1.msra.mxu0 0.0
      %1433 = vmatprep.subr.mxu0 0.0
      %1434 = vmatpush1.msra.mxu0 0.0
      %1435 = vmatprep.subr.mxu0 0.0
      %1436 = vmatpush1.msra.mxu0 0.0
      %1437 = vmatprep.subr.mxu0 0.0
      %1438 = vmatpush1.msra.mxu0 0.0
      %1439 = vmatprep.subr.mxu0 0.0
      %1440 = vmatpush1.msra.mxu0 0.0
      %1441 = vmatprep.subr.mxu0 0.0
      %1442 = vmatpush1.msra.mxu0 0.0
      %1443 = vmatprep.subr.mxu0 0.0
      %1444 = vmatpush1.msra.mxu0 0.0
      %1445 = vmatprep.subr.mxu0 0.0
      %1446 = vmatpush1.msra.mxu0 0.0
      %1447 = vmatprep.subr.mxu0 0.0
      %1448 = vmatpush1.msra.mxu0 0.0
      %1449 = vmatprep.subr.mxu0 0.0
      %1450 = vmatpush1.msra.mxu0 0.0
      %1451 = vmatprep.subr.mxu0 0.0
      %1452 = vmatpush1.msra.mxu0 0.0
      %1453 = vmatprep.subr.mxu0 0.0
      %1454 = vmatpush1.msra.mxu0 0.0
      %1455 = vmatprep.subr.mxu0 0.0
      %1456 = vmatpush1.msra.mxu0 0.0
      %1457 = vmatprep.subr.mxu0 0.0
      %1458 = vmatpush1.msra.mxu0 %v1427
      %1459 = vmatprep.subr.mxu0 0.0
      %1460 = vmatpush1.msra.mxu0 %v780
      %1461 = vmatprep.subr.mxu0 0.0
      %1462 = vmatpush2.msra.mxu0 0.0
      %1463 = vmatprep.subr.mxu0 0.0
      %1464 = vmatpush2.msra.mxu0 0.0
      %1465 = vmatprep.subr.mxu0 0.0
      %1466 = vmatpush2.msra.mxu0 0.0
      %1467 = vmatprep.subr.mxu0 0.0
      %1468 = vmatpush2.msra.mxu0 0.0
      %1469 = vmatprep.subr.mxu0 0.0
      %1470 = vmatpush2.msra.mxu0 0.0
      %1471 = vmatprep.subr.mxu0 0.0
      %1472 = vmatpush2.msra.mxu0 0.0
      %1473 = vmatprep.subr.mxu0 0.0
      %1474 = vmatpush2.msra.mxu0 0.0
      %1475 = vmatprep.subr.mxu0 0.0
      %1476 = vmatpush2.msra.mxu0 0.0
      %1477 = vmatprep.subr.mxu0 0.0
      %1478 = vmatpush2.msra.mxu0 0.0
      %1479 = vmatprep.subr.mxu0 0.0
      %1480 = vmatpush2.msra.mxu0 0.0
      %1481 = vmatprep.subr.mxu0 0.0
      %1482 = vmatpush2.msra.mxu0 0.0
      %1483 = vmatprep.subr.mxu0 0.0
      %1484 = vmatpush2.msra.mxu0 0.0
      %1485 = vmatprep.subr.mxu0 0.0
      %1486 = vmatpush2.msra.mxu0 0.0
      %1487 = vmatprep.subr.mxu0 0.0
      %1488 = vmatpush2.msra.mxu0 0.0
      %1489 = vmatprep.subr.mxu0 0.0
      %1490 = vmatpush2.msra.mxu0 0.0
      %1491 = vmatprep.subr.mxu0 0.0
      %1492 = vmatpush2.msra.mxu0 0.0
      %1493 = vmatprep.mubr.f32.mxu0 0.0
      %1494 = vmatmul.mubr.f32.gmra.mxu0 %v1422
      %v1495 = vpop.f32.mrf.mxu0
      %v1496 = vadd.f32 0.0, %v1495
      %v1497 = vpop.f32.mrf.mxu0
      %1498 = vmatprep.mubr.f32.mxu0 0.0
      %1499 = vmatmul.mubr.f32.gmra.mxu0 %v1425
      %v1500 = vpop.f32.mrf.mxu0
      %v1501 = vadd.f32 0.0, %v1500
      %v1502 = vpop.f32.mrf.mxu0
      %1503 = vdwg.mxu0
      %v1505 = vsel %vm1247, %v1333, 0
      %v1508 = vsel %vm1247, %v1334, 0
      %v1510 = vsel %vm1343, %v787, 0
      %1512 = vmatprep.subr.mxu0 0.0
      %1513 = vmatpush1.msra.mxu0 0.0
      %1514 = vmatprep.subr.mxu0 0.0
      %1515 = vmatpush1.msra.mxu0 0.0
      %1516 = vmatprep.subr.mxu0 0.0
      %1517 = vmatpush1.msra.mxu0 0.0
      %1518 = vmatprep.subr.mxu0 0.0
      %1519 = vmatpush1.msra.mxu0 0.0
      %1520 = vmatprep.subr.mxu0 0.0
      %1521 = vmatpush1.msra.mxu0 0.0
      %1522 = vmatprep.subr.mxu0 0.0
      %1523 = vmatpush1.msra.mxu0 0.0
      %1524 = vmatprep.subr.mxu0 0.0
      %1525 = vmatpush1.msra.mxu0 0.0
      %1526 = vmatprep.subr.mxu0 0.0
      %1527 = vmatpush1.msra.mxu0 0.0
      %1528 = vmatprep.subr.mxu0 0.0
      %1529 = vmatpush1.msra.mxu0 0.0
      %1530 = vmatprep.subr.mxu0 0.0
      %1531 = vmatpush1.msra.mxu0 0.0
      %1532 = vmatprep.subr.mxu0 0.0
      %1533 = vmatpush1.msra.mxu0 0.0
      %1534 = vmatprep.subr.mxu0 0.0
      %1535 = vmatpush1.msra.mxu0 0.0
      %1536 = vmatprep.subr.mxu0 0.0
      %1537 = vmatpush1.msra.mxu0 0.0
      %1538 = vmatprep.subr.mxu0 0.0
      %1539 = vmatpush1.msra.mxu0 0.0
      %1540 = vmatprep.subr.mxu0 0.0
      %1541 = vmatpush1.msra.mxu0 %v1510
      %1542 = vmatprep.subr.mxu0 0.0
      %1543 = vmatpush1.msra.mxu0 %v785
      %1544 = vmatprep.subr.mxu0 0.0
      %1545 = vmatpush2.msra.mxu0 0.0
      %1546 = vmatprep.subr.mxu0 0.0
      %1547 = vmatpush2.msra.mxu0 0.0
      %1548 = vmatprep.subr.mxu0 0.0
      %1549 = vmatpush2.msra.mxu0 0.0
      %1550 = vmatprep.subr.mxu0 0.0
      %1551 = vmatpush2.msra.mxu0 0.0
      %1552 = vmatprep.subr.mxu0 0.0
      %1553 = vmatpush2.msra.mxu0 0.0
      %1554 = vmatprep.subr.mxu0 0.0
      %1555 = vmatpush2.msra.mxu0 0.0
      %1556 = vmatprep.subr.mxu0 0.0
      %1557 = vmatpush2.msra.mxu0 0.0
      %1558 = vmatprep.subr.mxu0 0.0
      %1559 = vmatpush2.msra.mxu0 0.0
      %1560 = vmatprep.subr.mxu0 0.0
      %1561 = vmatpush2.msra.mxu0 0.0
      %1562 = vmatprep.subr.mxu0 0.0
      %1563 = vmatpush2.msra.mxu0 0.0
      %1564 = vmatprep.subr.mxu0 0.0
      %1565 = vmatpush2.msra.mxu0 0.0
      %1566 = vmatprep.subr.mxu0 0.0
      %1567 = vmatpush2.msra.mxu0 0.0
      %1568 = vmatprep.subr.mxu0 0.0
      %1569 = vmatpush2.msra.mxu0 0.0
      %1570 = vmatprep.subr.mxu0 0.0
      %1571 = vmatpush2.msra.mxu0 0.0
      %1572 = vmatprep.subr.mxu0 0.0
      %1573 = vmatpush2.msra.mxu0 0.0
      %1574 = vmatprep.subr.mxu0 0.0
      %1575 = vmatpush2.msra.mxu0 0.0
      %1576 = vmatprep.mubr.f32.mxu0 0.0
      %1577 = vmatmul.mubr.f32.gmra.mxu0 %v1505
      %v1578 = vpop.f32.mrf.mxu0
      %v1579 = vadd.f32 0.0, %v1578
      %v1580 = vpop.f32.mrf.mxu0
      %1581 = vmatprep.mubr.f32.mxu0 0.0
      %1582 = vmatmul.mubr.f32.gmra.mxu0 %v1508
      %v1583 = vpop.f32.mrf.mxu0
      %v1584 = vadd.f32 0.0, %v1583
      %v1585 = vpop.f32.mrf.mxu0
      %1586 = vdwg.mxu0
      %v1588 = vsel %vm1247, %v1335, 0
      %v1591 = vsel %vm1247, %v1336, 0
      %v1593 = vsel %vm1343, %v792, 0
      %1595 = vmatprep.subr.mxu0 0.0
      %1596 = vmatpush1.msra.mxu0 0.0
      %1597 = vmatprep.subr.mxu0 0.0
      %1598 = vmatpush1.msra.mxu0 0.0
      %1599 = vmatprep.subr.mxu0 0.0
      %1600 = vmatpush1.msra.mxu0 0.0
      %1601 = vmatprep.subr.mxu0 0.0
      %1602 = vmatpush1.msra.mxu0 0.0
      %1603 = vmatprep.subr.mxu0 0.0
      %1604 = vmatpush1.msra.mxu0 0.0
      %1605 = vmatprep.subr.mxu0 0.0
      %1606 = vmatpush1.msra.mxu0 0.0
      %1607 = vmatprep.subr.mxu0 0.0
      %1608 = vmatpush1.msra.mxu0 0.0
      %1609 = vmatprep.subr.mxu0 0.0
      %1610 = vmatpush1.msra.mxu0 0.0
      %1611 = vmatprep.subr.mxu0 0.0
      %1612 = vmatpush1.msra.mxu0 0.0
      %1613 = vmatprep.subr.mxu0 0.0
      %1614 = vmatpush1.msra.mxu0 0.0
      %1615 = vmatprep.subr.mxu0 0.0
      %1616 = vmatpush1.msra.mxu0 0.0
      %1617 = vmatprep.subr.mxu0 0.0
      %1618 = vmatpush1.msra.mxu0 0.0
      %1619 = vmatprep.subr.mxu0 0.0
      %1620 = vmatpush1.msra.mxu0 0.0
      %1621 = vmatprep.subr.mxu0 0.0
      %1622 = vmatpush1.msra.mxu0 0.0
      %1623 = vmatprep.subr.mxu0 0.0
      %1624 = vmatpush1.msra.mxu0 %v1593
      %1625 = vmatprep.subr.mxu0 0.0
      %1626 = vmatpush1.msra.mxu0 %v790
      %1627 = vmatprep.subr.mxu0 0.0
      %1628 = vmatpush2.msra.mxu0 0.0
      %1629 = vmatprep.subr.mxu0 0.0
      %1630 = vmatpush2.msra.mxu0 0.0
      %1631 = vmatprep.subr.mxu0 0.0
      %1632 = vmatpush2.msra.mxu0 0.0
      %1633 = vmatprep.subr.mxu0 0.0
      %1634 = vmatpush2.msra.mxu0 0.0
      %1635 = vmatprep.subr.mxu0 0.0
      %1636 = vmatpush2.msra.mxu0 0.0
      %1637 = vmatprep.subr.mxu0 0.0
      %1638 = vmatpush2.msra.mxu0 0.0
      %1639 = vmatprep.subr.mxu0 0.0
      %1640 = vmatpush2.msra.mxu0 0.0
      %1641 = vmatprep.subr.mxu0 0.0
      %1642 = vmatpush2.msra.mxu0 0.0
      %1643 = vmatprep.subr.mxu0 0.0
      %1644 = vmatpush2.msra.mxu0 0.0
      %1645 = vmatprep.subr.mxu0 0.0
      %1646 = vmatpush2.msra.mxu0 0.0
      %1647 = vmatprep.subr.mxu0 0.0
      %1648 = vmatpush2.msra.mxu0 0.0
      %1649 = vmatprep.subr.mxu0 0.0
      %1650 = vmatpush2.msra.mxu0 0.0
      %1651 = vmatprep.subr.mxu0 0.0
      %1652 = vmatpush2.msra.mxu0 0.0
      %1653 = vmatprep.subr.mxu0 0.0
      %1654 = vmatpush2.msra.mxu0 0.0
      %1655 = vmatprep.subr.mxu0 0.0
      %1656 = vmatpush2.msra.mxu0 0.0
      %1657 = vmatprep.subr.mxu0 0.0
      %1658 = vmatpush2.msra.mxu0 0.0
      %1659 = vmatprep.mubr.f32.mxu0 0.0
      %1660 = vmatmul.mubr.f32.gmra.mxu0 %v1588
      %v1661 = vpop.f32.mrf.mxu0
      %v1662 = vadd.f32 0.0, %v1661
      %v1663 = vpop.f32.mrf.mxu0
      %1664 = vmatprep.mubr.f32.mxu0 0.0
      %1665 = vmatmul.mubr.f32.gmra.mxu0 %v1591
      %v1666 = vpop.f32.mrf.mxu0
      %v1667 = vadd.f32 0.0, %v1666
      %v1668 = vpop.f32.mrf.mxu0
      %1669 = vdwg.mxu0
      %1670 = vrot.lane.b32.xlu0 %v466, 32
      %v1671 = vpop.permute.xlu0 %1670
      %v1674 = vsel %vm922, %v1413, 0
      %v1677 = vsel %vm922, %v1418, 0
      %1679 = vmatprep.subr.mxu0 0.0
      %1680 = vmatpush1.msra.mxu0 0.0
      %1681 = vmatprep.subr.mxu0 0.0
      %1682 = vmatpush1.msra.mxu0 0.0
      %1683 = vmatprep.subr.mxu0 0.0
      %1684 = vmatpush1.msra.mxu0 0.0
      %1685 = vmatprep.subr.mxu0 0.0
      %1686 = vmatpush1.msra.mxu0 0.0
      %1687 = vmatprep.subr.mxu0 0.0
      %1688 = vmatpush1.msra.mxu0 0.0
      %1689 = vmatprep.subr.mxu0 0.0
      %1690 = vmatpush1.msra.mxu0 0.0
      %1691 = vmatprep.subr.mxu0 0.0
      %1692 = vmatpush1.msra.mxu0 0.0
      %1693 = vmatprep.subr.mxu0 0.0
      %1694 = vmatpush1.msra.mxu0 0.0
      %1695 = vmatprep.subr.mxu0 0.0
      %1696 = vmatpush1.msra.mxu0 0.0
      %1697 = vmatprep.subr.mxu0 0.0
      %1698 = vmatpush1.msra.mxu0 0.0
      %1699 = vmatprep.subr.mxu0 0.0
      %1700 = vmatpush1.msra.mxu0 0.0
      %1701 = vmatprep.subr.mxu0 0.0
      %1702 = vmatpush1.msra.mxu0 0.0
      %1703 = vmatprep.subr.mxu0 0.0
      %1704 = vmatpush1.msra.mxu0 0.0
      %1705 = vmatprep.subr.mxu0 0.0
      %1706 = vmatpush1.msra.mxu0 0.0
      %1707 = vmatprep.subr.mxu0 0.0
      %1708 = vmatpush1.msra.mxu0 0.0
      %1709 = vmatprep.subr.mxu0 0.0
      %1710 = vmatpush1.msra.mxu0 %v1671
      %1711 = vmatprep.subr.mxu0 0.0
      %1712 = vmatpush2.msra.mxu0 0.0
      %1713 = vmatprep.subr.mxu0 0.0
      %1714 = vmatpush2.msra.mxu0 0.0
      %1715 = vmatprep.subr.mxu0 0.0
      %1716 = vmatpush2.msra.mxu0 0.0
      %1717 = vmatprep.subr.mxu0 0.0
      %1718 = vmatpush2.msra.mxu0 0.0
      %1719 = vmatprep.subr.mxu0 0.0
      %1720 = vmatpush2.msra.mxu0 0.0
      %1721 = vmatprep.subr.mxu0 0.0
      %1722 = vmatpush2.msra.mxu0 0.0
      %1723 = vmatprep.subr.mxu0 0.0
      %1724 = vmatpush2.msra.mxu0 0.0
      %1725 = vmatprep.subr.mxu0 0.0
      %1726 = vmatpush2.msra.mxu0 0.0
      %1727 = vmatprep.subr.mxu0 0.0
      %1728 = vmatpush2.msra.mxu0 0.0
      %1729 = vmatprep.subr.mxu0 0.0
      %1730 = vmatpush2.msra.mxu0 0.0
      %1731 = vmatprep.subr.mxu0 0.0
      %1732 = vmatpush2.msra.mxu0 0.0
      %1733 = vmatprep.subr.mxu0 0.0
      %1734 = vmatpush2.msra.mxu0 0.0
      %1735 = vmatprep.subr.mxu0 0.0
      %1736 = vmatpush2.msra.mxu0 0.0
      %1737 = vmatprep.subr.mxu0 0.0
      %1738 = vmatpush2.msra.mxu0 0.0
      %1739 = vmatprep.subr.mxu0 0.0
      %1740 = vmatpush2.msra.mxu0 0.0
      %1741 = vmatprep.subr.mxu0 0.0
      %1742 = vmatpush2.msra.mxu0 0.0
      %1743 = vmatprep.mubr.f32.mxu0 0.0
      %1744 = vmatmul.mubr.f32.gmra.mxu0 %v1674
      %v1745 = vpop.f32.mrf.mxu0
      %v1746 = vadd.f32 0.0, %v1745
      %v1747 = vpop.f32.mrf.mxu0
      %1748 = vmatprep.mubr.f32.mxu0 0.0
      %1749 = vmatmul.mubr.f32.gmra.mxu0 %v1677
      %v1750 = vpop.f32.mrf.mxu0
      %v1751 = vadd.f32 0.0, %v1750
      %v1752 = vpop.f32.mrf.mxu0
      %1753 = vdwg.mxu0
      %1754 = vrot.lane.b32.xlu0 %v467, 32
      %v1755 = vpop.permute.xlu0 %1754
      %v1758 = vsel %vm922, %v1496, 0
      %v1761 = vsel %vm922, %v1501, 0
      %1763 = vmatprep.subr.mxu0 0.0
      %1764 = vmatpush1.msra.mxu0 0.0
      %1765 = vmatprep.subr.mxu0 0.0
      %1766 = vmatpush1.msra.mxu0 0.0
      %1767 = vmatprep.subr.mxu0 0.0
      %1768 = vmatpush1.msra.mxu0 0.0
      %1769 = vmatprep.subr.mxu0 0.0
      %1770 = vmatpush1.msra.mxu0 0.0
      %1771 = vmatprep.subr.mxu0 0.0
      %1772 = vmatpush1.msra.mxu0 0.0
      %1773 = vmatprep.subr.mxu0 0.0
      %1774 = vmatpush1.msra.mxu0 0.0
      %1775 = vmatprep.subr.mxu0 0.0
      %1776 = vmatpush1.msra.mxu0 0.0
      %1777 = vmatprep.subr.mxu0 0.0
      %1778 = vmatpush1.msra.mxu0 0.0
      %1779 = vmatprep.subr.mxu0 0.0
      %1780 = vmatpush1.msra.mxu0 0.0
      %1781 = vmatprep.subr.mxu0 0.0
      %1782 = vmatpush1.msra.mxu0 0.0
      %1783 = vmatprep.subr.mxu0 0.0
      %1784 = vmatpush1.msra.mxu0 0.0
      %1785 = vmatprep.subr.mxu0 0.0
      %1786 = vmatpush1.msra.mxu0 0.0
      %1787 = vmatprep.subr.mxu0 0.0
      %1788 = vmatpush1.msra.mxu0 0.0
      %1789 = vmatprep.subr.mxu0 0.0
      %1790 = vmatpush1.msra.mxu0 0.0
      %1791 = vmatprep.subr.mxu0 0.0
      %1792 = vmatpush1.msra.mxu0 0.0
      %1793 = vmatprep.subr.mxu0 0.0
      %1794 = vmatpush1.msra.mxu0 %v1755
      %1795 = vmatprep.subr.mxu0 0.0
      %1796 = vmatpush2.msra.mxu0 0.0
      %1797 = vmatprep.subr.mxu0 0.0
      %1798 = vmatpush2.msra.mxu0 0.0
      %1799 = vmatprep.subr.mxu0 0.0
      %1800 = vmatpush2.msra.mxu0 0.0
      %1801 = vmatprep.subr.mxu0 0.0
      %1802 = vmatpush2.msra.mxu0 0.0
      %1803 = vmatprep.subr.mxu0 0.0
      %1804 = vmatpush2.msra.mxu0 0.0
      %1805 = vmatprep.subr.mxu0 0.0
      %1806 = vmatpush2.msra.mxu0 0.0
      %1807 = vmatprep.subr.mxu0 0.0
      %1808 = vmatpush2.msra.mxu0 0.0
      %1809 = vmatprep.subr.mxu0 0.0
      %1810 = vmatpush2.msra.mxu0 0.0
      %1811 = vmatprep.subr.mxu0 0.0
      %1812 = vmatpush2.msra.mxu0 0.0
      %1813 = vmatprep.subr.mxu0 0.0
      %1814 = vmatpush2.msra.mxu0 0.0
      %1815 = vmatprep.subr.mxu0 0.0
      %1816 = vmatpush2.msra.mxu0 0.0
      %1817 = vmatprep.subr.mxu0 0.0
      %1818 = vmatpush2.msra.mxu0 0.0
      %1819 = vmatprep.subr.mxu0 0.0
      %1820 = vmatpush2.msra.mxu0 0.0
      %1821 = vmatprep.subr.mxu0 0.0
      %1822 = vmatpush2.msra.mxu0 0.0
      %1823 = vmatprep.subr.mxu0 0.0
      %1824 = vmatpush2.msra.mxu0 0.0
      %1825 = vmatprep.subr.mxu0 0.0
      %1826 = vmatpush2.msra.mxu0 0.0
      %1827 = vmatprep.mubr.f32.mxu0 0.0
      %1828 = vmatmul.mubr.f32.gmra.mxu0 %v1758
      %v1829 = vpop.f32.mrf.mxu0
      %v1830 = vadd.f32 0.0, %v1829
      %v1831 = vpop.f32.mrf.mxu0
      %1832 = vmatprep.mubr.f32.mxu0 0.0
      %1833 = vmatmul.mubr.f32.gmra.mxu0 %v1761
      %v1834 = vpop.f32.mrf.mxu0
      %v1835 = vadd.f32 0.0, %v1834
      %v1836 = vpop.f32.mrf.mxu0
      %1837 = vdwg.mxu0
      %1838 = vrot.lane.b32.xlu0 %v468, 32
      %v1839 = vpop.permute.xlu0 %1838
      %v1842 = vsel %vm922, %v1579, 0
      %v1845 = vsel %vm922, %v1584, 0
      %1847 = vmatprep.subr.mxu0 0.0
      %1848 = vmatpush1.msra.mxu0 0.0
      %1849 = vmatprep.subr.mxu0 0.0
      %1850 = vmatpush1.msra.mxu0 0.0
      %1851 = vmatprep.subr.mxu0 0.0
      %1852 = vmatpush1.msra.mxu0 0.0
      %1853 = vmatprep.subr.mxu0 0.0
      %1854 = vmatpush1.msra.mxu0 0.0
      %1855 = vmatprep.subr.mxu0 0.0
      %1856 = vmatpush1.msra.mxu0 0.0
      %1857 = vmatprep.subr.mxu0 0.0
      %1858 = vmatpush1.msra.mxu0 0.0
      %1859 = vmatprep.subr.mxu0 0.0
      %1860 = vmatpush1.msra.mxu0 0.0
      %1861 = vmatprep.subr.mxu0 0.0
      %1862 = vmatpush1.msra.mxu0 0.0
      %1863 = vmatprep.subr.mxu0 0.0
      %1864 = vmatpush1.msra.mxu0 0.0
      %1865 = vmatprep.subr.mxu0 0.0
      %1866 = vmatpush1.msra.mxu0 0.0
      %1867 = vmatprep.subr.mxu0 0.0
      %1868 = vmatpush1.msra.mxu0 0.0
      %1869 = vmatprep.subr.mxu0 0.0
      %1870 = vmatpush1.msra.mxu0 0.0
      %1871 = vmatprep.subr.mxu0 0.0
      %1872 = vmatpush1.msra.mxu0 0.0
      %1873 = vmatprep.subr.mxu0 0.0
      %1874 = vmatpush1.msra.mxu0 0.0
      %1875 = vmatprep.subr.mxu0 0.0
      %1876 = vmatpush1.msra.mxu0 0.0
      %1877 = vmatprep.subr.mxu0 0.0
      %1878 = vmatpush1.msra.mxu0 %v1839
      %1879 = vmatprep.subr.mxu0 0.0
      %1880 = vmatpush2.msra.mxu0 0.0
      %1881 = vmatprep.subr.mxu0 0.0
      %1882 = vmatpush2.msra.mxu0 0.0
      %1883 = vmatprep.subr.mxu0 0.0
      %1884 = vmatpush2.msra.mxu0 0.0
      %1885 = vmatprep.subr.mxu0 0.0
      %1886 = vmatpush2.msra.mxu0 0.0
      %1887 = vmatprep.subr.mxu0 0.0
      %1888 = vmatpush2.msra.mxu0 0.0
      %1889 = vmatprep.subr.mxu0 0.0
      %1890 = vmatpush2.msra.mxu0 0.0
      %1891 = vmatprep.subr.mxu0 0.0
      %1892 = vmatpush2.msra.mxu0 0.0
      %1893 = vmatprep.subr.mxu0 0.0
      %1894 = vmatpush2.msra.mxu0 0.0
      %1895 = vmatprep.subr.mxu0 0.0
      %1896 = vmatpush2.msra.mxu0 0.0
      %1897 = vmatprep.subr.mxu0 0.0
      %1898 = vmatpush2.msra.mxu0 0.0
      %1899 = vmatprep.subr.mxu0 0.0
      %1900 = vmatpush2.msra.mxu0 0.0
      %1901 = vmatprep.subr.mxu0 0.0
      %1902 = vmatpush2.msra.mxu0 0.0
      %1903 = vmatprep.subr.mxu0 0.0
      %1904 = vmatpush2.msra.mxu0 0.0
      %1905 = vmatprep.subr.mxu0 0.0
      %1906 = vmatpush2.msra.mxu0 0.0
      %1907 = vmatprep.subr.mxu0 0.0
      %1908 = vmatpush2.msra.mxu0 0.0
      %1909 = vmatprep.subr.mxu0 0.0
      %1910 = vmatpush2.msra.mxu0 0.0
      %1911 = vmatprep.mubr.f32.mxu0 0.0
      %1912 = vmatmul.mubr.f32.gmra.mxu0 %v1842
      %v1913 = vpop.f32.mrf.mxu0
      %v1914 = vadd.f32 0.0, %v1913
      %v1915 = vpop.f32.mrf.mxu0
      %1916 = vmatprep.mubr.f32.mxu0 0.0
      %1917 = vmatmul.mubr.f32.gmra.mxu0 %v1845
      %v1918 = vpop.f32.mrf.mxu0
      %v1919 = vadd.f32 0.0, %v1918
      %v1920 = vpop.f32.mrf.mxu0
      %1921 = vdwg.mxu0
      %1922 = vrot.lane.b32.xlu0 %v469, 32
      %v1923 = vpop.permute.xlu0 %1922
      %v1926 = vsel %vm922, %v1662, 0
      %v1929 = vsel %vm922, %v1667, 0
      %1931 = vmatprep.subr.mxu0 0.0
      %1932 = vmatpush1.msra.mxu0 0.0
      %1933 = vmatprep.subr.mxu0 0.0
      %1934 = vmatpush1.msra.mxu0 0.0
      %1935 = vmatprep.subr.mxu0 0.0
      %1936 = vmatpush1.msra.mxu0 0.0
      %1937 = vmatprep.subr.mxu0 0.0
      %1938 = vmatpush1.msra.mxu0 0.0
      %1939 = vmatprep.subr.mxu0 0.0
      %1940 = vmatpush1.msra.mxu0 0.0
      %1941 = vmatprep.subr.mxu0 0.0
      %1942 = vmatpush1.msra.mxu0 0.0
      %1943 = vmatprep.subr.mxu0 0.0
      %1944 = vmatpush1.msra.mxu0 0.0
      %1945 = vmatprep.subr.mxu0 0.0
      %1946 = vmatpush1.msra.mxu0 0.0
      %1947 = vmatprep.subr.mxu0 0.0
      %1948 = vmatpush1.msra.mxu0 0.0
      %1949 = vmatprep.subr.mxu0 0.0
      %1950 = vmatpush1.msra.mxu0 0.0
      %1951 = vmatprep.subr.mxu0 0.0
      %1952 = vmatpush1.msra.mxu0 0.0
      %1953 = vmatprep.subr.mxu0 0.0
      %1954 = vmatpush1.msra.mxu0 0.0
      %1955 = vmatprep.subr.mxu0 0.0
      %1956 = vmatpush1.msra.mxu0 0.0
      %1957 = vmatprep.subr.mxu0 0.0
      %1958 = vmatpush1.msra.mxu0 0.0
      %1959 = vmatprep.subr.mxu0 0.0
      %1960 = vmatpush1.msra.mxu0 0.0
      %1961 = vmatprep.subr.mxu0 0.0
      %1962 = vmatpush1.msra.mxu0 %v1923
      %1963 = vmatprep.subr.mxu0 0.0
      %1964 = vmatpush2.msra.mxu0 0.0
      %1965 = vmatprep.subr.mxu0 0.0
      %1966 = vmatpush2.msra.mxu0 0.0
      %1967 = vmatprep.subr.mxu0 0.0
      %1968 = vmatpush2.msra.mxu0 0.0
      %1969 = vmatprep.subr.mxu0 0.0
      %1970 = vmatpush2.msra.mxu0 0.0
      %1971 = vmatprep.subr.mxu0 0.0
      %1972 = vmatpush2.msra.mxu0 0.0
      %1973 = vmatprep.subr.mxu0 0.0
      %1974 = vmatpush2.msra.mxu0 0.0
      %1975 = vmatprep.subr.mxu0 0.0
      %1976 = vmatpush2.msra.mxu0 0.0
      %1977 = vmatprep.subr.mxu0 0.0
      %1978 = vmatpush2.msra.mxu0 0.0
      %1979 = vmatprep.subr.mxu0 0.0
      %1980 = vmatpush2.msra.mxu0 0.0
      %1981 = vmatprep.subr.mxu0 0.0
      %1982 = vmatpush2.msra.mxu0 0.0
      %1983 = vmatprep.subr.mxu0 0.0
      %1984 = vmatpush2.msra.mxu0 0.0
      %1985 = vmatprep.subr.mxu0 0.0
      %1986 = vmatpush2.msra.mxu0 0.0
      %1987 = vmatprep.subr.mxu0 0.0
      %1988 = vmatpush2.msra.mxu0 0.0
      %1989 = vmatprep.subr.mxu0 0.0
      %1990 = vmatpush2.msra.mxu0 0.0
      %1991 = vmatprep.subr.mxu0 0.0
      %1992 = vmatpush2.msra.mxu0 0.0
      %1993 = vmatprep.subr.mxu0 0.0
      %1994 = vmatpush2.msra.mxu0 0.0
      %1995 = vmatprep.mubr.f32.mxu0 0.0
      %1996 = vmatmul.mubr.f32.gmra.mxu0 %v1926
      %v1997 = vpop.f32.mrf.mxu0
      %v1998 = vadd.f32 0.0, %v1997
      %v1999 = vpop.f32.mrf.mxu0
      %2000 = vmatprep.mubr.f32.mxu0 0.0
      %2001 = vmatmul.mubr.f32.gmra.mxu0 %v1929
      %v2002 = vpop.f32.mrf.mxu0
      %v2003 = vadd.f32 0.0, %v2002
      %v2004 = vpop.f32.mrf.mxu0
      %2005 = vdwg.mxu0
      %v2006 = vsel %vm477, %v1746, 0.0
      %v2007 = vsel %vm477, %v1830, 0.0
      %v2008 = vadd.f32 %v2006, %v2007
      %v2009 = vsel %vm477, %v1914, 0.0
      %v2010 = vadd.f32 %v2008, %v2009
      %v2011 = vsel %vm477, %v1998, 0.0
      %v2012 = vadd.f32 %v2010, %v2011
      %vm2013 = vcmask 254976
      %v2014 = vsel %vm2013, %v1751, 0.0
      %v2015 = vsel %vm2013, %v1835, 0.0
      %v2016 = vadd.f32 %v2014, %v2015
      %v2017 = vsel %vm2013, %v1919, 0.0
      %v2018 = vadd.f32 %v2016, %v2017
      %v2019 = vsel %vm2013, %v2003, 0.0
      %v2020 = vadd.f32 %v2018, %v2019
      %2021 = vrot.lane.b32.xlu0 %v475, 32
      %v2022 = vpop.permute.xlu0 %2021
      %v2024 = vadd.f32 %v2012, %v2022
      %v2025 = vadd.f32 %v2020, %v2022
      %v2026 = vadd.f32 %v461, %v2024
      %v2027 = vadd.f32 %v462, %v2025
      %v2028 = vsel %vm477, %v2026, 0.0
      %2029 = vadd.xlane.f32.xlu0 %v2028
      %v2030 = vpop.xlane.xlu0 %2029
      %v2031 = vsel %vm2013, %v2027, 0.0
      %2032 = vadd.xlane.f32.xlu0 %v2031
      %v2033 = vpop.xlane.xlu0 %2032
      %v2034 = vrcp.pop 32.0
      %v2035 = vmul.f32 %v2030, %v2034
      %v2036 = vmul.f32 %v2033, %v2034
      %v2037 = vmul.f32 %v2026, %v2026
      %v2038 = vmul.f32 %v2027, %v2027
      %v2039 = vsel %vm477, %v2037, 0.0
      %2040 = vadd.xlane.f32.xlu0 %v2039
      %v2041 = vpop.xlane.xlu0 %2040
      %v2042 = vsel %vm2013, %v2038, 0.0
      %2043 = vadd.xlane.f32.xlu0 %v2042
      %v2044 = vpop.xlane.xlu0 %2043
      %v2045 = vmul.f32 %v2041, %v2034
      %v2046 = vmul.f32 %v2044, %v2034
      %v2047 = vmul.f32 %v2035, %v2035
      %v2048 = vmul.f32 %v2036, %v2036
      %v2049 = vsub.f32 %v2045, %v2047
      %v2050 = vsub.f32 %v2046, %v2048
      %v2051 = vadd.f32 %v2049, 1e-05
      %v2052 = vadd.f32 %v2050, 1e-05
      %v2053 = vrsqrt.pop %v2051
      %v2054 = vrsqrt.pop %v2052
      %v2055 = vsub.f32 %v2026, %v2035
      %v2056 = vsub.f32 %v2027, %v2036
      %v2057 = vmul.f32 %v2055, %v2053
      %v2058 = vmul.f32 %v2056, %v2054
      %v2059 = vlaneseq
      %v2060 = vshrl.u32 %v2059, 7
      %v2061 = vsub.s32 0, %v2060
      %v2062 = vrot.slane %v465, %v2061
      %v2063 = vmul.f32 %v2057, %v2062
      %v2064 = vmul.f32 %v2058, %v2062
      %v2065 = vlaneseq
      %v2066 = vshrl.u32 %v2065, 7
      %v2067 = vsub.s32 1, %v2066
      %v2068 = vrot.slane %v465, %v2067
      %v2069 = vadd.f32 %v2063, %v2068
      %v2070 = vadd.f32 %v2064, %v2068
      %v2071 = vld [vmem:[%s4] sm:$0xff]
      %v2072 = vld [vmem:[%s4 + $0x8] sm:$0xff]
      %v2073 = vld [vmem:[%s4 + $0x10] sm:$0xff]
      %v2074 = vld [vmem:[%s4 + $0x18] sm:$0xff]
      %v2075 = vld [vmem:[%s5] sm:$0x1]
      %v2077 = vlaneseq
      %v2078 = vshrl.u32 %v2077, 7
      %v2079 = vsub.s32 0, %v2078
      %v2080 = vrot.slane %v2075, %v2079
      %v2083 = vsel %vm477, %v2069, 0
      %v2086 = vsel %vm477, %v2070, 0
      %2088 = vmatprep.subr.mxu0 0.0
      %2089 = vmatpush1.msra.mxu0 0.0
      %2090 = vmatprep.subr.mxu0 0.0
      %2091 = vmatpush1.msra.mxu0 0.0
      %2092 = vmatprep.subr.mxu0 0.0
      %2093 = vmatpush1.msra.mxu0 0.0
      %2094 = vmatprep.subr.mxu0 0.0
      %2095 = vmatpush1.msra.mxu0 0.0
      %2096 = vmatprep.subr.mxu0 0.0
      %2097 = vmatpush1.msra.mxu0 0.0
      %2098 = vmatprep.subr.mxu0 0.0
      %2099 = vmatpush1.msra.mxu0 0.0
      %2100 = vmatprep.subr.mxu0 0.0
      %2101 = vmatpush1.msra.mxu0 0.0
      %2102 = vmatprep.subr.mxu0 0.0
      %2103 = vmatpush1.msra.mxu0 0.0
      %2104 = vmatprep.subr.mxu0 0.0
      %2105 = vmatpush1.msra.mxu0 0.0
      %2106 = vmatprep.subr.mxu0 0.0
      %2107 = vmatpush1.msra.mxu0 0.0
      %2108 = vmatprep.subr.mxu0 0.0
      %2109 = vmatpush1.msra.mxu0 0.0
      %2110 = vmatprep.subr.mxu0 0.0
      %2111 = vmatpush1.msra.mxu0 0.0
      %2112 = vmatprep.subr.mxu0 0.0
      %2113 = vmatpush1.msra.mxu0 %v2074
      %2114 = vmatprep.subr.mxu0 0.0
      %2115 = vmatpush1.msra.mxu0 %v2073
      %2116 = vmatprep.subr.mxu0 0.0
      %2117 = vmatpush1.msra.mxu0 %v2072
      %2118 = vmatprep.subr.mxu0 0.0
      %2119 = vmatpush1.msra.mxu0 %v2071
      %2120 = vmatprep.subr.mxu0 0.0
      %2121 = vmatpush2.msra.mxu0 0.0
      %2122 = vmatprep.subr.mxu0 0.0
      %2123 = vmatpush2.msra.mxu0 0.0
      %2124 = vmatprep.subr.mxu0 0.0
      %2125 = vmatpush2.msra.mxu0 0.0
      %2126 = vmatprep.subr.mxu0 0.0
      %2127 = vmatpush2.msra.mxu0 0.0
      %2128 = vmatprep.subr.mxu0 0.0
      %2129 = vmatpush2.msra.mxu0 0.0
      %2130 = vmatprep.subr.mxu0 0.0
      %2131 = vmatpush2.msra.mxu0 0.0
      %2132 = vmatprep.subr.mxu0 0.0
      %2133 = vmatpush2.msra.mxu0 0.0
      %2134 = vmatprep.subr.mxu0 0.0
      %2135 = vmatpush2.msra.mxu0 0.0
      %2136 = vmatprep.subr.mxu0 0.0
      %2137 = vmatpush2.msra.mxu0 0.0
      %2138 = vmatprep.subr.mxu0 0.0
      %2139 = vmatpush2.msra.mxu0 0.0
      %2140 = vmatprep.subr.mxu0 0.0
      %2141 = vmatpush2.msra.mxu0 0.0
      %2142 = vmatprep.subr.mxu0 0.0
      %2143 = vmatpush2.msra.mxu0 0.0
      %2144 = vmatprep.subr.mxu0 0.0
      %2145 = vmatpush2.msra.mxu0 0.0
      %2146 = vmatprep.subr.mxu0 0.0
      %2147 = vmatpush2.msra.mxu0 0.0
      %2148 = vmatprep.subr.mxu0 0.0
      %2149 = vmatpush2.msra.mxu0 0.0
      %2150 = vmatprep.subr.mxu0 0.0
      %2151 = vmatpush2.msra.mxu0 0.0
      %2152 = vmatprep.mubr.f32.mxu0 0.0
      %2153 = vmatmul.mubr.f32.gmra.mxu0 %v2083
      %v2154 = vpop.f32.mrf.mxu0
      %v2155 = vadd.f32 %v2080, %v2154
      %v2156 = vpop.f32.mrf.mxu0
      %2157 = vmatprep.mubr.f32.mxu0 0.0
      %2158 = vmatmul.mubr.f32.gmra.mxu0 %v2086
      %v2159 = vpop.f32.mrf.mxu0
      %v2160 = vadd.f32 %v2080, %v2159
      %v2161 = vpop.f32.mrf.mxu0
      %2162 = vdwg.mxu0
      %2167 = vrot.lane.b32.xlu0 %v2071, 96
      %v2168 = vpop.permute.xlu0 %2167
      %2169 = vrot.lane.b32.xlu0 %v2072, 96
      %v2170 = vpop.permute.xlu0 %2169
      %2171 = vrot.lane.b32.xlu0 %v2073, 96
      %v2172 = vpop.permute.xlu0 %2171
      %2173 = vrot.lane.b32.xlu0 %v2074, 96
      %v2174 = vpop.permute.xlu0 %2173
      %2179 = vrot.lane.b32.xlu0 %v2080, 96
      %v2180 = vpop.permute.xlu0 %2179
      %v2183 = vsel %vm477, %v463, 0
      %v2186 = vsel %vm477, %v464, 0
      %2188 = vmatprep.subr.mxu0 0.0
      %2189 = vmatpush1.msra.mxu0 0.0
      %2190 = vmatprep.subr.mxu0 0.0
      %2191 = vmatpush1.msra.mxu0 0.0
      %2192 = vmatprep.subr.mxu0 0.0
      %2193 = vmatpush1.msra.mxu0 0.0
      %2194 = vmatprep.subr.mxu0 0.0
      %2195 = vmatpush1.msra.mxu0 0.0
      %2196 = vmatprep.subr.mxu0 0.0
      %2197 = vmatpush1.msra.mxu0 0.0
      %2198 = vmatprep.subr.mxu0 0.0
      %2199 = vmatpush1.msra.mxu0 0.0
      %2200 = vmatprep.subr.mxu0 0.0
      %2201 = vmatpush1.msra.mxu0 0.0
      %2202 = vmatprep.subr.mxu0 0.0
      %2203 = vmatpush1.msra.mxu0 0.0
      %2204 = vmatprep.subr.mxu0 0.0
      %2205 = vmatpush1.msra.mxu0 0.0
      %2206 = vmatprep.subr.mxu0 0.0
      %2207 = vmatpush1.msra.mxu0 0.0
      %2208 = vmatprep.subr.mxu0 0.0
      %2209 = vmatpush1.msra.mxu0 0.0
      %2210 = vmatprep.subr.mxu0 0.0
      %2211 = vmatpush1.msra.mxu0 0.0
      %2212 = vmatprep.subr.mxu0 0.0
      %2213 = vmatpush1.msra.mxu0 %v2174
      %2214 = vmatprep.subr.mxu0 0.0
      %2215 = vmatpush1.msra.mxu0 %v2172
      %2216 = vmatprep.subr.mxu0 0.0
      %2217 = vmatpush1.msra.mxu0 %v2170
      %2218 = vmatprep.subr.mxu0 0.0
      %2219 = vmatpush1.msra.mxu0 %v2168
      %2220 = vmatprep.subr.mxu0 0.0
      %2221 = vmatpush2.msra.mxu0 0.0
      %2222 = vmatprep.subr.mxu0 0.0
      %2223 = vmatpush2.msra.mxu0 0.0
      %2224 = vmatprep.subr.mxu0 0.0
      %2225 = vmatpush2.msra.mxu0 0.0
      %2226 = vmatprep.subr.mxu0 0.0
      %2227 = vmatpush2.msra.mxu0 0.0
      %2228 = vmatprep.subr.mxu0 0.0
      %2229 = vmatpush2.msra.mxu0 0.0
      %2230 = vmatprep.subr.mxu0 0.0
      %2231 = vmatpush2.msra.mxu0 0.0
      %2232 = vmatprep.subr.mxu0 0.0
      %2233 = vmatpush2.msra.mxu0 0.0
      %2234 = vmatprep.subr.mxu0 0.0
      %2235 = vmatpush2.msra.mxu0 0.0
      %2236 = vmatprep.subr.mxu0 0.0
      %2237 = vmatpush2.msra.mxu0 0.0
      %2238 = vmatprep.subr.mxu0 0.0
      %2239 = vmatpush2.msra.mxu0 0.0
      %2240 = vmatprep.subr.mxu0 0.0
      %2241 = vmatpush2.msra.mxu0 0.0
      %2242 = vmatprep.subr.mxu0 0.0
      %2243 = vmatpush2.msra.mxu0 0.0
      %2244 = vmatprep.subr.mxu0 0.0
      %2245 = vmatpush2.msra.mxu0 0.0
      %2246 = vmatprep.subr.mxu0 0.0
      %2247 = vmatpush2.msra.mxu0 0.0
      %2248 = vmatprep.subr.mxu0 0.0
      %2249 = vmatpush2.msra.mxu0 0.0
      %2250 = vmatprep.subr.mxu0 0.0
      %2251 = vmatpush2.msra.mxu0 0.0
      %2252 = vmatprep.mubr.f32.mxu0 0.0
      %2253 = vmatmul.mubr.f32.gmra.mxu0 %v2183
      %v2254 = vpop.f32.mrf.mxu0
      %v2255 = vadd.f32 %v2180, %v2254
      %v2256 = vpop.f32.mrf.mxu0
      %2257 = vmatprep.mubr.f32.mxu0 0.0
      %2258 = vmatmul.mubr.f32.gmra.mxu0 %v2186
      %v2259 = vpop.f32.mrf.mxu0
      %v2260 = vadd.f32 %v2180, %v2259
      %v2261 = vpop.f32.mrf.mxu0
      %2262 = vdwg.mxu0
      %2263 = vrot.lane.b32.xlu0 %v2071, 64
      %v2264 = vpop.permute.xlu0 %2263
      %2265 = vrot.lane.b32.xlu0 %v2072, 64
      %v2266 = vpop.permute.xlu0 %2265
      %2267 = vrot.lane.b32.xlu0 %v2073, 64
      %v2268 = vpop.permute.xlu0 %2267
      %2269 = vrot.lane.b32.xlu0 %v2074, 64
      %v2270 = vpop.permute.xlu0 %2269
      %2275 = vrot.lane.b32.xlu0 %v2080, 64
      %v2276 = vpop.permute.xlu0 %2275
      %2278 = vmatprep.subr.mxu0 0.0
      %2279 = vmatpush1.msra.mxu0 0.0
      %2280 = vmatprep.subr.mxu0 0.0
      %2281 = vmatpush1.msra.mxu0 0.0
      %2282 = vmatprep.subr.mxu0 0.0
      %2283 = vmatpush1.msra.mxu0 0.0
      %2284 = vmatprep.subr.mxu0 0.0
      %2285 = vmatpush1.msra.mxu0 0.0
      %2286 = vmatprep.subr.mxu0 0.0
      %2287 = vmatpush1.msra.mxu0 0.0
      %2288 = vmatprep.subr.mxu0 0.0
      %2289 = vmatpush1.msra.mxu0 0.0
      %2290 = vmatprep.subr.mxu0 0.0
      %2291 = vmatpush1.msra.mxu0 0.0
      %2292 = vmatprep.subr.mxu0 0.0
      %2293 = vmatpush1.msra.mxu0 0.0
      %2294 = vmatprep.subr.mxu0 0.0
      %2295 = vmatpush1.msra.mxu0 0.0
      %2296 = vmatprep.subr.mxu0 0.0
      %2297 = vmatpush1.msra.mxu0 0.0
      %2298 = vmatprep.subr.mxu0 0.0
      %2299 = vmatpush1.msra.mxu0 0.0
      %2300 = vmatprep.subr.mxu0 0.0
      %2301 = vmatpush1.msra.mxu0 0.0
      %2302 = vmatprep.subr.mxu0 0.0
      %2303 = vmatpush1.msra.mxu0 %v2270
      %2304 = vmatprep.subr.mxu0 0.0
      %2305 = vmatpush1.msra.mxu0 %v2268
      %2306 = vmatprep.subr.mxu0 0.0
      %2307 = vmatpush1.msra.mxu0 %v2266
      %2308 = vmatprep.subr.mxu0 0.0
      %2309 = vmatpush1.msra.mxu0 %v2264
      %2310 = vmatprep.subr.mxu0 0.0
      %2311 = vmatpush2.msra.mxu0 0.0
      %2312 = vmatprep.subr.mxu0 0.0
      %2313 = vmatpush2.msra.mxu0 0.0
      %2314 = vmatprep.subr.mxu0 0.0
      %2315 = vmatpush2.msra.mxu0 0.0
      %2316 = vmatprep.subr.mxu0 0.0
      %2317 = vmatpush2.msra.mxu0 0.0
      %2318 = vmatprep.subr.mxu0 0.0
      %2319 = vmatpush2.msra.mxu0 0.0
      %2320 = vmatprep.subr.mxu0 0.0
      %2321 = vmatpush2.msra.mxu0 0.0
      %2322 = vmatprep.subr.mxu0 0.0
      %2323 = vmatpush2.msra.mxu0 0.0
      %2324 = vmatprep.subr.mxu0 0.0
      %2325 = vmatpush2.msra.mxu0 0.0
      %2326 = vmatprep.subr.mxu0 0.0
      %2327 = vmatpush2.msra.mxu0 0.0
      %2328 = vmatprep.subr.mxu0 0.0
      %2329 = vmatpush2.msra.mxu0 0.0
      %2330 = vmatprep.subr.mxu0 0.0
      %2331 = vmatpush2.msra.mxu0 0.0
      %2332 = vmatprep.subr.mxu0 0.0
      %2333 = vmatpush2.msra.mxu0 0.0
      %2334 = vmatprep.subr.mxu0 0.0
      %2335 = vmatpush2.msra.mxu0 0.0
      %2336 = vmatprep.subr.mxu0 0.0
      %2337 = vmatpush2.msra.mxu0 0.0
      %2338 = vmatprep.subr.mxu0 0.0
      %2339 = vmatpush2.msra.mxu0 0.0
      %2340 = vmatprep.subr.mxu0 0.0
      %2341 = vmatpush2.msra.mxu0 0.0
      %2342 = vmatprep.mubr.f32.mxu0 0.0
      %2343 = vmatmul.mubr.f32.gmra.mxu0 %v2183
      %v2344 = vpop.f32.mrf.mxu0
      %v2345 = vadd.f32 %v2276, %v2344
      %v2346 = vpop.f32.mrf.mxu0
      %2347 = vmatprep.mubr.f32.mxu0 0.0
      %2348 = vmatmul.mubr.f32.gmra.mxu0 %v2186
      %v2349 = vpop.f32.mrf.mxu0
      %v2350 = vadd.f32 %v2276, %v2349
      %v2351 = vpop.f32.mrf.mxu0
      %2352 = vdwg.mxu0
      %2355 = vrot.lane.b32.xlu0 %v2155, 120
      %v2356 = vpop.permute.xlu0 %2355
      %2357 = vrot.lane.b32.xlu0 %v2160, 120
      %v2358 = vpop.permute.xlu0 %2357
      %2359 = vrot.lane.b32.xlu0 %v2155, 112
      %v2360 = vpop.permute.xlu0 %2359
      %2361 = vrot.lane.b32.xlu0 %v2160, 112
      %v2362 = vpop.permute.xlu0 %2361
      %2363 = vrot.lane.b32.xlu0 %v2155, 104
      %v2364 = vpop.permute.xlu0 %2363
      %2365 = vrot.lane.b32.xlu0 %v2160, 104
      %v2366 = vpop.permute.xlu0 %2365
      %2369 = vrot.lane.b32.xlu0 %v2255, 120
      %v2370 = vpop.permute.xlu0 %2369
      %2371 = vrot.lane.b32.xlu0 %v2260, 120
      %v2372 = vpop.permute.xlu0 %2371
      %2375 = vrot.lane.b32.xlu0 %v2255, 112
      %v2376 = vpop.permute.xlu0 %2375
      %2377 = vrot.lane.b32.xlu0 %v2260, 112
      %v2378 = vpop.permute.xlu0 %2377
      %2381 = vrot.lane.b32.xlu0 %v2255, 104
      %v2382 = vpop.permute.xlu0 %2381
      %2383 = vrot.lane.b32.xlu0 %v2260, 104
      %v2384 = vpop.permute.xlu0 %2383
      %2389 = vrot.lane.b32.xlu0 %v2345, 120
      %v2390 = vpop.permute.xlu0 %2389
      %2391 = vrot.lane.b32.xlu0 %v2350, 120
      %v2392 = vpop.permute.xlu0 %2391
      %2394 = vrot.lane.b32.xlu0 %v2345, 112
      %v2395 = vpop.permute.xlu0 %2394
      %2396 = vrot.lane.b32.xlu0 %v2350, 112
      %v2397 = vpop.permute.xlu0 %2396
      %2399 = vrot.lane.b32.xlu0 %v2345, 104
      %v2400 = vpop.permute.xlu0 %2399
      %2401 = vrot.lane.b32.xlu0 %v2350, 104
      %v2402 = vpop.permute.xlu0 %2401
      %2404 = vxpose.xlu0.b32.start [1/16] %v2255, 128
      %2405 = vxpose.xlu0.b32.cont [2/16] %v2260, 128
      %2406 = vxpose.xlu0.b32.cont [3/16] 0.0, 128
      %2407 = vxpose.xlu0.b32.cont [4/16] 0.0, 128
      %2408 = vxpose.xlu0.b32.cont [5/16] 0.0, 128
      %2409 = vxpose.xlu0.b32.cont [6/16] 0.0, 128
      %2410 = vxpose.xlu0.b32.cont [7/16] 0.0, 128
      %2411 = vxpose.xlu0.b32.cont [8/16] 0.0, 128
      %2412 = vxpose.xlu0.b32.cont [9/16] 0.0, 128
      %2413 = vxpose.xlu0.b32.cont [10/16] 0.0, 128
      %2414 = vxpose.xlu0.b32.cont [11/16] 0.0, 128
      %2415 = vxpose.xlu0.b32.cont [12/16] 0.0, 128
      %2416 = vxpose.xlu0.b32.cont [13/16] 0.0, 128
      %2417 = vxpose.xlu0.b32.cont [14/16] 0.0, 128
      %2418 = vxpose.xlu0.b32.cont [15/16] 0.0, 128
      %2419 = vxpose.xlu0.b32.end [16/16] 0.0, 128
      %v2420 = vpop.trf.xlu0
      %v2421 = vpop.trf.xlu0
      %v2422 = vpop.trf.xlu0
      %v2423 = vpop.trf.xlu0
      %v2424 = vpop.trf.xlu0
      %v2425 = vpop.trf.xlu0
      %v2426 = vpop.trf.xlu0
      %v2427 = vpop.trf.xlu0
      %v2428 = vpop.trf.xlu0
      %v2429 = vpop.trf.xlu0
      %v2430 = vpop.trf.xlu0
      %v2431 = vpop.trf.xlu0
      %v2432 = vpop.trf.xlu0
      %v2433 = vpop.trf.xlu0
      %v2434 = vpop.trf.xlu0
      %v2435 = vpop.trf.xlu0
      %2436 = vxpose.xlu0.b32.start [1/16] %v2370, 128
      %2437 = vxpose.xlu0.b32.cont [2/16] %v2372, 128
      %2438 = vxpose.xlu0.b32.cont [3/16] 0.0, 128
      %2439 = vxpose.xlu0.b32.cont [4/16] 0.0, 128
      %2440 = vxpose.xlu0.b32.cont [5/16] 0.0, 128
      %2441 = vxpose.xlu0.b32.cont [6/16] 0.0, 128
      %2442 = vxpose.xlu0.b32.cont [7/16] 0.0, 128
      %2443 = vxpose.xlu0.b32.cont [8/16] 0.0, 128
      %2444 = vxpose.xlu0.b32.cont [9/16] 0.0, 128
      %2445 = vxpose.xlu0.b32.cont [10/16] 0.0, 128
      %2446 = vxpose.xlu0.b32.cont [11/16] 0.0, 128
      %2447 = vxpose.xlu0.b32.cont [12/16] 0.0, 128
      %2448 = vxpose.xlu0.b32.cont [13/16] 0.0, 128
      %2449 = vxpose.xlu0.b32.cont [14/16] 0.0, 128
      %2450 = vxpose.xlu0.b32.cont [15/16] 0.0, 128
      %2451 = vxpose.xlu0.b32.end [16/16] 0.0, 128
      %v2452 = vpop.trf.xlu0
      %v2453 = vpop.trf.xlu0
      %v2454 = vpop.trf.xlu0
      %v2455 = vpop.trf.xlu0
      %v2456 = vpop.trf.xlu0
      %v2457 = vpop.trf.xlu0
      %v2458 = vpop.trf.xlu0
      %v2459 = vpop.trf.xlu0
      %v2460 = vpop.trf.xlu0
      %v2461 = vpop.trf.xlu0
      %v2462 = vpop.trf.xlu0
      %v2463 = vpop.trf.xlu0
      %v2464 = vpop.trf.xlu0
      %v2465 = vpop.trf.xlu0
      %v2466 = vpop.trf.xlu0
      %v2467 = vpop.trf.xlu0
      %2468 = vxpose.xlu0.b32.start [1/16] %v2376, 128
      %2469 = vxpose.xlu0.b32.cont [2/16] %v2378, 128
      %2470 = vxpose.xlu0.b32.cont [3/16] 0.0, 128
      %2471 = vxpose.xlu0.b32.cont [4/16] 0.0, 128
      %2472 = vxpose.xlu0.b32.cont [5/16] 0.0, 128
      %2473 = vxpose.xlu0.b32.cont [6/16] 0.0, 128
      %2474 = vxpose.xlu0.b32.cont [7/16] 0.0, 128
      %2475 = vxpose.xlu0.b32.cont [8/16] 0.0, 128
      %2476 = vxpose.xlu0.b32.cont [9/16] 0.0, 128
      %2477 = vxpose.xlu0.b32.cont [10/16] 0.0, 128
      %2478 = vxpose.xlu0.b32.cont [11/16] 0.0, 128
      %2479 = vxpose.xlu0.b32.cont [12/16] 0.0, 128
      %2480 = vxpose.xlu0.b32.cont [13/16] 0.0, 128
      %2481 = vxpose.xlu0.b32.cont [14/16] 0.0, 128
      %2482 = vxpose.xlu0.b32.cont [15/16] 0.0, 128
      %2483 = vxpose.xlu0.b32.end [16/16] 0.0, 128
      %v2484 = vpop.trf.xlu0
      %v2485 = vpop.trf.xlu0
      %v2486 = vpop.trf.xlu0
      %v2487 = vpop.trf.xlu0
      %v2488 = vpop.trf.xlu0
      %v2489 = vpop.trf.xlu0
      %v2490 = vpop.trf.xlu0
      %v2491 = vpop.trf.xlu0
      %v2492 = vpop.trf.xlu0
      %v2493 = vpop.trf.xlu0
      %v2494 = vpop.trf.xlu0
      %v2495 = vpop.trf.xlu0
      %v2496 = vpop.trf.xlu0
      %v2497 = vpop.trf.xlu0
      %v2498 = vpop.trf.xlu0
      %v2499 = vpop.trf.xlu0
      %2500 = vxpose.xlu0.b32.start [1/16] %v2382, 128
      %2501 = vxpose.xlu0.b32.cont [2/16] %v2384, 128
      %2502 = vxpose.xlu0.b32.cont [3/16] 0.0, 128
      %2503 = vxpose.xlu0.b32.cont [4/16] 0.0, 128
      %2504 = vxpose.xlu0.b32.cont [5/16] 0.0, 128
      %2505 = vxpose.xlu0.b32.cont [6/16] 0.0, 128
      %2506 = vxpose.xlu0.b32.cont [7/16] 0.0, 128
      %2507 = vxpose.xlu0.b32.cont [8/16] 0.0, 128
      %2508 = vxpose.xlu0.b32.cont [9/16] 0.0, 128
      %2509 = vxpose.xlu0.b32.cont [10/16] 0.0, 128
      %2510 = vxpose.xlu0.b32.cont [11/16] 0.0, 128
      %2511 = vxpose.xlu0.b32.cont [12/16] 0.0, 128
      %2512 = vxpose.xlu0.b32.cont [13/16] 0.0, 128
      %2513 = vxpose.xlu0.b32.cont [14/16] 0.0, 128
      %2514 = vxpose.xlu0.b32.cont [15/16] 0.0, 128
      %2515 = vxpose.xlu0.b32.end [16/16] 0.0, 128
      %v2516 = vpop.trf.xlu0
      %v2517 = vpop.trf.xlu0
      %v2518 = vpop.trf.xlu0
      %v2519 = vpop.trf.xlu0
      %v2520 = vpop.trf.xlu0
      %v2521 = vpop.trf.xlu0
      %v2522 = vpop.trf.xlu0
      %v2523 = vpop.trf.xlu0
      %v2524 = vpop.trf.xlu0
      %v2525 = vpop.trf.xlu0
      %v2526 = vpop.trf.xlu0
      %v2527 = vpop.trf.xlu0
      %v2528 = vpop.trf.xlu0
      %v2529 = vpop.trf.xlu0
      %v2530 = vpop.trf.xlu0
      %v2531 = vpop.trf.xlu0
      %v2532 = vsel %vm922, %v2155, 0
      %v2534 = vsel %vm922, %v2160, 0
      %2536 = vmatprep.subr.mxu0 0.0
      %2537 = vmatpush1.msra.mxu0 0.0
      %2538 = vmatprep.subr.mxu0 0.0
      %2539 = vmatpush1.msra.mxu0 0.0
      %2540 = vmatprep.subr.mxu0 0.0
      %2541 = vmatpush1.msra.mxu0 0.0
      %2542 = vmatprep.subr.mxu0 0.0
      %2543 = vmatpush1.msra.mxu0 0.0
      %2544 = vmatprep.subr.mxu0 0.0
      %2545 = vmatpush1.msra.mxu0 0.0
      %2546 = vmatprep.subr.mxu0 0.0
      %2547 = vmatpush1.msra.mxu0 0.0
      %2548 = vmatprep.subr.mxu0 0.0
      %2549 = vmatpush1.msra.mxu0 0.0
      %2550 = vmatprep.subr.mxu0 0.0
      %2551 = vmatpush1.msra.mxu0 0.0
      %2552 = vmatprep.subr.mxu0 0.0
      %2553 = vmatpush1.msra.mxu0 0.0
      %2554 = vmatprep.subr.mxu0 0.0
      %2555 = vmatpush1.msra.mxu0 0.0
      %2556 = vmatprep.subr.mxu0 0.0
      %2557 = vmatpush1.msra.mxu0 0.0
      %2558 = vmatprep.subr.mxu0 0.0
      %2559 = vmatpush1.msra.mxu0 0.0
      %2560 = vmatprep.subr.mxu0 0.0
      %2561 = vmatpush1.msra.mxu0 0.0
      %2562 = vmatprep.subr.mxu0 0.0
      %2563 = vmatpush1.msra.mxu0 0.0
      %2564 = vmatprep.subr.mxu0 0.0
      %2565 = vmatpush1.msra.mxu0 0.0
      %2566 = vmatprep.subr.mxu0 0.0
      %2567 = vmatpush1.msra.mxu0 %v2420
      %2568 = vmatprep.subr.mxu0 0.0
      %2569 = vmatpush2.msra.mxu0 0.0
      %2570 = vmatprep.subr.mxu0 0.0
      %2571 = vmatpush2.msra.mxu0 0.0
      %2572 = vmatprep.subr.mxu0 0.0
      %2573 = vmatpush2.msra.mxu0 0.0
      %2574 = vmatprep.subr.mxu0 0.0
      %2575 = vmatpush2.msra.mxu0 0.0
      %2576 = vmatprep.subr.mxu0 0.0
      %2577 = vmatpush2.msra.mxu0 0.0
      %2578 = vmatprep.subr.mxu0 0.0
      %2579 = vmatpush2.msra.mxu0 0.0
      %2580 = vmatprep.subr.mxu0 0.0
      %2581 = vmatpush2.msra.mxu0 0.0
      %2582 = vmatprep.subr.mxu0 0.0
      %2583 = vmatpush2.msra.mxu0 0.0
      %2584 = vmatprep.subr.mxu0 0.0
      %2585 = vmatpush2.msra.mxu0 0.0
      %2586 = vmatprep.subr.mxu0 0.0
      %2587 = vmatpush2.msra.mxu0 0.0
      %2588 = vmatprep.subr.mxu0 0.0
      %2589 = vmatpush2.msra.mxu0 0.0
      %2590 = vmatprep.subr.mxu0 0.0
      %2591 = vmatpush2.msra.mxu0 0.0
      %2592 = vmatprep.subr.mxu0 0.0
      %2593 = vmatpush2.msra.mxu0 0.0
      %2594 = vmatprep.subr.mxu0 0.0
      %2595 = vmatpush2.msra.mxu0 0.0
      %2596 = vmatprep.subr.mxu0 0.0
      %2597 = vmatpush2.msra.mxu0 0.0
      %2598 = vmatprep.subr.mxu0 0.0
      %2599 = vmatpush2.msra.mxu0 0.0
      %2600 = vmatprep.mubr.f32.mxu0 0.0
      %2601 = vmatmul.mubr.f32.gmra.mxu0 %v2532
      %v2602 = vpop.f32.mrf.mxu0
      %v2603 = vadd.f32 0.0, %v2602
      %v2604 = vpop.f32.mrf.mxu0
      %2605 = vmatprep.mubr.f32.mxu0 0.0
      %2606 = vmatmul.mubr.f32.gmra.mxu0 %v2534
      %v2607 = vpop.f32.mrf.mxu0
      %v2608 = vadd.f32 0.0, %v2607
      %v2609 = vpop.f32.mrf.mxu0
      %2610 = vdwg.mxu0
      %v2611 = vsel %vm922, %v2356, 0
      %v2613 = vsel %vm922, %v2358, 0
      %2615 = vmatprep.subr.mxu0 0.0
      %2616 = vmatpush1.msra.mxu0 0.0
      %2617 = vmatprep.subr.mxu0 0.0
      %2618 = vmatpush1.msra.mxu0 0.0
      %2619 = vmatprep.subr.mxu0 0.0
      %2620 = vmatpush1.msra.mxu0 0.0
      %2621 = vmatprep.subr.mxu0 0.0
      %2622 = vmatpush1.msra.mxu0 0.0
      %2623 = vmatprep.subr.mxu0 0.0
      %2624 = vmatpush1.msra.mxu0 0.0
      %2625 = vmatprep.subr.mxu0 0.0
      %2626 = vmatpush1.msra.mxu0 0.0
      %2627 = vmatprep.subr.mxu0 0.0
      %2628 = vmatpush1.msra.mxu0 0.0
      %2629 = vmatprep.subr.mxu0 0.0
      %2630 = vmatpush1.msra.mxu0 0.0
      %2631 = vmatprep.subr.mxu0 0.0
      %2632 = vmatpush1.msra.mxu0 0.0
      %2633 = vmatprep.subr.mxu0 0.0
      %2634 = vmatpush1.msra.mxu0 0.0
      %2635 = vmatprep.subr.mxu0 0.0
      %2636 = vmatpush1.msra.mxu0 0.0
      %2637 = vmatprep.subr.mxu0 0.0
      %2638 = vmatpush1.msra.mxu0 0.0
      %2639 = vmatprep.subr.mxu0 0.0
      %2640 = vmatpush1.msra.mxu0 0.0
      %2641 = vmatprep.subr.mxu0 0.0
      %2642 = vmatpush1.msra.mxu0 0.0
      %2643 = vmatprep.subr.mxu0 0.0
      %2644 = vmatpush1.msra.mxu0 0.0
      %2645 = vmatprep.subr.mxu0 0.0
      %2646 = vmatpush1.msra.mxu0 %v2452
      %2647 = vmatprep.subr.mxu0 0.0
      %2648 = vmatpush2.msra.mxu0 0.0
      %2649 = vmatprep.subr.mxu0 0.0
      %2650 = vmatpush2.msra.mxu0 0.0
      %2651 = vmatprep.subr.mxu0 0.0
      %2652 = vmatpush2.msra.mxu0 0.0
      %2653 = vmatprep.subr.mxu0 0.0
      %2654 = vmatpush2.msra.mxu0 0.0
      %2655 = vmatprep.subr.mxu0 0.0
      %2656 = vmatpush2.msra.mxu0 0.0
      %2657 = vmatprep.subr.mxu0 0.0
      %2658 = vmatpush2.msra.mxu0 0.0
      %2659 = vmatprep.subr.mxu0 0.0
      %2660 = vmatpush2.msra.mxu0 0.0
      %2661 = vmatprep.subr.mxu0 0.0
      %2662 = vmatpush2.msra.mxu0 0.0
      %2663 = vmatprep.subr.mxu0 0.0
      %2664 = vmatpush2.msra.mxu0 0.0
      %2665 = vmatprep.subr.mxu0 0.0
      %2666 = vmatpush2.msra.mxu0 0.0
      %2667 = vmatprep.subr.mxu0 0.0
      %2668 = vmatpush2.msra.mxu0 0.0
      %2669 = vmatprep.subr.mxu0 0.0
      %2670 = vmatpush2.msra.mxu0 0.0
      %2671 = vmatprep.subr.mxu0 0.0
      %2672 = vmatpush2.msra.mxu0 0.0
      %2673 = vmatprep.subr.mxu0 0.0
      %2674 = vmatpush2.msra.mxu0 0.0
      %2675 = vmatprep.subr.mxu0 0.0
      %2676 = vmatpush2.msra.mxu0 0.0
      %2677 = vmatprep.subr.mxu0 0.0
      %2678 = vmatpush2.msra.mxu0 0.0
      %2679 = vmatprep.mubr.f32.mxu0 0.0
      %2680 = vmatmul.mubr.f32.gmra.mxu0 %v2611
      %v2681 = vpop.f32.mrf.mxu0
      %v2682 = vadd.f32 0.0, %v2681
      %v2683 = vpop.f32.mrf.mxu0
      %2684 = vmatprep.mubr.f32.mxu0 0.0
      %2685 = vmatmul.mubr.f32.gmra.mxu0 %v2613
      %v2686 = vpop.f32.mrf.mxu0
      %v2687 = vadd.f32 0.0, %v2686
      %v2688 = vpop.f32.mrf.mxu0
      %2689 = vdwg.mxu0
      %v2690 = vsel %vm922, %v2360, 0
      %v2692 = vsel %vm922, %v2362, 0
      %2694 = vmatprep.subr.mxu0 0.0
      %2695 = vmatpush1.msra.mxu0 0.0
      %2696 = vmatprep.subr.mxu0 0.0
      %2697 = vmatpush1.msra.mxu0 0.0
      %2698 = vmatprep.subr.mxu0 0.0
      %2699 = vmatpush1.msra.mxu0 0.0
      %2700 = vmatprep.subr.mxu0 0.0
      %2701 = vmatpush1.msra.mxu0 0.0
      %2702 = vmatprep.subr.mxu0 0.0
      %2703 = vmatpush1.msra.mxu0 0.0
      %2704 = vmatprep.subr.mxu0 0.0
      %2705 = vmatpush1.msra.mxu0 0.0
      %2706 = vmatprep.subr.mxu0 0.0
      %2707 = vmatpush1.msra.mxu0 0.0
      %2708 = vmatprep.subr.mxu0 0.0
      %2709 = vmatpush1.msra.mxu0 0.0
      %2710 = vmatprep.subr.mxu0 0.0
      %2711 = vmatpush1.msra.mxu0 0.0
      %2712 = vmatprep.subr.mxu0 0.0
      %2713 = vmatpush1.msra.mxu0 0.0
      %2714 = vmatprep.subr.mxu0 0.0
      %2715 = vmatpush1.msra.mxu0 0.0
      %2716 = vmatprep.subr.mxu0 0.0
      %2717 = vmatpush1.msra.mxu0 0.0
      %2718 = vmatprep.subr.mxu0 0.0
      %2719 = vmatpush1.msra.mxu0 0.0
      %2720 = vmatprep.subr.mxu0 0.0
      %2721 = vmatpush1.msra.mxu0 0.0
      %2722 = vmatprep.subr.mxu0 0.0
      %2723 = vmatpush1.msra.mxu0 0.0
      %2724 = vmatprep.subr.mxu0 0.0
      %2725 = vmatpush1.msra.mxu0 %v2484
      %2726 = vmatprep.subr.mxu0 0.0
      %2727 = vmatpush2.msra.mxu0 0.0
      %2728 = vmatprep.subr.mxu0 0.0
      %2729 = vmatpush2.msra.mxu0 0.0
      %2730 = vmatprep.subr.mxu0 0.0
      %2731 = vmatpush2.msra.mxu0 0.0
      %2732 = vmatprep.subr.mxu0 0.0
      %2733 = vmatpush2.msra.mxu0 0.0
      %2734 = vmatprep.subr.mxu0 0.0
      %2735 = vmatpush2.msra.mxu0 0.0
      %2736 = vmatprep.subr.mxu0 0.0
      %2737 = vmatpush2.msra.mxu0 0.0
      %2738 = vmatprep.subr.mxu0 0.0
      %2739 = vmatpush2.msra.mxu0 0.0
      %2740 = vmatprep.subr.mxu0 0.0
      %2741 = vmatpush2.msra.mxu0 0.0
      %2742 = vmatprep.subr.mxu0 0.0
      %2743 = vmatpush2.msra.mxu0 0.0
      %2744 = vmatprep.subr.mxu0 0.0
      %2745 = vmatpush2.msra.mxu0 0.0
      %2746 = vmatprep.subr.mxu0 0.0
      %2747 = vmatpush2.msra.mxu0 0.0
      %2748 = vmatprep.subr.mxu0 0.0
      %2749 = vmatpush2.msra.mxu0 0.0
      %2750 = vmatprep.subr.mxu0 0.0
      %2751 = vmatpush2.msra.mxu0 0.0
      %2752 = vmatprep.subr.mxu0 0.0
      %2753 = vmatpush2.msra.mxu0 0.0
      %2754 = vmatprep.subr.mxu0 0.0
      %2755 = vmatpush2.msra.mxu0 0.0
      %2756 = vmatprep.subr.mxu0 0.0
      %2757 = vmatpush2.msra.mxu0 0.0
      %2758 = vmatprep.mubr.f32.mxu0 0.0
      %2759 = vmatmul.mubr.f32.gmra.mxu0 %v2690
      %v2760 = vpop.f32.mrf.mxu0
      %v2761 = vadd.f32 0.0, %v2760
      %v2762 = vpop.f32.mrf.mxu0
      %2763 = vmatprep.mubr.f32.mxu0 0.0
      %2764 = vmatmul.mubr.f32.gmra.mxu0 %v2692
      %v2765 = vpop.f32.mrf.mxu0
      %v2766 = vadd.f32 0.0, %v2765
      %v2767 = vpop.f32.mrf.mxu0
      %2768 = vdwg.mxu0
      %v2769 = vsel %vm922, %v2364, 0
      %v2771 = vsel %vm922, %v2366, 0
      %2773 = vmatprep.subr.mxu0 0.0
      %2774 = vmatpush1.msra.mxu0 0.0
      %2775 = vmatprep.subr.mxu0 0.0
      %2776 = vmatpush1.msra.mxu0 0.0
      %2777 = vmatprep.subr.mxu0 0.0
      %2778 = vmatpush1.msra.mxu0 0.0
      %2779 = vmatprep.subr.mxu0 0.0
      %2780 = vmatpush1.msra.mxu0 0.0
      %2781 = vmatprep.subr.mxu0 0.0
      %2782 = vmatpush1.msra.mxu0 0.0
      %2783 = vmatprep.subr.mxu0 0.0
      %2784 = vmatpush1.msra.mxu0 0.0
      %2785 = vmatprep.subr.mxu0 0.0
      %2786 = vmatpush1.msra.mxu0 0.0
      %2787 = vmatprep.subr.mxu0 0.0
      %2788 = vmatpush1.msra.mxu0 0.0
      %2789 = vmatprep.subr.mxu0 0.0
      %2790 = vmatpush1.msra.mxu0 0.0
      %2791 = vmatprep.subr.mxu0 0.0
      %2792 = vmatpush1.msra.mxu0 0.0
      %2793 = vmatprep.subr.mxu0 0.0
      %2794 = vmatpush1.msra.mxu0 0.0
      %2795 = vmatprep.subr.mxu0 0.0
      %2796 = vmatpush1.msra.mxu0 0.0
      %2797 = vmatprep.subr.mxu0 0.0
      %2798 = vmatpush1.msra.mxu0 0.0
      %2799 = vmatprep.subr.mxu0 0.0
      %2800 = vmatpush1.msra.mxu0 0.0
      %2801 = vmatprep.subr.mxu0 0.0
      %2802 = vmatpush1.msra.mxu0 0.0
      %2803 = vmatprep.subr.mxu0 0.0
      %2804 = vmatpush1.msra.mxu0 %v2516
      %2805 = vmatprep.subr.mxu0 0.0
      %2806 = vmatpush2.msra.mxu0 0.0
      %2807 = vmatprep.subr.mxu0 0.0
      %2808 = vmatpush2.msra.mxu0 0.0
      %2809 = vmatprep.subr.mxu0 0.0
      %2810 = vmatpush2.msra.mxu0 0.0
      %2811 = vmatprep.subr.mxu0 0.0
      %2812 = vmatpush2.msra.mxu0 0.0
      %2813 = vmatprep.subr.mxu0 0.0
      %2814 = vmatpush2.msra.mxu0 0.0
      %2815 = vmatprep.subr.mxu0 0.0
      %2816 = vmatpush2.msra.mxu0 0.0
      %2817 = vmatprep.subr.mxu0 0.0
      %2818 = vmatpush2.msra.mxu0 0.0
      %2819 = vmatprep.subr.mxu0 0.0
      %2820 = vmatpush2.msra.mxu0 0.0
      %2821 = vmatprep.subr.mxu0 0.0
      %2822 = vmatpush2.msra.mxu0 0.0
      %2823 = vmatprep.subr.mxu0 0.0
      %2824 = vmatpush2.msra.mxu0 0.0
      %2825 = vmatprep.subr.mxu0 0.0
      %2826 = vmatpush2.msra.mxu0 0.0
      %2827 = vmatprep.subr.mxu0 0.0
      %2828 = vmatpush2.msra.mxu0 0.0
      %2829 = vmatprep.subr.mxu0 0.0
      %2830 = vmatpush2.msra.mxu0 0.0
      %2831 = vmatprep.subr.mxu0 0.0
      %2832 = vmatpush2.msra.mxu0 0.0
      %2833 = vmatprep.subr.mxu0 0.0
      %2834 = vmatpush2.msra.mxu0 0.0
      %2835 = vmatprep.subr.mxu0 0.0
      %2836 = vmatpush2.msra.mxu0 0.0
      %2837 = vmatprep.mubr.f32.mxu0 0.0
      %2838 = vmatmul.mubr.f32.gmra.mxu0 %v2769
      %v2839 = vpop.f32.mrf.mxu0
      %v2840 = vadd.f32 0.0, %v2839
      %v2841 = vpop.f32.mrf.mxu0
      %2842 = vmatprep.mubr.f32.mxu0 0.0
      %2843 = vmatmul.mubr.f32.gmra.mxu0 %v2771
      %v2844 = vpop.f32.mrf.mxu0
      %v2845 = vadd.f32 0.0, %v2844
      %v2846 = vpop.f32.mrf.mxu0
      %2847 = vdwg.mxu0
      %v2848 = vmul.f32 %v2603, 0.35355338
      %v2849 = vmul.f32 %v2608, 0.35355338
      %v2850 = vmul.f32 %v2682, 0.35355338
      %v2851 = vmul.f32 %v2687, 0.35355338
      %v2852 = vmul.f32 %v2761, 0.35355338
      %v2853 = vmul.f32 %v2766, 0.35355338
      %v2854 = vmul.f32 %v2840, 0.35355338
      %v2855 = vmul.f32 %v2845, 0.35355338
      %v2856 = vsel %vm1247, %v2848, -inf
      %2857 = vmax.xlane.f32.xlu0 %v2856
      %v2858 = vpop.xlane.xlu0 %2857
      %v2859 = vsel %vm1251, %v2849, -inf
      %2860 = vmax.xlane.f32.xlu0 %v2859
      %v2861 = vpop.xlane.xlu0 %2860
      %v2862 = vsel %vm1247, %v2850, -inf
      %2863 = vmax.xlane.f32.xlu0 %v2862
      %v2864 = vpop.xlane.xlu0 %2863
      %v2865 = vsel %vm1251, %v2851, -inf
      %2866 = vmax.xlane.f32.xlu0 %v2865
      %v2867 = vpop.xlane.xlu0 %2866
      %v2868 = vsel %vm1247, %v2852, -inf
      %2869 = vmax.xlane.f32.xlu0 %v2868
      %v2870 = vpop.xlane.xlu0 %2869
      %v2871 = vsel %vm1251, %v2853, -inf
      %2872 = vmax.xlane.f32.xlu0 %v2871
      %v2873 = vpop.xlane.xlu0 %2872
      %v2874 = vsel %vm1247, %v2854, -inf
      %2875 = vmax.xlane.f32.xlu0 %v2874
      %v2876 = vpop.xlane.xlu0 %2875
      %v2877 = vsel %vm1251, %v2855, -inf
      %2878 = vmax.xlane.f32.xlu0 %v2877
      %v2879 = vpop.xlane.xlu0 %2878
      %v2880 = vsub.f32 %v2848, %v2858
      %v2881 = vsub.f32 %v2849, %v2861
      %v2882 = vsub.f32 %v2850, %v2864
      %v2883 = vsub.f32 %v2851, %v2867
      %v2884 = vsub.f32 %v2852, %v2870
      %v2885 = vsub.f32 %v2853, %v2873
      %v2886 = vsub.f32 %v2854, %v2876
      %v2887 = vsub.f32 %v2855, %v2879
      %v2888 = vmul.f32 %v2880, 1.442695
      %v2889 = vpow.pop %v2888
      %v2890 = vmul.f32 %v2881, 1.442695
      %v2891 = vpow.pop %v2890
      %v2892 = vmul.f32 %v2882, 1.442695
      %v2893 = vpow.pop %v2892
      %v2894 = vmul.f32 %v2883, 1.442695
      %v2895 = vpow.pop %v2894
      %v2896 = vmul.f32 %v2884, 1.442695
      %v2897 = vpow.pop %v2896
      %v2898 = vmul.f32 %v2885, 1.442695
      %v2899 = vpow.pop %v2898
      %v2900 = vmul.f32 %v2886, 1.442695
      %v2901 = vpow.pop %v2900
      %v2902 = vmul.f32 %v2887, 1.442695
      %v2903 = vpow.pop %v2902
      %v2904 = vsel %vm1247, %v2889, 0.0
      %2905 = vadd.xlane.f32.xlu0 %v2904
      %v2906 = vpop.xlane.xlu0 %2905
      %v2907 = vsel %vm1251, %v2891, 0.0
      %2908 = vadd.xlane.f32.xlu0 %v2907
      %v2909 = vpop.xlane.xlu0 %2908
      %v2910 = vsel %vm1247, %v2893, 0.0
      %2911 = vadd.xlane.f32.xlu0 %v2910
      %v2912 = vpop.xlane.xlu0 %2911
      %v2913 = vsel %vm1251, %v2895, 0.0
      %2914 = vadd.xlane.f32.xlu0 %v2913
      %v2915 = vpop.xlane.xlu0 %2914
      %v2916 = vsel %vm1247, %v2897, 0.0
      %2917 = vadd.xlane.f32.xlu0 %v2916
      %v2918 = vpop.xlane.xlu0 %2917
      %v2919 = vsel %vm1251, %v2899, 0.0
      %2920 = vadd.xlane.f32.xlu0 %v2919
      %v2921 = vpop.xlane.xlu0 %2920
      %v2922 = vsel %vm1247, %v2901, 0.0
      %2923 = vadd.xlane.f32.xlu0 %v2922
      %v2924 = vpop.xlane.xlu0 %2923
      %v2925 = vsel %vm1251, %v2903, 0.0
      %2926 = vadd.xlane.f32.xlu0 %v2925
      %v2927 = vpop.xlane.xlu0 %2926
      %v2928 = vrcp.pop %v2906
      %v2929 = vrcp.pop %v2909
      %v2930 = vrcp.pop %v2912
      %v2931 = vrcp.pop %v2915
      %v2932 = vrcp.pop %v2918
      %v2933 = vrcp.pop %v2921
      %v2934 = vrcp.pop %v2924
      %v2935 = vrcp.pop %v2927
      %v2936 = vmul.f32 %v2889, %v2928
      %v2937 = vmul.f32 %v2891, %v2929
      %v2938 = vmul.f32 %v2893, %v2930
      %v2939 = vmul.f32 %v2895, %v2931
      %v2940 = vmul.f32 %v2897, %v2932
      %v2941 = vmul.f32 %v2899, %v2933
      %v2942 = vmul.f32 %v2901, %v2934
      %v2943 = vmul.f32 %v2903, %v2935
      %v2945 = vsel %vm1247, %v2936, 0
      %v2948 = vsel %vm1247, %v2937, 0
      %v2950 = vsel %vm1343, %v2350, 0
      %2952 = vmatprep.subr.mxu0 0.0
      %2953 = vmatpush1.msra.mxu0 0.0
      %2954 = vmatprep.subr.mxu0 0.0
      %2955 = vmatpush1.msra.mxu0 0.0
      %2956 = vmatprep.subr.mxu0 0.0
      %2957 = vmatpush1.msra.mxu0 0.0
      %2958 = vmatprep.subr.mxu0 0.0
      %2959 = vmatpush1.msra.mxu0 0.0
      %2960 = vmatprep.subr.mxu0 0.0
      %2961 = vmatpush1.msra.mxu0 0.0
      %2962 = vmatprep.subr.mxu0 0.0
      %2963 = vmatpush1.msra.mxu0 0.0
      %2964 = vmatprep.subr.mxu0 0.0
      %2965 = vmatpush1.msra.mxu0 0.0
      %2966 = vmatprep.subr.mxu0 0.0
      %2967 = vmatpush1.msra.mxu0 0.0
      %2968 = vmatprep.subr.mxu0 0.0
      %2969 = vmatpush1.msra.mxu0 0.0
      %2970 = vmatprep.subr.mxu0 0.0
      %2971 = vmatpush1.msra.mxu0 0.0
      %2972 = vmatprep.subr.mxu0 0.0
      %2973 = vmatpush1.msra.mxu0 0.0
      %2974 = vmatprep.subr.mxu0 0.0
      %2975 = vmatpush1.msra.mxu0 0.0
      %2976 = vmatprep.subr.mxu0 0.0
      %2977 = vmatpush1.msra.mxu0 0.0
      %2978 = vmatprep.subr.mxu0 0.0
      %2979 = vmatpush1.msra.mxu0 0.0
      %2980 = vmatprep.subr.mxu0 0.0
      %2981 = vmatpush1.msra.mxu0 %v2950
      %2982 = vmatprep.subr.mxu0 0.0
      %2983 = vmatpush1.msra.mxu0 %v2345
      %2984 = vmatprep.subr.mxu0 0.0
      %2985 = vmatpush2.msra.mxu0 0.0
      %2986 = vmatprep.subr.mxu0 0.0
      %2987 = vmatpush2.msra.mxu0 0.0
      %2988 = vmatprep.subr.mxu0 0.0
      %2989 = vmatpush2.msra.mxu0 0.0
      %2990 = vmatprep.subr.mxu0 0.0
      %2991 = vmatpush2.msra.mxu0 0.0
      %2992 = vmatprep.subr.mxu0 0.0
      %2993 = vmatpush2.msra.mxu0 0.0
      %2994 = vmatprep.subr.mxu0 0.0
      %2995 = vmatpush2.msra.mxu0 0.0
      %2996 = vmatprep.subr.mxu0 0.0
      %2997 = vmatpush2.msra.mxu0 0.0
      %2998 = vmatprep.subr.mxu0 0.0
      %2999 = vmatpush2.msra.mxu0 0.0
      %3000 = vmatprep.subr.mxu0 0.0
      %3001 = vmatpush2.msra.mxu0 0.0
      %3002 = vmatprep.subr.mxu0 0.0
      %3003 = vmatpush2.msra.mxu0 0.0
      %3004 = vmatprep.subr.mxu0 0.0
      %3005 = vmatpush2.msra.mxu0 0.0
      %3006 = vmatprep.subr.mxu0 0.0
      %3007 = vmatpush2.msra.mxu0 0.0
      %3008 = vmatprep.subr.mxu0 0.0
      %3009 = vmatpush2.msra.mxu0 0.0
      %3010 = vmatprep.subr.mxu0 0.0
      %3011 = vmatpush2.msra.mxu0 0.0
      %3012 = vmatprep.subr.mxu0 0.0
      %3013 = vmatpush2.msra.mxu0 0.0
      %3014 = vmatprep.subr.mxu0 0.0
      %3015 = vmatpush2.msra.mxu0 0.0
      %3016 = vmatprep.mubr.f32.mxu0 0.0
      %3017 = vmatmul.mubr.f32.gmra.mxu0 %v2945
      %v3018 = vpop.f32.mrf.mxu0
      %v3019 = vadd.f32 0.0, %v3018
      %v3020 = vpop.f32.mrf.mxu0
      %3021 = vmatprep.mubr.f32.mxu0 0.0
      %3022 = vmatmul.mubr.f32.gmra.mxu0 %v2948
      %v3023 = vpop.f32.mrf.mxu0
      %v3024 = vadd.f32 0.0, %v3023
      %v3025 = vpop.f32.mrf.mxu0
      %3026 = vdwg.mxu0
      %v3028 = vsel %vm1247, %v2938, 0
      %v3031 = vsel %vm1247, %v2939, 0
      %v3033 = vsel %vm1343, %v2392, 0
      %3035 = vmatprep.subr.mxu0 0.0
      %3036 = vmatpush1.msra.mxu0 0.0
      %3037 = vmatprep.subr.mxu0 0.0
      %3038 = vmatpush1.msra.mxu0 0.0
      %3039 = vmatprep.subr.mxu0 0.0
      %3040 = vmatpush1.msra.mxu0 0.0
      %3041 = vmatprep.subr.mxu0 0.0
      %3042 = vmatpush1.msra.mxu0 0.0
      %3043 = vmatprep.subr.mxu0 0.0
      %3044 = vmatpush1.msra.mxu0 0.0
      %3045 = vmatprep.subr.mxu0 0.0
      %3046 = vmatpush1.msra.mxu0 0.0
      %3047 = vmatprep.subr.mxu0 0.0
      %3048 = vmatpush1.msra.mxu0 0.0
      %3049 = vmatprep.subr.mxu0 0.0
      %3050 = vmatpush1.msra.mxu0 0.0
      %3051 = vmatprep.subr.mxu0 0.0
      %3052 = vmatpush1.msra.mxu0 0.0
      %3053 = vmatprep.subr.mxu0 0.0
      %3054 = vmatpush1.msra.mxu0 0.0
      %3055 = vmatprep.subr.mxu0 0.0
      %3056 = vmatpush1.msra.mxu0 0.0
      %3057 = vmatprep.subr.mxu0 0.0
      %3058 = vmatpush1.msra.mxu0 0.0
      %3059 = vmatprep.subr.mxu0 0.0
      %3060 = vmatpush1.msra.mxu0 0.0
      %3061 = vmatprep.subr.mxu0 0.0
      %3062 = vmatpush1.msra.mxu0 0.0
      %3063 = vmatprep.subr.mxu0 0.0
      %3064 = vmatpush1.msra.mxu0 %v3033
      %3065 = vmatprep.subr.mxu0 0.0
      %3066 = vmatpush1.msra.mxu0 %v2390
      %3067 = vmatprep.subr.mxu0 0.0
      %3068 = vmatpush2.msra.mxu0 0.0
      %3069 = vmatprep.subr.mxu0 0.0
      %3070 = vmatpush2.msra.mxu0 0.0
      %3071 = vmatprep.subr.mxu0 0.0
      %3072 = vmatpush2.msra.mxu0 0.0
      %3073 = vmatprep.subr.mxu0 0.0
      %3074 = vmatpush2.msra.mxu0 0.0
      %3075 = vmatprep.subr.mxu0 0.0
      %3076 = vmatpush2.msra.mxu0 0.0
      %3077 = vmatprep.subr.mxu0 0.0
      %3078 = vmatpush2.msra.mxu0 0.0
      %3079 = vmatprep.subr.mxu0 0.0
      %3080 = vmatpush2.msra.mxu0 0.0
      %3081 = vmatprep.subr.mxu0 0.0
      %3082 = vmatpush2.msra.mxu0 0.0
      %3083 = vmatprep.subr.mxu0 0.0
      %3084 = vmatpush2.msra.mxu0 0.0
      %3085 = vmatprep.subr.mxu0 0.0
      %3086 = vmatpush2.msra.mxu0 0.0
      %3087 = vmatprep.subr.mxu0 0.0
      %3088 = vmatpush2.msra.mxu0 0.0
      %3089 = vmatprep.subr.mxu0 0.0
      %3090 = vmatpush2.msra.mxu0 0.0
      %3091 = vmatprep.subr.mxu0 0.0
      %3092 = vmatpush2.msra.mxu0 0.0
      %3093 = vmatprep.subr.mxu0 0.0
      %3094 = vmatpush2.msra.mxu0 0.0
      %3095 = vmatprep.subr.mxu0 0.0
      %3096 = vmatpush2.msra.mxu0 0.0
      %3097 = vmatprep.subr.mxu0 0.0
      %3098 = vmatpush2.msra.mxu0 0.0
      %3099 = vmatprep.mubr.f32.mxu0 0.0
      %3100 = vmatmul.mubr.f32.gmra.mxu0 %v3028
      %v3101 = vpop.f32.mrf.mxu0
      %v3102 = vadd.f32 0.0, %v3101
      %v3103 = vpop.f32.mrf.mxu0
      %3104 = vmatprep.mubr.f32.mxu0 0.0
      %3105 = vmatmul.mubr.f32.gmra.mxu0 %v3031
      %v3106 = vpop.f32.mrf.mxu0
      %v3107 = vadd.f32 0.0, %v3106
      %v3108 = vpop.f32.mrf.mxu0
      %3109 = vdwg.mxu0
      %v3111 = vsel %vm1247, %v2940, 0
      %v3114 = vsel %vm1247, %v2941, 0
      %v3116 = vsel %vm1343, %v2397, 0
      %3118 = vmatprep.subr.mxu0 0.0
      %3119 = vmatpush1.msra.mxu0 0.0
      %3120 = vmatprep.subr.mxu0 0.0
      %3121 = vmatpush1.msra.mxu0 0.0
      %3122 = vmatprep.subr.mxu0 0.0
      %3123 = vmatpush1.msra.mxu0 0.0
      %3124 = vmatprep.subr.mxu0 0.0
      %3125 = vmatpush1.msra.mxu0 0.0
      %3126 = vmatprep.subr.mxu0 0.0
      %3127 = vmatpush1.msra.mxu0 0.0
      %3128 = vmatprep.subr.mxu0 0.0
      %3129 = vmatpush1.msra.mxu0 0.0
      %3130 = vmatprep.subr.mxu0 0.0
      %3131 = vmatpush1.msra.mxu0 0.0
      %3132 = vmatprep.subr.mxu0 0.0
      %3133 = vmatpush1.msra.mxu0 0.0
      %3134 = vmatprep.subr.mxu0 0.0
      %3135 = vmatpush1.msra.mxu0 0.0
      %3136 = vmatprep.subr.mxu0 0.0
      %3137 = vmatpush1.msra.mxu0 0.0
      %3138 = vmatprep.subr.mxu0 0.0
      %3139 = vmatpush1.msra.mxu0 0.0
      %3140 = vmatprep.subr.mxu0 0.0
      %3141 = vmatpush1.msra.mxu0 0.0
      %3142 = vmatprep.subr.mxu0 0.0
      %3143 = vmatpush1.msra.mxu0 0.0
      %3144 = vmatprep.subr.mxu0 0.0
      %3145 = vmatpush1.msra.mxu0 0.0
      %3146 = vmatprep.subr.mxu0 0.0
      %3147 = vmatpush1.msra.mxu0 %v3116
      %3148 = vmatprep.subr.mxu0 0.0
      %3149 = vmatpush1.msra.mxu0 %v2395
      %3150 = vmatprep.subr.mxu0 0.0
      %3151 = vmatpush2.msra.mxu0 0.0
      %3152 = vmatprep.subr.mxu0 0.0
      %3153 = vmatpush2.msra.mxu0 0.0
      %3154 = vmatprep.subr.mxu0 0.0
      %3155 = vmatpush2.msra.mxu0 0.0
      %3156 = vmatprep.subr.mxu0 0.0
      %3157 = vmatpush2.msra.mxu0 0.0
      %3158 = vmatprep.subr.mxu0 0.0
      %3159 = vmatpush2.msra.mxu0 0.0
      %3160 = vmatprep.subr.mxu0 0.0
      %3161 = vmatpush2.msra.mxu0 0.0
      %3162 = vmatprep.subr.mxu0 0.0
      %3163 = vmatpush2.msra.mxu0 0.0
      %3164 = vmatprep.subr.mxu0 0.0
      %3165 = vmatpush2.msra.mxu0 0.0
      %3166 = vmatprep.subr.mxu0 0.0
      %3167 = vmatpush2.msra.mxu0 0.0
      %3168 = vmatprep.subr.mxu0 0.0
      %3169 = vmatpush2.msra.mxu0 0.0
      %3170 = vmatprep.subr.mxu0 0.0
      %3171 = vmatpush2.msra.mxu0 0.0
      %3172 = vmatprep.subr.mxu0 0.0
      %3173 = vmatpush2.msra.mxu0 0.0
      %3174 = vmatprep.subr.mxu0 0.0
      %3175 = vmatpush2.msra.mxu0 0.0
      %3176 = vmatprep.subr.mxu0 0.0
      %3177 = vmatpush2.msra.mxu0 0.0
      %3178 = vmatprep.subr.mxu0 0.0
      %3179 = vmatpush2.msra.mxu0 0.0
      %3180 = vmatprep.subr.mxu0 0.0
      %3181 = vmatpush2.msra.mxu0 0.0
      %3182 = vmatprep.mubr.f32.mxu0 0.0
      %3183 = vmatmul.mubr.f32.gmra.mxu0 %v3111
      %v3184 = vpop.f32.mrf.mxu0
      %v3185 = vadd.f32 0.0, %v3184
      %v3186 = vpop.f32.mrf.mxu0
      %3187 = vmatprep.mubr.f32.mxu0 0.0
      %3188 = vmatmul.mubr.f32.gmra.mxu0 %v3114
      %v3189 = vpop.f32.mrf.mxu0
      %v3190 = vadd.f32 0.0, %v3189
      %v3191 = vpop.f32.mrf.mxu0
      %3192 = vdwg.mxu0
      %v3194 = vsel %vm1247, %v2942, 0
      %v3197 = vsel %vm1247, %v2943, 0
      %v3199 = vsel %vm1343, %v2402, 0
      %3201 = vmatprep.subr.mxu0 0.0
      %3202 = vmatpush1.msra.mxu0 0.0
      %3203 = vmatprep.subr.mxu0 0.0
      %3204 = vmatpush1.msra.mxu0 0.0
      %3205 = vmatprep.subr.mxu0 0.0
      %3206 = vmatpush1.msra.mxu0 0.0
      %3207 = vmatprep.subr.mxu0 0.0
      %3208 = vmatpush1.msra.mxu0 0.0
      %3209 = vmatprep.subr.mxu0 0.0
      %3210 = vmatpush1.msra.mxu0 0.0
      %3211 = vmatprep.subr.mxu0 0.0
      %3212 = vmatpush1.msra.mxu0 0.0
      %3213 = vmatprep.subr.mxu0 0.0
      %3214 = vmatpush1.msra.mxu0 0.0
      %3215 = vmatprep.subr.mxu0 0.0
      %3216 = vmatpush1.msra.mxu0 0.0
      %3217 = vmatprep.subr.mxu0 0.0
      %3218 = vmatpush1.msra.mxu0 0.0
      %3219 = vmatprep.subr.mxu0 0.0
      %3220 = vmatpush1.msra.mxu0 0.0
      %3221 = vmatprep.subr.mxu0 0.0
      %3222 = vmatpush1.msra.mxu0 0.0
      %3223 = vmatprep.subr.mxu0 0.0
      %3224 = vmatpush1.msra.mxu0 0.0
      %3225 = vmatprep.subr.mxu0 0.0
      %3226 = vmatpush1.msra.mxu0 0.0
      %3227 = vmatprep.subr.mxu0 0.0
      %3228 = vmatpush1.msra.mxu0 0.0
      %3229 = vmatprep.subr.mxu0 0.0
      %3230 = vmatpush1.msra.mxu0 %v3199
      %3231 = vmatprep.subr.mxu0 0.0
      %3232 = vmatpush1.msra.mxu0 %v2400
      %3233 = vmatprep.subr.mxu0 0.0
      %3234 = vmatpush2.msra.mxu0 0.0
      %3235 = vmatprep.subr.mxu0 0.0
      %3236 = vmatpush2.msra.mxu0 0.0
      %3237 = vmatprep.subr.mxu0 0.0
      %3238 = vmatpush2.msra.mxu0 0.0
      %3239 = vmatprep.subr.mxu0 0.0
      %3240 = vmatpush2.msra.mxu0 0.0
      %3241 = vmatprep.subr.mxu0 0.0
      %3242 = vmatpush2.msra.mxu0 0.0
      %3243 = vmatprep.subr.mxu0 0.0
      %3244 = vmatpush2.msra.mxu0 0.0
      %3245 = vmatprep.subr.mxu0 0.0
      %3246 = vmatpush2.msra.mxu0 0.0
      %3247 = vmatprep.subr.mxu0 0.0
      %3248 = vmatpush2.msra.mxu0 0.0
      %3249 = vmatprep.subr.mxu0 0.0
      %3250 = vmatpush2.msra.mxu0 0.0
      %3251 = vmatprep.subr.mxu0 0.0
      %3252 = vmatpush2.msra.mxu0 0.0
      %3253 = vmatprep.subr.mxu0 0.0
      %3254 = vmatpush2.msra.mxu0 0.0
      %3255 = vmatprep.subr.mxu0 0.0
      %3256 = vmatpush2.msra.mxu0 0.0
      %3257 = vmatprep.subr.mxu0 0.0
      %3258 = vmatpush2.msra.mxu0 0.0
      %3259 = vmatprep.subr.mxu0 0.0
      %3260 = vmatpush2.msra.mxu0 0.0
      %3261 = vmatprep.subr.mxu0 0.0
      %3262 = vmatpush2.msra.mxu0 0.0
      %3263 = vmatprep.subr.mxu0 0.0
      %3264 = vmatpush2.msra.mxu0 0.0
      %3265 = vmatprep.mubr.f32.mxu0 0.0
      %3266 = vmatmul.mubr.f32.gmra.mxu0 %v3194
      %v3267 = vpop.f32.mrf.mxu0
      %v3268 = vadd.f32 0.0, %v3267
      %v3269 = vpop.f32.mrf.mxu0
      %3270 = vmatprep.mubr.f32.mxu0 0.0
      %3271 = vmatmul.mubr.f32.gmra.mxu0 %v3197
      %v3272 = vpop.f32.mrf.mxu0
      %v3273 = vadd.f32 0.0, %v3272
      %v3274 = vpop.f32.mrf.mxu0
      %3275 = vdwg.mxu0
      %3276 = vrot.lane.b32.xlu0 %v2071, 32
      %v3277 = vpop.permute.xlu0 %3276
      %v3280 = vsel %vm922, %v3019, 0
      %v3283 = vsel %vm922, %v3024, 0
      %3285 = vmatprep.subr.mxu0 0.0
      %3286 = vmatpush1.msra.mxu0 0.0
      %3287 = vmatprep.subr.mxu0 0.0
      %3288 = vmatpush1.msra.mxu0 0.0
      %3289 = vmatprep.subr.mxu0 0.0
      %3290 = vmatpush1.msra.mxu0 0.0
      %3291 = vmatprep.subr.mxu0 0.0
      %3292 = vmatpush1.msra.mxu0 0.0
      %3293 = vmatprep.subr.mxu0 0.0
      %3294 = vmatpush1.msra.mxu0 0.0
      %3295 = vmatprep.subr.mxu0 0.0
      %3296 = vmatpush1.msra.mxu0 0.0
      %3297 = vmatprep.subr.mxu0 0.0
      %3298 = vmatpush1.msra.mxu0 0.0
      %3299 = vmatprep.subr.mxu0 0.0
      %3300 = vmatpush1.msra.mxu0 0.0
      %3301 = vmatprep.subr.mxu0 0.0
      %3302 = vmatpush1.msra.mxu0 0.0
      %3303 = vmatprep.subr.mxu0 0.0
      %3304 = vmatpush1.msra.mxu0 0.0
      %3305 = vmatprep.subr.mxu0 0.0
      %3306 = vmatpush1.msra.mxu0 0.0
      %3307 = vmatprep.subr.mxu0 0.0
      %3308 = vmatpush1.msra.mxu0 0.0
      %3309 = vmatprep.subr.mxu0 0.0
      %3310 = vmatpush1.msra.mxu0 0.0
      %3311 = vmatprep.subr.mxu0 0.0
      %3312 = vmatpush1.msra.mxu0 0.0
      %3313 = vmatprep.subr.mxu0 0.0
      %3314 = vmatpush1.msra.mxu0 0.0
      %3315 = vmatprep.subr.mxu0 0.0
      %3316 = vmatpush1.msra.mxu0 %v3277
      %3317 = vmatprep.subr.mxu0 0.0
      %3318 = vmatpush2.msra.mxu0 0.0
      %3319 = vmatprep.subr.mxu0 0.0
      %3320 = vmatpush2.msra.mxu0 0.0
      %3321 = vmatprep.subr.mxu0 0.0
      %3322 = vmatpush2.msra.mxu0 0.0
      %3323 = vmatprep.subr.mxu0 0.0
      %3324 = vmatpush2.msra.mxu0 0.0
      %3325 = vmatprep.subr.mxu0 0.0
      %3326 = vmatpush2.msra.mxu0 0.0
      %3327 = vmatprep.subr.mxu0 0.0
      %3328 = vmatpush2.msra.mxu0 0.0
      %3329 = vmatprep.subr.mxu0 0.0
      %3330 = vmatpush2.msra.mxu0 0.0
      %3331 = vmatprep.subr.mxu0 0.0
      %3332 = vmatpush2.msra.mxu0 0.0
      %3333 = vmatprep.subr.mxu0 0.0
      %3334 = vmatpush2.msra.mxu0 0.0
      %3335 = vmatprep.subr.mxu0 0.0
      %3336 = vmatpush2.msra.mxu0 0.0
      %3337 = vmatprep.subr.mxu0 0.0
      %3338 = vmatpush2.msra.mxu0 0.0
      %3339 = vmatprep.subr.mxu0 0.0
      %3340 = vmatpush2.msra.mxu0 0.0
      %3341 = vmatprep.subr.mxu0 0.0
      %3342 = vmatpush2.msra.mxu0 0.0
      %3343 = vmatprep.subr.mxu0 0.0
      %3344 = vmatpush2.msra.mxu0 0.0
      %3345 = vmatprep.subr.mxu0 0.0
      %3346 = vmatpush2.msra.mxu0 0.0
      %3347 = vmatprep.subr.mxu0 0.0
      %3348 = vmatpush2.msra.mxu0 0.0
      %3349 = vmatprep.mubr.f32.mxu0 0.0
      %3350 = vmatmul.mubr.f32.gmra.mxu0 %v3280
      %v3351 = vpop.f32.mrf.mxu0
      %v3352 = vadd.f32 0.0, %v3351
      %v3353 = vpop.f32.mrf.mxu0
      %3354 = vmatprep.mubr.f32.mxu0 0.0
      %3355 = vmatmul.mubr.f32.gmra.mxu0 %v3283
      %v3356 = vpop.f32.mrf.mxu0
      %v3357 = vadd.f32 0.0, %v3356
      %v3358 = vpop.f32.mrf.mxu0
      %3359 = vdwg.mxu0
      %3360 = vrot.lane.b32.xlu0 %v2072, 32
      %v3361 = vpop.permute.xlu0 %3360
      %v3364 = vsel %vm922, %v3102, 0
      %v3367 = vsel %vm922, %v3107, 0
      %3369 = vmatprep.subr.mxu0 0.0
      %3370 = vmatpush1.msra.mxu0 0.0
      %3371 = vmatprep.subr.mxu0 0.0
      %3372 = vmatpush1.msra.mxu0 0.0
      %3373 = vmatprep.subr.mxu0 0.0
      %3374 = vmatpush1.msra.mxu0 0.0
      %3375 = vmatprep.subr.mxu0 0.0
      %3376 = vmatpush1.msra.mxu0 0.0
      %3377 = vmatprep.subr.mxu0 0.0
      %3378 = vmatpush1.msra.mxu0 0.0
      %3379 = vmatprep.subr.mxu0 0.0
      %3380 = vmatpush1.msra.mxu0 0.0
      %3381 = vmatprep.subr.mxu0 0.0
      %3382 = vmatpush1.msra.mxu0 0.0
      %3383 = vmatprep.subr.mxu0 0.0
      %3384 = vmatpush1.msra.mxu0 0.0
      %3385 = vmatprep.subr.mxu0 0.0
      %3386 = vmatpush1.msra.mxu0 0.0
      %3387 = vmatprep.subr.mxu0 0.0
      %3388 = vmatpush1.msra.mxu0 0.0
      %3389 = vmatprep.subr.mxu0 0.0
      %3390 = vmatpush1.msra.mxu0 0.0
      %3391 = vmatprep.subr.mxu0 0.0
      %3392 = vmatpush1.msra.mxu0 0.0
      %3393 = vmatprep.subr.mxu0 0.0
      %3394 = vmatpush1.msra.mxu0 0.0
      %3395 = vmatprep.subr.mxu0 0.0
      %3396 = vmatpush1.msra.mxu0 0.0
      %3397 = vmatprep.subr.mxu0 0.0
      %3398 = vmatpush1.msra.mxu0 0.0
      %3399 = vmatprep.subr.mxu0 0.0
      %3400 = vmatpush1.msra.mxu0 %v3361
      %3401 = vmatprep.subr.mxu0 0.0
      %3402 = vmatpush2.msra.mxu0 0.0
      %3403 = vmatprep.subr.mxu0 0.0
      %3404 = vmatpush2.msra.mxu0 0.0
      %3405 = vmatprep.subr.mxu0 0.0
      %3406 = vmatpush2.msra.mxu0 0.0
      %3407 = vmatprep.subr.mxu0 0.0
      %3408 = vmatpush2.msra.mxu0 0.0
      %3409 = vmatprep.subr.mxu0 0.0
      %3410 = vmatpush2.msra.mxu0 0.0
      %3411 = vmatprep.subr.mxu0 0.0
      %3412 = vmatpush2.msra.mxu0 0.0
      %3413 = vmatprep.subr.mxu0 0.0
      %3414 = vmatpush2.msra.mxu0 0.0
      %3415 = vmatprep.subr.mxu0 0.0
      %3416 = vmatpush2.msra.mxu0 0.0
      %3417 = vmatprep.subr.mxu0 0.0
      %3418 = vmatpush2.msra.mxu0 0.0
      %3419 = vmatprep.subr.mxu0 0.0
      %3420 = vmatpush2.msra.mxu0 0.0
      %3421 = vmatprep.subr.mxu0 0.0
      %3422 = vmatpush2.msra.mxu0 0.0
      %3423 = vmatprep.subr.mxu0 0.0
      %3424 = vmatpush2.msra.mxu0 0.0
      %3425 = vmatprep.subr.mxu0 0.0
      %3426 = vmatpush2.msra.mxu0 0.0
      %3427 = vmatprep.subr.mxu0 0.0
      %3428 = vmatpush2.msra.mxu0 0.0
      %3429 = vmatprep.subr.mxu0 0.0
      %3430 = vmatpush2.msra.mxu0 0.0
      %3431 = vmatprep.subr.mxu0 0.0
      %3432 = vmatpush2.msra.mxu0 0.0
      %3433 = vmatprep.mubr.f32.mxu0 0.0
      %3434 = vmatmul.mubr.f32.gmra.mxu0 %v3364
      %v3435 = vpop.f32.mrf.mxu0
      %v3436 = vadd.f32 0.0, %v3435
      %v3437 = vpop.f32.mrf.mxu0
      %3438 = vmatprep.mubr.f32.mxu0 0.0
      %3439 = vmatmul.mubr.f32.gmra.mxu0 %v3367
      %v3440 = vpop.f32.mrf.mxu0
      %v3441 = vadd.f32 0.0, %v3440
      %v3442 = vpop.f32.mrf.mxu0
      %3443 = vdwg.mxu0
      %3444 = vrot.lane.b32.xlu0 %v2073, 32
      %v3445 = vpop.permute.xlu0 %3444
      %v3448 = vsel %vm922, %v3185, 0
      %v3451 = vsel %vm922, %v3190, 0
      %3453 = vmatprep.subr.mxu0 0.0
      %3454 = vmatpush1.msra.mxu0 0.0
      %3455 = vmatprep.subr.mxu0 0.0
      %3456 = vmatpush1.msra.mxu0 0.0
      %3457 = vmatprep.subr.mxu0 0.0
      %3458 = vmatpush1.msra.mxu0 0.0
      %3459 = vmatprep.subr.mxu0 0.0
      %3460 = vmatpush1.msra.mxu0 0.0
      %3461 = vmatprep.subr.mxu0 0.0
      %3462 = vmatpush1.msra.mxu0 0.0
      %3463 = vmatprep.subr.mxu0 0.0
      %3464 = vmatpush1.msra.mxu0 0.0
      %3465 = vmatprep.subr.mxu0 0.0
      %3466 = vmatpush1.msra.mxu0 0.0
      %3467 = vmatprep.subr.mxu0 0.0
      %3468 = vmatpush1.msra.mxu0 0.0
      %3469 = vmatprep.subr.mxu0 0.0
      %3470 = vmatpush1.msra.mxu0 0.0
      %3471 = vmatprep.subr.mxu0 0.0
      %3472 = vmatpush1.msra.mxu0 0.0
      %3473 = vmatprep.subr.mxu0 0.0
      %3474 = vmatpush1.msra.mxu0 0.0
      %3475 = vmatprep.subr.mxu0 0.0
      %3476 = vmatpush1.msra.mxu0 0.0
      %3477 = vmatprep.subr.mxu0 0.0
      %3478 = vmatpush1.msra.mxu0 0.0
      %3479 = vmatprep.subr.mxu0 0.0
      %3480 = vmatpush1.msra.mxu0 0.0
      %3481 = vmatprep.subr.mxu0 0.0
      %3482 = vmatpush1.msra.mxu0 0.0
      %3483 = vmatprep.subr.mxu0 0.0
      %3484 = vmatpush1.msra.mxu0 %v3445
      %3485 = vmatprep.subr.mxu0 0.0
      %3486 = vmatpush2.msra.mxu0 0.0
      %3487 = vmatprep.subr.mxu0 0.0
      %3488 = vmatpush2.msra.mxu0 0.0
      %3489 = vmatprep.subr.mxu0 0.0
      %3490 = vmatpush2.msra.mxu0 0.0
      %3491 = vmatprep.subr.mxu0 0.0
      %3492 = vmatpush2.msra.mxu0 0.0
      %3493 = vmatprep.subr.mxu0 0.0
      %3494 = vmatpush2.msra.mxu0 0.0
      %3495 = vmatprep.subr.mxu0 0.0
      %3496 = vmatpush2.msra.mxu0 0.0
      %3497 = vmatprep.subr.mxu0 0.0
      %3498 = vmatpush2.msra.mxu0 0.0
      %3499 = vmatprep.subr.mxu0 0.0
      %3500 = vmatpush2.msra.mxu0 0.0
      %3501 = vmatprep.subr.mxu0 0.0
      %3502 = vmatpush2.msra.mxu0 0.0
      %3503 = vmatprep.subr.mxu0 0.0
      %3504 = vmatpush2.msra.mxu0 0.0
      %3505 = vmatprep.subr.mxu0 0.0
      %3506 = vmatpush2.msra.mxu0 0.0
      %3507 = vmatprep.subr.mxu0 0.0
      %3508 = vmatpush2.msra.mxu0 0.0
      %3509 = vmatprep.subr.mxu0 0.0
      %3510 = vmatpush2.msra.mxu0 0.0
      %3511 = vmatprep.subr.mxu0 0.0
      %3512 = vmatpush2.msra.mxu0 0.0
      %3513 = vmatprep.subr.mxu0 0.0
      %3514 = vmatpush2.msra.mxu0 0.0
      %3515 = vmatprep.subr.mxu0 0.0
      %3516 = vmatpush2.msra.mxu0 0.0
      %3517 = vmatprep.mubr.f32.mxu0 0.0
      %3518 = vmatmul.mubr.f32.gmra.mxu0 %v3448
      %v3519 = vpop.f32.mrf.mxu0
      %v3520 = vadd.f32 0.0, %v3519
      %v3521 = vpop.f32.mrf.mxu0
      %3522 = vmatprep.mubr.f32.mxu0 0.0
      %3523 = vmatmul.mubr.f32.gmra.mxu0 %v3451
      %v3524 = vpop.f32.mrf.mxu0
      %v3525 = vadd.f32 0.0, %v3524
      %v3526 = vpop.f32.mrf.mxu0
      %3527 = vdwg.mxu0
      %3528 = vrot.lane.b32.xlu0 %v2074, 32
      %v3529 = vpop.permute.xlu0 %3528
      %v3532 = vsel %vm922, %v3268, 0
      %v3535 = vsel %vm922, %v3273, 0
      %3537 = vmatprep.subr.mxu0 0.0
      %3538 = vmatpush1.msra.mxu0 0.0
      %3539 = vmatprep.subr.mxu0 0.0
      %3540 = vmatpush1.msra.mxu0 0.0
      %3541 = vmatprep.subr.mxu0 0.0
      %3542 = vmatpush1.msra.mxu0 0.0
      %3543 = vmatprep.subr.mxu0 0.0
      %3544 = vmatpush1.msra.mxu0 0.0
      %3545 = vmatprep.subr.mxu0 0.0
      %3546 = vmatpush1.msra.mxu0 0.0
      %3547 = vmatprep.subr.mxu0 0.0
      %3548 = vmatpush1.msra.mxu0 0.0
      %3549 = vmatprep.subr.mxu0 0.0
      %3550 = vmatpush1.msra.mxu0 0.0
      %3551 = vmatprep.subr.mxu0 0.0
      %3552 = vmatpush1.msra.mxu0 0.0
      %3553 = vmatprep.subr.mxu0 0.0
      %3554 = vmatpush1.msra.mxu0 0.0
      %3555 = vmatprep.subr.mxu0 0.0
      %3556 = vmatpush1.msra.mxu0 0.0
      %3557 = vmatprep.subr.mxu0 0.0
      %3558 = vmatpush1.msra.mxu0 0.0
      %3559 = vmatprep.subr.mxu0 0.0
      %3560 = vmatpush1.msra.mxu0 0.0
      %3561 = vmatprep.subr.mxu0 0.0
      %3562 = vmatpush1.msra.mxu0 0.0
      %3563 = vmatprep.subr.mxu0 0.0
      %3564 = vmatpush1.msra.mxu0 0.0
      %3565 = vmatprep.subr.mxu0 0.0
      %3566 = vmatpush1.msra.mxu0 0.0
      %3567 = vmatprep.subr.mxu0 0.0
      %3568 = vmatpush1.msra.mxu0 %v3529
      %3569 = vmatprep.subr.mxu0 0.0
      %3570 = vmatpush2.msra.mxu0 0.0
      %3571 = vmatprep.subr.mxu0 0.0
      %3572 = vmatpush2.msra.mxu0 0.0
      %3573 = vmatprep.subr.mxu0 0.0
      %3574 = vmatpush2.msra.mxu0 0.0
      %3575 = vmatprep.subr.mxu0 0.0
      %3576 = vmatpush2.msra.mxu0 0.0
      %3577 = vmatprep.subr.mxu0 0.0
      %3578 = vmatpush2.msra.mxu0 0.0
      %3579 = vmatprep.subr.mxu0 0.0
      %3580 = vmatpush2.msra.mxu0 0.0
      %3581 = vmatprep.subr.mxu0 0.0
      %3582 = vmatpush2.msra.mxu0 0.0
      %3583 = vmatprep.subr.mxu0 0.0
      %3584 = vmatpush2.msra.mxu0 0.0
      %3585 = vmatprep.subr.mxu0 0.0
      %3586 = vmatpush2.msra.mxu0 0.0
      %3587 = vmatprep.subr.mxu0 0.0
      %3588 = vmatpush2.msra.mxu0 0.0
      %3589 = vmatprep.subr.mxu0 0.0
      %3590 = vmatpush2.msra.mxu0 0.0
      %3591 = vmatprep.subr.mxu0 0.0
      %3592 = vmatpush2.msra.mxu0 0.0
      %3593 = vmatprep.subr.mxu0 0.0
      %3594 = vmatpush2.msra.mxu0 0.0
      %3595 = vmatprep.subr.mxu0 0.0
      %3596 = vmatpush2.msra.mxu0 0.0
      %3597 = vmatprep.subr.mxu0 0.0
      %3598 = vmatpush2.msra.mxu0 0.0
      %3599 = vmatprep.subr.mxu0 0.0
      %3600 = vmatpush2.msra.mxu0 0.0
      %3601 = vmatprep.mubr.f32.mxu0 0.0
      %3602 = vmatmul.mubr.f32.gmra.mxu0 %v3532
      %v3603 = vpop.f32.mrf.mxu0
      %v3604 = vadd.f32 0.0, %v3603
      %v3605 = vpop.f32.mrf.mxu0
      %3606 = vmatprep.mubr.f32.mxu0 0.0
      %3607 = vmatmul.mubr.f32.gmra.mxu0 %v3535
      %v3608 = vpop.f32.mrf.mxu0
      %v3609 = vadd.f32 0.0, %v3608
      %v3610 = vpop.f32.mrf.mxu0
      %3611 = vdwg.mxu0
      %v3612 = vsel %vm477, %v3352, 0.0
      %v3613 = vsel %vm477, %v3436, 0.0
      %v3614 = vadd.f32 %v3612, %v3613
      %v3615 = vsel %vm477, %v3520, 0.0
      %v3616 = vadd.f32 %v3614, %v3615
      %v3617 = vsel %vm477, %v3604, 0.0
      %v3618 = vadd.f32 %v3616, %v3617
      %v3619 = vsel %vm2013, %v3357, 0.0
      %v3620 = vsel %vm2013, %v3441, 0.0
      %v3621 = vadd.f32 %v3619, %v3620
      %v3622 = vsel %vm2013, %v3525, 0.0
      %v3623 = vadd.f32 %v3621, %v3622
      %v3624 = vsel %vm2013, %v3609, 0.0
      %v3625 = vadd.f32 %v3623, %v3624
      %3626 = vrot.lane.b32.xlu0 %v2080, 32
      %v3627 = vpop.permute.xlu0 %3626
      %v3629 = vadd.f32 %v3618, %v3627
      %v3630 = vadd.f32 %v3625, %v3627
      %v3631 = vadd.f32 %v2069, %v3629
      %v3632 = vadd.f32 %v2070, %v3630
      %v3633 = vsel %vm477, %v3631, 0.0
      %3634 = vadd.xlane.f32.xlu0 %v3633
      %v3635 = vpop.xlane.xlu0 %3634
      %v3636 = vsel %vm2013, %v3632, 0.0
      %3637 = vadd.xlane.f32.xlu0 %v3636
      %v3638 = vpop.xlane.xlu0 %3637
      %v3639 = vmul.f32 %v3635, %v2034
      %v3640 = vmul.f32 %v3638, %v2034
      %v3641 = vmul.f32 %v3631, %v3631
      %v3642 = vmul.f32 %v3632, %v3632
      %v3643 = vsel %vm477, %v3641, 0.0
      %3644 = vadd.xlane.f32.xlu0 %v3643
      %v3645 = vpop.xlane.xlu0 %3644
      %v3646 = vsel %vm2013, %v3642, 0.0
      %3647 = vadd.xlane.f32.xlu0 %v3646
      %v3648 = vpop.xlane.xlu0 %3647
      %v3649 = vmul.f32 %v3645, %v2034
      %v3650 = vmul.f32 %v3648, %v2034
      %v3651 = vmul.f32 %v3639, %v3639
      %v3652 = vmul.f32 %v3640, %v3640
      %v3653 = vsub.f32 %v3649, %v3651
      %v3654 = vsub.f32 %v3650, %v3652
      %v3655 = vadd.f32 %v3653, 1e-05
      %v3656 = vadd.f32 %v3654, 1e-05
      %v3657 = vrsqrt.pop %v3655
      %v3658 = vrsqrt.pop %v3656
      %v3659 = vsub.f32 %v3631, %v3639
      %v3660 = vsub.f32 %v3632, %v3640
      %v3661 = vmul.f32 %v3659, %v3657
      %v3662 = vmul.f32 %v3660, %v3658
      %v3663 = vlaneseq
      %v3664 = vshrl.u32 %v3663, 7
      %v3665 = vsub.s32 2, %v3664
      %v3666 = vrot.slane %v465, %v3665
      %v3667 = vmul.f32 %v3661, %v3666
      %v3668 = vmul.f32 %v3662, %v3666
      %v3669 = vlaneseq
      %v3670 = vshrl.u32 %v3669, 7
      %v3671 = vsub.s32 3, %v3670
      %v3672 = vrot.slane %v465, %v3671
      %v3673 = vadd.f32 %v3667, %v3672
      %v3674 = vadd.f32 %v3668, %v3672
      %v3675 = vld [vmem:[%s6] sm:$0xff]
      %v3676 = vld [vmem:[%s6 + $0x8] sm:$0xff]
      %v3677 = vld [vmem:[%s6 + $0x10] sm:$0xff]
      %v3678 = vld [vmem:[%s6 + $0x18] sm:$0xff]
      %v3679 = vld [vmem:[%s7] sm:$0x1]
      %v3681 = vlaneseq
      %v3682 = vshrl.u32 %v3681, 7
      %v3683 = vsub.s32 0, %v3682
      %v3684 = vrot.slane %v3679, %v3683
      %v3687 = vsel %vm477, %v3673, 0
      %v3690 = vsel %vm477, %v3674, 0
      %3692 = vmatprep.subr.mxu0 0.0
      %3693 = vmatpush1.msra.mxu0 0.0
      %3694 = vmatprep.subr.mxu0 0.0
      %3695 = vmatpush1.msra.mxu0 0.0
      %3696 = vmatprep.subr.mxu0 0.0
      %3697 = vmatpush1.msra.mxu0 0.0
      %3698 = vmatprep.subr.mxu0 0.0
      %3699 = vmatpush1.msra.mxu0 0.0
      %3700 = vmatprep.subr.mxu0 0.0
      %3701 = vmatpush1.msra.mxu0 0.0
      %3702 = vmatprep.subr.mxu0 0.0
      %3703 = vmatpush1.msra.mxu0 0.0
      %3704 = vmatprep.subr.mxu0 0.0
      %3705 = vmatpush1.msra.mxu0 0.0
      %3706 = vmatprep.subr.mxu0 0.0
      %3707 = vmatpush1.msra.mxu0 0.0
      %3708 = vmatprep.subr.mxu0 0.0
      %3709 = vmatpush1.msra.mxu0 0.0
      %3710 = vmatprep.subr.mxu0 0.0
      %3711 = vmatpush1.msra.mxu0 0.0
      %3712 = vmatprep.subr.mxu0 0.0
      %3713 = vmatpush1.msra.mxu0 0.0
      %3714 = vmatprep.subr.mxu0 0.0
      %3715 = vmatpush1.msra.mxu0 0.0
      %3716 = vmatprep.subr.mxu0 0.0
      %3717 = vmatpush1.msra.mxu0 %v3678
      %3718 = vmatprep.subr.mxu0 0.0
      %3719 = vmatpush1.msra.mxu0 %v3677
      %3720 = vmatprep.subr.mxu0 0.0
      %3721 = vmatpush1.msra.mxu0 %v3676
      %3722 = vmatprep.subr.mxu0 0.0
      %3723 = vmatpush1.msra.mxu0 %v3675
      %3724 = vmatprep.subr.mxu0 0.0
      %3725 = vmatpush2.msra.mxu0 0.0
      %3726 = vmatprep.subr.mxu0 0.0
      %3727 = vmatpush2.msra.mxu0 0.0
      %3728 = vmatprep.subr.mxu0 0.0
      %3729 = vmatpush2.msra.mxu0 0.0
      %3730 = vmatprep.subr.mxu0 0.0
      %3731 = vmatpush2.msra.mxu0 0.0
      %3732 = vmatprep.subr.mxu0 0.0
      %3733 = vmatpush2.msra.mxu0 0.0
      %3734 = vmatprep.subr.mxu0 0.0
      %3735 = vmatpush2.msra.mxu0 0.0
      %3736 = vmatprep.subr.mxu0 0.0
      %3737 = vmatpush2.msra.mxu0 0.0
      %3738 = vmatprep.subr.mxu0 0.0
      %3739 = vmatpush2.msra.mxu0 0.0
      %3740 = vmatprep.subr.mxu0 0.0
      %3741 = vmatpush2.msra.mxu0 0.0
      %3742 = vmatprep.subr.mxu0 0.0
      %3743 = vmatpush2.msra.mxu0 0.0
      %3744 = vmatprep.subr.mxu0 0.0
      %3745 = vmatpush2.msra.mxu0 0.0
      %3746 = vmatprep.subr.mxu0 0.0
      %3747 = vmatpush2.msra.mxu0 0.0
      %3748 = vmatprep.subr.mxu0 0.0
      %3749 = vmatpush2.msra.mxu0 0.0
      %3750 = vmatprep.subr.mxu0 0.0
      %3751 = vmatpush2.msra.mxu0 0.0
      %3752 = vmatprep.subr.mxu0 0.0
      %3753 = vmatpush2.msra.mxu0 0.0
      %3754 = vmatprep.subr.mxu0 0.0
      %3755 = vmatpush2.msra.mxu0 0.0
      %3756 = vmatprep.mubr.f32.mxu0 0.0
      %3757 = vmatmul.mubr.f32.gmra.mxu0 %v3687
      %v3758 = vpop.f32.mrf.mxu0
      %v3759 = vadd.f32 %v3684, %v3758
      %v3760 = vpop.f32.mrf.mxu0
      %3761 = vmatprep.mubr.f32.mxu0 0.0
      %3762 = vmatmul.mubr.f32.gmra.mxu0 %v3690
      %v3763 = vpop.f32.mrf.mxu0
      %v3764 = vadd.f32 %v3684, %v3763
      %v3765 = vpop.f32.mrf.mxu0
      %3766 = vdwg.mxu0
      %v3767 = vmax.f32 %v3759, 0.0
      %v3768 = vmax.f32 %v3764, 0.0
      %v3769 = vld [vmem:[%s8] sm:$0xff]
      %v3770 = vld [vmem:[%s8 + $0x8] sm:$0xff]
      %v3771 = vld [vmem:[%s8 + $0x10] sm:$0xff]
      %v3772 = vld [vmem:[%s8 + $0x18] sm:$0xff]
      %v3773 = vld [vmem:[%s8 + $0x20] sm:$0xff]
      %v3774 = vld [vmem:[%s8 + $0x28] sm:$0xff]
      %v3775 = vld [vmem:[%s8 + $0x30] sm:$0xff]
      %v3776 = vld [vmem:[%s8 + $0x38] sm:$0xff]
      %v3777 = vld [vmem:[%s9] sm:$0x1]
      %v3779 = vlaneseq
      %v3780 = vshrl.u32 %v3779, 7
      %v3781 = vsub.s32 0, %v3780
      %v3782 = vrot.slane %v3777, %v3781
      %vm3784 = vcmask 523264
      %v3786 = vsel %vm3784, %v3767, 0
      %v3789 = vsel %vm3784, %v3768, 0
      %3791 = vmatprep.subr.mxu0 0.0
      %3792 = vmatpush1.msra.mxu0 0.0
      %3793 = vmatprep.subr.mxu0 0.0
      %3794 = vmatpush1.msra.mxu0 0.0
      %3795 = vmatprep.subr.mxu0 0.0
      %3796 = vmatpush1.msra.mxu0 0.0
      %3797 = vmatprep.subr.mxu0 0.0
      %3798 = vmatpush1.msra.mxu0 0.0
      %3799 = vmatprep.subr.mxu0 0.0
      %3800 = vmatpush1.msra.mxu0 0.0
      %3801 = vmatprep.subr.mxu0 0.0
      %3802 = vmatpush1.msra.mxu0 0.0
      %3803 = vmatprep.subr.mxu0 0.0
      %3804 = vmatpush1.msra.mxu0 0.0
      %3805 = vmatprep.subr.mxu0 0.0
      %3806 = vmatpush1.msra.mxu0 0.0
      %3807 = vmatprep.subr.mxu0 0.0
      %3808 = vmatpush1.msra.mxu0 %v3776
      %3809 = vmatprep.subr.mxu0 0.0
      %3810 = vmatpush1.msra.mxu0 %v3775
      %3811 = vmatprep.subr.mxu0 0.0
      %3812 = vmatpush1.msra.mxu0 %v3774
      %3813 = vmatprep.subr.mxu0 0.0
      %3814 = vmatpush1.msra.mxu0 %v3773
      %3815 = vmatprep.subr.mxu0 0.0
      %3816 = vmatpush1.msra.mxu0 %v3772
      %3817 = vmatprep.subr.mxu0 0.0
      %3818 = vmatpush1.msra.mxu0 %v3771
      %3819 = vmatprep.subr.mxu0 0.0
      %3820 = vmatpush1.msra.mxu0 %v3770
      %3821 = vmatprep.subr.mxu0 0.0
      %3822 = vmatpush1.msra.mxu0 %v3769
      %3823 = vmatprep.subr.mxu0 0.0
      %3824 = vmatpush2.msra.mxu0 0.0
      %3825 = vmatprep.subr.mxu0 0.0
      %3826 = vmatpush2.msra.mxu0 0.0
      %3827 = vmatprep.subr.mxu0 0.0
      %3828 = vmatpush2.msra.mxu0 0.0
      %3829 = vmatprep.subr.mxu0 0.0
      %3830 = vmatpush2.msra.mxu0 0.0
      %3831 = vmatprep.subr.mxu0 0.0
      %3832 = vmatpush2.msra.mxu0 0.0
      %3833 = vmatprep.subr.mxu0 0.0
      %3834 = vmatpush2.msra.mxu0 0.0
      %3835 = vmatprep.subr.mxu0 0.0
      %3836 = vmatpush2.msra.mxu0 0.0
      %3837 = vmatprep.subr.mxu0 0.0
      %3838 = vmatpush2.msra.mxu0 0.0
      %3839 = vmatprep.subr.mxu0 0.0
      %3840 = vmatpush2.msra.mxu0 0.0
      %3841 = vmatprep.subr.mxu0 0.0
      %3842 = vmatpush2.msra.mxu0 0.0
      %3843 = vmatprep.subr.mxu0 0.0
      %3844 = vmatpush2.msra.mxu0 0.0
      %3845 = vmatprep.subr.mxu0 0.0
      %3846 = vmatpush2.msra.mxu0 0.0
      %3847 = vmatprep.subr.mxu0 0.0
      %3848 = vmatpush2.msra.mxu0 0.0
      %3849 = vmatprep.subr.mxu0 0.0
      %3850 = vmatpush2.msra.mxu0 0.0
      %3851 = vmatprep.subr.mxu0 0.0
      %3852 = vmatpush2.msra.mxu0 0.0
      %3853 = vmatprep.subr.mxu0 0.0
      %3854 = vmatpush2.msra.mxu0 0.0
      %3855 = vmatprep.mubr.f32.mxu0 0.0
      %3856 = vmatmul.mubr.f32.gmra.mxu0 %v3786
      %v3857 = vpop.f32.mrf.mxu0
      %v3858 = vadd.f32 %v3782, %v3857
      %v3859 = vpop.f32.mrf.mxu0
      %3860 = vmatprep.mubr.f32.mxu0 0.0
      %3861 = vmatmul.mubr.f32.gmra.mxu0 %v3789
      %v3862 = vpop.f32.mrf.mxu0
      %v3863 = vadd.f32 %v3782, %v3862
      %v3864 = vpop.f32.mrf.mxu0
      %3865 = vdwg.mxu0
      %v3866 = vadd.f32 %v3673, %v3858
      %v3867 = vadd.f32 %v3674, %v3863
      %v3868 = vsel %vm477, %v3866, 0.0
      %3869 = vadd.xlane.f32.xlu0 %v3868
      %v3870 = vpop.xlane.xlu0 %3869
      %v3871 = vsel %vm2013, %v3867, 0.0
      %3872 = vadd.xlane.f32.xlu0 %v3871
      %v3873 = vpop.xlane.xlu0 %3872
      %v3874 = vmul.f32 %v3870, %v2034
      %v3875 = vmul.f32 %v3873, %v2034
      %v3876 = vmul.f32 %v3866, %v3866
      %v3877 = vmul.f32 %v3867, %v3867
      %v3878 = vsel %vm477, %v3876, 0.0
      %3879 = vadd.xlane.f32.xlu0 %v3878
      %v3880 = vpop.xlane.xlu0 %3879
      %v3881 = vsel %vm2013, %v3877, 0.0
      %3882 = vadd.xlane.f32.xlu0 %v3881
      %v3883 = vpop.xlane.xlu0 %3882
      %v3884 = vmul.f32 %v3880, %v2034
      %v3885 = vmul.f32 %v3883, %v2034
      %v3886 = vmul.f32 %v3874, %v3874
      %v3887 = vmul.f32 %v3875, %v3875
      %v3888 = vsub.f32 %v3884, %v3886
      %v3889 = vsub.f32 %v3885, %v3887
      %v3890 = vadd.f32 %v3888, 1e-05
      %v3891 = vadd.f32 %v3889, 1e-05
      %v3892 = vrsqrt.pop %v3890
      %v3893 = vrsqrt.pop %v3891
      %v3894 = vsub.f32 %v3866, %v3874
      %v3895 = vsub.f32 %v3867, %v3875
      %v3896 = vmul.f32 %v3894, %v3892
      %v3897 = vmul.f32 %v3895, %v3893
      %v3898 = vlaneseq
      %v3899 = vshrl.u32 %v3898, 7
      %v3900 = vsub.s32 4, %v3899
      %v3901 = vrot.slane %v465, %v3900
      %v3902 = vmul.f32 %v3896, %v3901
      %v3903 = vmul.f32 %v3897, %v3901
      %v3904 = vlaneseq
      %v3905 = vshrl.u32 %v3904, 7
      %v3906 = vsub.s32 5, %v3905
      %v3907 = vrot.slane %v465, %v3906
      %v3908 = vadd.f32 %v3902, %v3907
      %v3909 = vadd.f32 %v3903, %v3907
      %v3910 = vld [vmem:[%s10] sm:$0xff]
      %v3911 = vld [vmem:[%s10 + $0x8] sm:$0xff]
      %v3912 = vld [vmem:[%s10 + $0x10] sm:$0xff]
      %v3913 = vld [vmem:[%s10 + $0x18] sm:$0xff]
      %v3914 = vld [vmem:[%s11] sm:$0x1]
      %v3916 = vlaneseq
      %v3917 = vshrl.u32 %v3916, 7
      %v3918 = vsub.s32 0, %v3917
      %v3919 = vrot.slane %v3914, %v3918
      %v3922 = vsel %vm477, %v3908, 0
      %v3925 = vsel %vm477, %v3909, 0
      %3927 = vmatprep.subr.mxu0 0.0
      %3928 = vmatpush1.msra.mxu0 0.0
      %3929 = vmatprep.subr.mxu0 0.0
      %3930 = vmatpush1.msra.mxu0 0.0
      %3931 = vmatprep.subr.mxu0 0.0
      %3932 = vmatpush1.msra.mxu0 0.0
      %3933 = vmatprep.subr.mxu0 0.0
      %3934 = vmatpush1.msra.mxu0 0.0
      %3935 = vmatprep.subr.mxu0 0.0
      %3936 = vmatpush1.msra.mxu0 0.0
      %3937 = vmatprep.subr.mxu0 0.0
      %3938 = vmatpush1.msra.mxu0 0.0
      %3939 = vmatprep.subr.mxu0 0.0
      %3940 = vmatpush1.msra.mxu0 0.0
      %3941 = vmatprep.subr.mxu0 0.0
      %3942 = vmatpush1.msra.mxu0 0.0
      %3943 = vmatprep.subr.mxu0 0.0
      %3944 = vmatpush1.msra.mxu0 0.0
      %3945 = vmatprep.subr.mxu0 0.0
      %3946 = vmatpush1.msra.mxu0 0.0
      %3947 = vmatprep.subr.mxu0 0.0
      %3948 = vmatpush1.msra.mxu0 0.0
      %3949 = vmatprep.subr.mxu0 0.0
      %3950 = vmatpush1.msra.mxu0 0.0
      %3951 = vmatprep.subr.mxu0 0.0
      %3952 = vmatpush1.msra.mxu0 %v3913
      %3953 = vmatprep.subr.mxu0 0.0
      %3954 = vmatpush1.msra.mxu0 %v3912
      %3955 = vmatprep.subr.mxu0 0.0
      %3956 = vmatpush1.msra.mxu0 %v3911
      %3957 = vmatprep.subr.mxu0 0.0
      %3958 = vmatpush1.msra.mxu0 %v3910
      %3959 = vmatprep.subr.mxu0 0.0
      %3960 = vmatpush2.msra.mxu0 0.0
      %3961 = vmatprep.subr.mxu0 0.0
      %3962 = vmatpush2.msra.mxu0 0.0
      %3963 = vmatprep.subr.mxu0 0.0
      %3964 = vmatpush2.msra.mxu0 0.0
      %3965 = vmatprep.subr.mxu0 0.0
      %3966 = vmatpush2.msra.mxu0 0.0
      %3967 = vmatprep.subr.mxu0 0.0
      %3968 = vmatpush2.msra.mxu0 0.0
      %3969 = vmatprep.subr.mxu0 0.0
      %3970 = vmatpush2.msra.mxu0 0.0
      %3971 = vmatprep.subr.mxu0 0.0
      %3972 = vmatpush2.msra.mxu0 0.0
      %3973 = vmatprep.subr.mxu0 0.0
      %3974 = vmatpush2.msra.mxu0 0.0
      %3975 = vmatprep.subr.mxu0 0.0
      %3976 = vmatpush2.msra.mxu0 0.0
      %3977 = vmatprep.subr.mxu0 0.0
      %3978 = vmatpush2.msra.mxu0 0.0
      %3979 = vmatprep.subr.mxu0 0.0
      %3980 = vmatpush2.msra.mxu0 0.0
      %3981 = vmatprep.subr.mxu0 0.0
      %3982 = vmatpush2.msra.mxu0 0.0
      %3983 = vmatprep.subr.mxu0 0.0
      %3984 = vmatpush2.msra.mxu0 0.0
      %3985 = vmatprep.subr.mxu0 0.0
      %3986 = vmatpush2.msra.mxu0 0.0
      %3987 = vmatprep.subr.mxu0 0.0
      %3988 = vmatpush2.msra.mxu0 0.0
      %3989 = vmatprep.subr.mxu0 0.0
      %3990 = vmatpush2.msra.mxu0 0.0
      %3991 = vmatprep.mubr.f32.mxu0 0.0
      %3992 = vmatmul.mubr.f32.gmra.mxu0 %v3922
      %v3993 = vpop.f32.mrf.mxu0
      %v3994 = vadd.f32 %v3919, %v3993
      %v3995 = vpop.f32.mrf.mxu0
      %3996 = vmatprep.mubr.f32.mxu0 0.0
      %3997 = vmatmul.mubr.f32.gmra.mxu0 %v3925
      %v3998 = vpop.f32.mrf.mxu0
      %v3999 = vadd.f32 %v3919, %v3998
      %v4000 = vpop.f32.mrf.mxu0
      %4001 = vdwg.mxu0
      %vm4002 = vcmask 162816
      %4003 = vst.msk [vmem:[%s460] sm:$0xff] %vm4002, %v3994
      %vm4004 = vcmask 156672
      %4005 = vst.msk [vmem:[%s460 + $0x8] sm:$0x3] %vm4004, %v3999
      %p4006 = scmp.lt.s32.totalorder %s24, 1
      %s4007 = scalar_select %p4006, %s24, 1
      %s4008 = smul.addr %s4007, 2
      %s4009 = smul.addr %s4008, 8
      %s4010 = scalar_lea.vmem %s13, %s4009
      // Predicated region
      $region73: #{tpu_custom_call.1} parent=71 // pred_check
        %p4011 = pneg %p325
      $region74: #{tpu_custom_call.1} parent=71 // pred_check_branch
        %4013 = sbr.rel (%p4011) target = $region76
      $region75: #{tpu_custom_call.1} parent=71 // pred_region
        _
      $region76: #{tpu_custom_call.1} parent=71 // pred_fallthru
        _
    $region72: #{tpu_custom_call.1} parent=5 // pred_fallthru
      _
    %p4014 = scmp.le.s32.totalorder 2, %s19
    // Predicated region
    $region77: #{tpu_custom_call.1} parent=5 // pred_check
      %p4015 = pneg %p4014
    $region78: #{tpu_custom_call.1} parent=5 // pred_check_branch
      %4017 = sbr.rel (%p4015) target = $region80
    $region79: #{tpu_custom_call.1} parent=5 // pred_region
      %s4018 = ssub.s32 %s19, 2
      // Predicated region
      $region81: #{tpu_custom_call.1} parent=79 // pred_check
        %p4019 = pneg %p331
      $region82: #{tpu_custom_call.1} parent=79 // pred_check_branch
        %4021 = sbr.rel (%p4019) target = $region84
      $region83: #{tpu_custom_call.1} parent=79 // pred_region
        %p4022 = scmp.lt.s32.totalorder %s25, 1
        %s4023 = scalar_select %p4022, %s25, 1
        %s4024 = smul.addr %s4023, 2
        %s4025 = smul.addr %s4024, 8
        %s4026 = scalar_lea.vmem %s13, %s4025
      $region84: #{tpu_custom_call.1} parent=79 // pred_fallthru
        _
    $region80: #{tpu_custom_call.1} parent=5 // pred_fallthru
      _
  $region6: #{tpu_custom_call.1} parent=0 // loop_footer
    %s23 = sadd.s32 1, %s19
  $region7: #{tpu_custom_call.1} parent=0 // loop_footer_branch
    %18 = sbr.rel target = $region3
  $region8: #{tpu_custom_call.1} parent=0 // loop_exit
    _

</llo_original>
